<compile_context>
chip_gen: v5e
topology: v5e:2x2
jax: 0.10.0
libtpu: 0.0.40
codegen_flags: <defaults>
</compile_context>

<pallas_src>
import functools

import jax
import jax.numpy as jnp
from jax.experimental import pallas as pl
from jax.experimental.pallas import tpu as pltpu


# ----------------------------------------------------------------------------
# Pallas kernel: one batch element, fully fused CRU
# ----------------------------------------------------------------------------
def _cru_kernel(x_ref, wsq1_ref, wsq2_ref, wg_ref, bg_ref, w2_ref, mask_ref,
                o_ref, pbuf_ref, col_ref, *, H, W, Cup, Cup_s, Cop):
    """Fused CRU forward for one batch element.

    x_ref    : (1, H*W, Cop)      input, pixels-as-rows, channels on lanes
    wsq1_ref : (Cup, Cup_s)       squeeze1 (1x1) weight, (Cin, Cout)
    wsq2_ref : (Clow, Clow_s)     squeeze2 (1x1) weight
    wg_ref   : (9*Cup_s, Cop)     GWC 3x3 im2col weight (dense block-diagonal,
                                  PWC1 folded into the centre-tap rows)
    bg_ref   : (1, Cop)           GWC bias
    w2_ref   : (Clow_s, Cop)      [PWC2 weight | identity] -> Y2 in one matmul
    mask_ref : (H*W, 2)           column-edge masks (left-valid, right-valid)
    o_ref    : (1, H*W, Cop)      output
    pbuf_ref : VMEM (H*W + 2*(W+1), Cup_s)  zero-padded halo scratch
    col_ref  : VMEM (H*W, 9*Cup_s)          im2col scratch
    """
    HW = H * W
    pad = W + 1

    # Slice the ref (no full (HW, Cop) f32 copy held live alongside up_s/y1).
    up = x_ref[0, :, 0:Cup].astype(jnp.float32)        # (HW, Cup)
    low = x_ref[0, :, Cup:Cop].astype(jnp.float32)     # (HW, Clow)

    # 1x1 squeeze convs -> plain MXU matmuls, f32 accumulation.
    # TODO(synk): optionally run these dots in bf16 (cast operands + weights,
    # keep preferred_element_type=f32) for native MXU rate on v6e/v7x.
    up_s = jnp.dot(up, wsq1_ref[...], preferred_element_type=jnp.float32)
    low_s = jnp.dot(low, wsq2_ref[...], preferred_element_type=jnp.float32)

    # ---- grouped 3x3 conv + PWC1 as ONE im2col matmul ----------------------
    # Zero-filled halo covers row out-of-bounds; precomputed column-edge masks
    # cover column out-of-bounds.  Halo is re-zeroed every step: 2*(W+1)*Cup_s
    # stores, cheap and safe under megacore grid partitioning.
    pbuf_ref[0:pad, :] = jnp.zeros((pad, Cup_s), jnp.float32)
    pbuf_ref[pad + HW:pad + HW + pad, :] = jnp.zeros((pad, Cup_s), jnp.float32)
    pbuf_ref[pad:pad + HW, :] = up_s

    mask_l = mask_ref[:, 0:1]              # (HW, 1): 1.0 where w > 0
    mask_r = mask_ref[:, 1:2]              # (HW, 1): 1.0 where w < W-1

    # 9 shifted copies of up_s, masked on the NARROW (HW, Cup_s) operand,
    # written side-by-side into the im2col scratch (HW, 9*Cup_s).
    k = 0
    for dh in (-1, 0, 1):
        for dw in (-1, 0, 1):
            start = pad + dh * W + dw      # static, always >= 0
            shifted = pbuf_ref[start:start + HW, :]          # (HW, Cup_s)
            if dw == -1:
                shifted = shifted * mask_l
            elif dw == 1:
                shifted = shifted * mask_r
            col_ref[:, k * Cup_s:(k + 1) * Cup_s] = shifted
            k += 1

    # One fused MXU contraction (K = 9*Cup_s): all 9 GWC taps + PWC1 + bias.
    y1 = jnp.dot(col_ref[...], wg_ref[...],
                 preferred_element_type=jnp.float32) + bg_ref[...]  # (HW, Cop)

    # Y2 = cat([PWC2(low_s), low_s]) produced lane-dense by a single matmul
    # against [wp2 | I] (identity columns are exact in f32): no in-kernel
    # concatenation and no split stores.
    y2 = jnp.dot(low_s, w2_ref[...], preferred_element_type=jnp.float32)

    # ---- global average pool + channel softmax over 2*Cop channels --------
    inv_hw = 1.0 / float(HW)
    p1 = jnp.sum(y1, axis=0, keepdims=True) * inv_hw     # (1, Cop)
    p2 = jnp.sum(y2, axis=0, keepdims=True) * inv_hw     # (1, Cop)

    m = jnp.maximum(jnp.max(p1, axis=1, keepdims=True),
                    jnp.max(p2, axis=1, keepdims=True))  # (1, 1)
    e1 = jnp.exp(p1 - m)
    e2 = jnp.exp(p2 - m)
    inv_z = 1.0 / (jnp.sum(e1, axis=1, keepdims=True)
                   + jnp.sum(e2, axis=1, keepdims=True))
    s1 = e1 * inv_z                                      # (1, Cop)
    s2 = e2 * inv_z                                      # (1, Cop)

    # out1 + out2 = s1*Y1 + s2*Y2 — one full-width lane-dense store.
    out = s1 * y1 + s2 * y2
    o_ref[0] = out.astype(o_ref.dtype)


# ----------------------------------------------------------------------------
# Host-side parameter prep + wrapper
# ----------------------------------------------------------------------------
def _expand_grouped_weight(w, groups):
    """(Cout, Cin/groups, kh, kw) grouped weight -> dense block-diagonal
    (Cout, Cin, kh, kw)."""
    cout, cin_g, kh, kw = w.shape
    cin = cin_g * groups
    out_g = cout // groups
    dense = jnp.zeros((cout, cin, kh, kw), w.dtype)
    for g in range(groups):
        dense = dense.at[g * out_g:(g + 1) * out_g,
                         g * cin_g:(g + 1) * cin_g].set(
            w[g * out_g:(g + 1) * out_g])
    return dense


def init_cru_params(key, op_channel, alpha=0.5, squeeze_radio=2, group_size=2,
                    group_kernel_size=3):
    cup = int(alpha * op_channel)
    clow = op_channel - cup
    cup_s = cup // squeeze_radio
    clow_s = clow // squeeze_radio
    ks = jax.random.split(key, 6)
    p = {}
    p["w_sq1"] = 0.2 * jax.random.normal(ks[0], (cup_s, cup, 1, 1), jnp.float32)
    p["w_sq2"] = 0.2 * jax.random.normal(ks[1], (clow_s, clow, 1, 1), jnp.float32)
    p["w_gwc"] = 0.2 * jax.random.normal(
        ks[2], (op_channel, cup_s // group_size,
                group_kernel_size, group_kernel_size), jnp.float32)
    p["b_gwc"] = 0.1 * jax.random.normal(ks[3], (op_channel,), jnp.float32)
    p["w_pwc1"] = 0.2 * jax.random.normal(ks[4], (op_channel, cup_s, 1, 1),
                                          jnp.float32)
    p["w_pwc2"] = 0.2 * jax.random.normal(
        ks[5], (op_channel - clow_s, clow_s, 1, 1), jnp.float32)
    return p


@functools.partial(jax.jit, static_argnames=("alpha", "squeeze_radio",
                                              "group_size"))
def cru_forward(x_nchw, params, alpha=0.5, squeeze_radio=2, group_size=2):
    """Pallas implementation of CRU.forward. Input/output are NCHW."""
    B, Cop, H, W = x_nchw.shape
    Cup = int(alpha * Cop)
    Clow = Cop - Cup
    Cup_s = Cup // squeeze_radio
    Clow_s = Clow // squeeze_radio
    CA = Cop - Clow_s
    HW = H * W

    # Single layout change around the fused kernel: NCHW -> (B, H*W, C).
    # TODO(synk): keep the surrounding model channels-last and drop these
    # transposes (pure HBM traffic; relatively most expensive on v5e).
    x = jnp.transpose(x_nchw, (0, 2, 3, 1)).reshape(B, HW, Cop)

    # ---- host-side weight prep (runs once under jit, tiny) -----------------
    w_sq1 = jnp.transpose(params["w_sq1"][:, :, 0, 0], (1, 0))    # (Cup, Cup_s)
    w_sq2 = jnp.transpose(params["w_sq2"][:, :, 0, 0], (1, 0))    # (Clow, Clow_s)
    w_pwc1 = jnp.transpose(params["w_pwc1"][:, :, 0, 0], (1, 0))  # (Cup_s, Cop)
    w_pwc2 = jnp.transpose(params["w_pwc2"][:, :, 0, 0], (1, 0))  # (Clow_s, CA)

    # Grouped 3x3 -> dense block-diagonal per-tap (9, Cup_s, Cop); fold PWC1
    # into the centre tap (same operand up_s -> one whole MXU matmul saved),
    # then flatten to the im2col weight (9*Cup_s, Cop).
    wg_dense = _expand_grouped_weight(params["w_gwc"], group_size)
    wg_taps = jnp.transpose(wg_dense, (2, 3, 1, 0)).reshape(9, Cup_s, Cop)
    wg_taps = wg_taps.at[4].add(w_pwc1)
    wg_im2col = wg_taps.reshape(9 * Cup_s, Cop)
    b_gwc = params["b_gwc"].reshape(1, Cop)

    # Y2 = cat([PWC2(low_s), low_s]) as one matmul against [wp2 | I].
    w2_full = jnp.concatenate(
        [w_pwc2, jnp.eye(Clow_s, dtype=w_pwc2.dtype)], axis=1)    # (Clow_s, Cop)

    # Column-edge validity masks for the flattened 3x3 conv (built once, tiny).
    col = jnp.arange(HW, dtype=jnp.int32) % W
    mask = jnp.stack([(col > 0), (col < W - 1)], axis=1).astype(jnp.float32)

    kernel = functools.partial(_cru_kernel, H=H, W=W, Cup=Cup, Cup_s=Cup_s,
                               Cop=Cop)

    flops = 2 * B * HW * (Cup * Cup_s + Clow * Clow_s
                          + 9 * Cup_s * Cop + Clow_s * Cop) + 6 * B * HW * Cop
    bytes_accessed = 4 * (2 * B * HW * Cop + Cup * Cup_s + Clow * Clow_s
                          + 9 * Cup_s * Cop + Cop + Clow_s * Cop + 2 * HW)
    cost = pl.CostEstimate(flops=int(flops), transcendentals=int(2 * B * Cop),
                           bytes_accessed=int(bytes_accessed))

    # TODO(synk): for real SCConv sizes (e.g. Cop=512, 56x56) add a spatially
    # tiled second "parallel" grid axis with a two-pass pooled softmax so tiles
    # fit v7x's 64 MiB VMEM and both TensorCores stay busy when B is small.
    out_flat = pl.pallas_call(
        kernel,
        out_shape=jax.ShapeDtypeStruct((B, HW, Cop), x_nchw.dtype),
        grid=(B,),
        in_specs=[
            pl.BlockSpec((1, HW, Cop), lambda b: (b, 0, 0)),
            # Weight / mask index_maps are constant across the grid, so Pallas
            # fetches them once (no per-step re-DMA).
            pl.BlockSpec((Cup, Cup_s), lambda b: (0, 0)),
            pl.BlockSpec((Clow, Clow_s), lambda b: (0, 0)),
            pl.BlockSpec((9 * Cup_s, Cop), lambda b: (0, 0)),
            pl.BlockSpec((1, Cop), lambda b: (0, 0)),
            pl.BlockSpec((Clow_s, Cop), lambda b: (0, 0)),
            pl.BlockSpec((HW, 2), lambda b: (0, 0)),
        ],
        out_specs=pl.BlockSpec((1, HW, Cop), lambda b: (b, 0, 0)),
        scratch_shapes=[
            pltpu.VMEM((HW + 2 * (W + 1), Cup_s), jnp.float32),   # padded halo
            pltpu.VMEM((HW, 9 * Cup_s), jnp.float32),             # im2col
        ],
        compiler_params=pltpu.CompilerParams(
            dimension_semantics=("parallel",)),
        cost_estimate=cost,
    )(x, w_sq1, w_sq2, wg_im2col, b_gwc, w2_full, mask)

    return jnp.transpose(out_flat.reshape(B, H, W, Cop), (0, 3, 1, 2))


# ----------------------------------------------------------------------------
# Pure-JAX reference (for correctness check)
# ----------------------------------------------------------------------------
def cru_reference(x, params, alpha=0.5, squeeze_radio=2, group_size=2):
    Cop = x.shape[1]
    Cup = int(alpha * Cop)
    Clow = Cop - Cup

    def conv(inp, w, groups=1, pad=0):
        return jax.lax.conv_general_dilated(
            inp, w, window_strides=(1, 1), padding=((pad, pad), (pad, pad)),
            feature_group_count=groups,
            dimension_numbers=("NCHW", "OIHW", "NCHW"))

    up, low = x[:, :Cup], x[:, Cup:]
    up_s = conv(up, params["w_sq1"])
    low_s = conv(low, params["w_sq2"])
    y1 = (conv(up_s, params["w_gwc"], groups=group_size, pad=1)
          + params["b_gwc"].reshape(1, -1, 1, 1)
          + conv(up_s, params["w_pwc1"]))
    y2 = jnp.concatenate([conv(low_s, params["w_pwc2"]), low_s], axis=1)
    out = jnp.concatenate([y1, y2], axis=1)
    pooled = jnp.mean(out, axis=(2, 3), keepdims=True)
    s = jax.nn.softmax(pooled, axis=1)
    out = s * out
    return out[:, :Cop] + out[:, Cop:]


# ----------------------------------------------------------------------------
if __name__ == "__main__":
    key = jax.random.PRNGKey(0)
    kx, kp = jax.random.split(key)

    # op_channel must be a multiple of 8 for alpha=1/2, squeeze_radio=2,
    # group_size=2 (same constraint as the PyTorch module). Smallest valid: 8.
    B, Cop, H, W = 2, 8, 16, 16
    x = jax.random.normal(kx, (B, Cop, H, W), jnp.float32)
    params = init_cru_params(kp, op_channel=Cop)

    out = cru_forward(x, params)
    out = jax.block_until_ready(out)

    ref = cru_reference(x, params)
    assert out.shape == (B, Cop, H, W)
    max_err = jnp.max(jnp.abs(out - ref))
    assert jnp.allclose(out, ref, atol=1e-4, rtol=1e-4), \
        f"max abs err = {max_err}"

    print("KERNEL_OK")
</pallas_src>

<mosaic_0001>
module attributes {stable_mosaic.version = 11 : i64} {
  func.func @_cru_kernel(%arg0: i32, %arg1: memref<1x256x8xf32, #tpu.memory_space<vmem>>, %arg2: memref<4x2xf32, #tpu.memory_space<vmem>>, %arg3: memref<4x2xf32, #tpu.memory_space<vmem>>, %arg4: memref<18x8xf32, #tpu.memory_space<vmem>>, %arg5: memref<1x8xf32, #tpu.memory_space<vmem>>, %arg6: memref<2x8xf32, #tpu.memory_space<vmem>>, %arg7: memref<256x2xf32, #tpu.memory_space<vmem>>, %arg8: memref<1x256x8xf32, #tpu.memory_space<vmem>>, %arg9: memref<290x2xf32, #tpu.memory_space<vmem>>, %arg10: memref<256x18xf32, #tpu.memory_space<vmem>>) attributes {dimension_semantics = [#tpu.dimension_semantics<parallel>], iteration_bounds = array<i64: 2>, scalar_prefetch = 0 : i64, scratch_operands = 2 : i64, tpu.core_type = #tpu.core_type<tc>, window_params = [{transform_indices = @transform_0, window_bounds = array<i64: 1, 256, 8>}, {pipeline_mode = #tpu.pipeline_mode<synchronous>, transform_indices = @transform_1, window_bounds = array<i64: 4, 2>}, {pipeline_mode = #tpu.pipeline_mode<synchronous>, transform_indices = @transform_2, window_bounds = array<i64: 4, 2>}, {pipeline_mode = #tpu.pipeline_mode<synchronous>, transform_indices = @transform_3, window_bounds = array<i64: 18, 8>}, {pipeline_mode = #tpu.pipeline_mode<synchronous>, transform_indices = @transform_4, window_bounds = array<i64: 1, 8>}, {pipeline_mode = #tpu.pipeline_mode<synchronous>, transform_indices = @transform_5, window_bounds = array<i64: 2, 8>}, {pipeline_mode = #tpu.pipeline_mode<synchronous>, transform_indices = @transform_6, window_bounds = array<i64: 256, 2>}, {transform_indices = @transform_7, window_bounds = array<i64: 1, 256, 8>}]} {
    %c0 = arith.constant 0 : index
    %c0_0 = arith.constant 0 : index
    %c0_1 = arith.constant 0 : index
    %0 = vector.load %arg1[%c0, %c0_0, %c0_1] : memref<1x256x8xf32, #tpu.memory_space<vmem>>, vector<1x256x4xf32>
    %1 = vector.shape_cast %0 : vector<1x256x4xf32> to vector<256x4xf32>
    %c0_2 = arith.constant 0 : index
    %c0_3 = arith.constant 0 : index
    %c4 = arith.constant 4 : index
    %2 = vector.load %arg1[%c0_2, %c0_3, %c4] : memref<1x256x8xf32, #tpu.memory_space<vmem>>, vector<1x256x4xf32>
    %3 = vector.shape_cast %2 : vector<1x256x4xf32> to vector<256x4xf32>
    %c0_4 = arith.constant 0 : index
    %c0_5 = arith.constant 0 : index
    %4 = vector.load %arg2[%c0_4, %c0_5] : memref<4x2xf32, #tpu.memory_space<vmem>>, vector<4x2xf32>
    %cst = arith.constant dense<0.000000e+00> : vector<256x2xf32>
    %5 = tpu.matmul %1, %4, %cst {dimension_numbers = #tpu.dot_dimension_numbers<[1], [0], [0], [1], [0, 0, 1, 1], [], []>} : vector<256x4xf32>, vector<4x2xf32>, vector<256x2xf32> -> vector<256x2xf32>
    %c0_6 = arith.constant 0 : index
    %c0_7 = arith.constant 0 : index
    %6 = vector.load %arg3[%c0_6, %c0_7] : memref<4x2xf32, #tpu.memory_space<vmem>>, vector<4x2xf32>
    %cst_8 = arith.constant dense<0.000000e+00> : vector<256x2xf32>
    %7 = tpu.matmul %3, %6, %cst_8 {dimension_numbers = #tpu.dot_dimension_numbers<[1], [0], [0], [1], [0, 0, 1, 1], [], []>} : vector<256x4xf32>, vector<4x2xf32>, vector<256x2xf32> -> vector<256x2xf32>
    %cst_9 = arith.constant 0.000000e+00 : f32
    %8 = vector.broadcast %cst_9 : f32 to vector<17x2xf32>
    %c0_10 = arith.constant 0 : index
    %c0_11 = arith.constant 0 : index
    %9 = vector.load %arg9[%c0_10, %c0_11] : memref<290x2xf32, #tpu.memory_space<vmem>>, vector<17x2xf32>
    tpu.vector_store %arg9[%c0_10, %c0_11], %8 {strides = array<i32>} : memref<290x2xf32, #tpu.memory_space<vmem>>, vector<17x2xf32>,
    %cst_12 = arith.constant 0.000000e+00 : f32
    %10 = vector.broadcast %cst_12 : f32 to vector<17x2xf32>
    %c273 = arith.constant 273 : index
    %c0_13 = arith.constant 0 : index
    %11 = vector.load %arg9[%c273, %c0_13] : memref<290x2xf32, #tpu.memory_space<vmem>>, vector<17x2xf32>
    tpu.vector_store %arg9[%c273, %c0_13], %10 {strides = array<i32>} : memref<290x2xf32, #tpu.memory_space<vmem>>, vector<17x2xf32>,
    %c17 = arith.constant 17 : index
    %c0_14 = arith.constant 0 : index
    %12 = vector.load %arg9[%c17, %c0_14] : memref<290x2xf32, #tpu.memory_space<vmem>>, vector<256x2xf32>
    tpu.vector_store %arg9[%c17, %c0_14], %5 {strides = array<i32>} : memref<290x2xf32, #tpu.memory_space<vmem>>, vector<256x2xf32>,
    %c0_15 = arith.constant 0 : index
    %c0_16 = arith.constant 0 : index
    %13 = vector.load %arg7[%c0_15, %c0_16] : memref<256x2xf32, #tpu.memory_space<vmem>>, vector<256x1xf32>
    %c0_17 = arith.constant 0 : index
    %c1 = arith.constant 1 : index
    %14 = vector.load %arg7[%c0_17, %c1] : memref<256x2xf32, #tpu.memory_space<vmem>>, vector<256x1xf32>
    %c0_18 = arith.constant 0 : index
    %c0_19 = arith.constant 0 : index
    %15 = vector.load %arg9[%c0_18, %c0_19] : memref<290x2xf32, #tpu.memory_space<vmem>>, vector<256x2xf32>
    %16 = vector.broadcast %13 : vector<256x1xf32> to vector<256x2xf32>
    %17 = arith.mulf %15, %16 : vector<256x2xf32>
    %c0_20 = arith.constant 0 : index
    %c0_21 = arith.constant 0 : index
    %18 = vector.load %arg10[%c0_20, %c0_21] : memref<256x18xf32, #tpu.memory_space<vmem>>, vector<256x2xf32>
    tpu.vector_store %arg10[%c0_20, %c0_21], %17 {strides = array<i32>} : memref<256x18xf32, #tpu.memory_space<vmem>>, vector<256x2xf32>,
    %c1_22 = arith.constant 1 : index
    %c0_23 = arith.constant 0 : index
    %19 = vector.load %arg9[%c1_22, %c0_23] : memref<290x2xf32, #tpu.memory_space<vmem>>, vector<256x2xf32>
    %c0_24 = arith.constant 0 : index
    %c2 = arith.constant 2 : index
    %20 = vector.load %arg10[%c0_24, %c2] : memref<256x18xf32, #tpu.memory_space<vmem>>, vector<256x2xf32>
    tpu.vector_store %arg10[%c0_24, %c2], %19 {strides = array<i32>} : memref<256x18xf32, #tpu.memory_space<vmem>>, vector<256x2xf32>,
    %c2_25 = arith.constant 2 : index
    %c0_26 = arith.constant 0 : index
    %21 = vector.load %arg9[%c2_25, %c0_26] : memref<290x2xf32, #tpu.memory_space<vmem>>, vector<256x2xf32>
    %22 = vector.broadcast %14 : vector<256x1xf32> to vector<256x2xf32>
    %23 = arith.mulf %21, %22 : vector<256x2xf32>
    %c0_27 = arith.constant 0 : index
    %c4_28 = arith.constant 4 : index
    %24 = vector.load %arg10[%c0_27, %c4_28] : memref<256x18xf32, #tpu.memory_space<vmem>>, vector<256x2xf32>
    tpu.vector_store %arg10[%c0_27, %c4_28], %23 {strides = array<i32>} : memref<256x18xf32, #tpu.memory_space<vmem>>, vector<256x2xf32>,
    %c16 = arith.constant 16 : index
    %c0_29 = arith.constant 0 : index
    %25 = vector.load %arg9[%c16, %c0_29] : memref<290x2xf32, #tpu.memory_space<vmem>>, vector<256x2xf32>
    %26 = vector.broadcast %13 : vector<256x1xf32> to vector<256x2xf32>
    %27 = arith.mulf %25, %26 : vector<256x2xf32>
    %c0_30 = arith.constant 0 : index
    %c6 = arith.constant 6 : index
    %28 = vector.load %arg10[%c0_30, %c6] : memref<256x18xf32, #tpu.memory_space<vmem>>, vector<256x2xf32>
    tpu.vector_store %arg10[%c0_30, %c6], %27 {strides = array<i32>} : memref<256x18xf32, #tpu.memory_space<vmem>>, vector<256x2xf32>,
    %c17_31 = arith.constant 17 : index
    %c0_32 = arith.constant 0 : index
    %29 = vector.load %arg9[%c17_31, %c0_32] : memref<290x2xf32, #tpu.memory_space<vmem>>, vector<256x2xf32>
    %c0_33 = arith.constant 0 : index
    %c8 = arith.constant 8 : index
    %30 = vector.load %arg10[%c0_33, %c8] : memref<256x18xf32, #tpu.memory_space<vmem>>, vector<256x2xf32>
    tpu.vector_store %arg10[%c0_33, %c8], %29 {strides = array<i32>} : memref<256x18xf32, #tpu.memory_space<vmem>>, vector<256x2xf32>,
    %c18 = arith.constant 18 : index
    %c0_34 = arith.constant 0 : index
    %31 = vector.load %arg9[%c18, %c0_34] : memref<290x2xf32, #tpu.memory_space<vmem>>, vector<256x2xf32>
    %32 = vector.broadcast %14 : vector<256x1xf32> to vector<256x2xf32>
    %33 = arith.mulf %31, %32 : vector<256x2xf32>
    %c0_35 = arith.constant 0 : index
    %c10 = arith.constant 10 : index
    %34 = vector.load %arg10[%c0_35, %c10] : memref<256x18xf32, #tpu.memory_space<vmem>>, vector<256x2xf32>
    tpu.vector_store %arg10[%c0_35, %c10], %33 {strides = array<i32>} : memref<256x18xf32, #tpu.memory_space<vmem>>, vector<256x2xf32>,
    %c32 = arith.constant 32 : index
    %c0_36 = arith.constant 0 : index
    %35 = vector.load %arg9[%c32, %c0_36] : memref<290x2xf32, #tpu.memory_space<vmem>>, vector<256x2xf32>
    %36 = vector.broadcast %13 : vector<256x1xf32> to vector<256x2xf32>
    %37 = arith.mulf %35, %36 : vector<256x2xf32>
    %c0_37 = arith.constant 0 : index
    %c12 = arith.constant 12 : index
    %38 = vector.load %arg10[%c0_37, %c12] : memref<256x18xf32, #tpu.memory_space<vmem>>, vector<256x2xf32>
    tpu.vector_store %arg10[%c0_37, %c12], %37 {strides = array<i32>} : memref<256x18xf32, #tpu.memory_space<vmem>>, vector<256x2xf32>,
    %c33 = arith.constant 33 : index
    %c0_38 = arith.constant 0 : index
    %39 = vector.load %arg9[%c33, %c0_38] : memref<290x2xf32, #tpu.memory_space<vmem>>, vector<256x2xf32>
    %c0_39 = arith.constant 0 : index
    %c14 = arith.constant 14 : index
    %40 = vector.load %arg10[%c0_39, %c14] : memref<256x18xf32, #tpu.memory_space<vmem>>, vector<256x2xf32>
    tpu.vector_store %arg10[%c0_39, %c14], %39 {strides = array<i32>} : memref<256x18xf32, #tpu.memory_space<vmem>>, vector<256x2xf32>,
    %c34 = arith.constant 34 : index
    %c0_40 = arith.constant 0 : index
    %41 = vector.load %arg9[%c34, %c0_40] : memref<290x2xf32, #tpu.memory_space<vmem>>, vector<256x2xf32>
    %42 = vector.broadcast %14 : vector<256x1xf32> to vector<256x2xf32>
    %43 = arith.mulf %41, %42 : vector<256x2xf32>
    %c0_41 = arith.constant 0 : index
    %c16_42 = arith.constant 16 : index
    %44 = vector.load %arg10[%c0_41, %c16_42] : memref<256x18xf32, #tpu.memory_space<vmem>>, vector<256x2xf32>
    tpu.vector_store %arg10[%c0_41, %c16_42], %43 {strides = array<i32>} : memref<256x18xf32, #tpu.memory_space<vmem>>, vector<256x2xf32>,
    %c0_43 = arith.constant 0 : index
    %c0_44 = arith.constant 0 : index
    %45 = vector.load %arg10[%c0_43, %c0_44] : memref<256x18xf32, #tpu.memory_space<vmem>>, vector<256x18xf32>
    %c0_45 = arith.constant 0 : index
    %c0_46 = arith.constant 0 : index
    %46 = vector.load %arg4[%c0_45, %c0_46] : memref<18x8xf32, #tpu.memory_space<vmem>>, vector<18x8xf32>
    %cst_47 = arith.constant dense<0.000000e+00> : vector<256x8xf32>
    %47 = tpu.matmul %45, %46, %cst_47 {dimension_numbers = #tpu.dot_dimension_numbers<[1], [0], [0], [1], [0, 0, 1, 1], [], []>} : vector<256x18xf32>, vector<18x8xf32>, vector<256x8xf32> -> vector<256x8xf32>
    %c0_48 = arith.constant 0 : index
    %c0_49 = arith.constant 0 : index
    %48 = vector.load %arg5[%c0_48, %c0_49] : memref<1x8xf32, #tpu.memory_space<vmem>>, vector<1x8xf32>
    %49 = vector.broadcast %48 : vector<1x8xf32> to vector<256x8xf32>
    %50 = arith.addf %47, %49 : vector<256x8xf32>
    %c0_50 = arith.constant 0 : index
    %c0_51 = arith.constant 0 : index
    %51 = vector.load %arg6[%c0_50, %c0_51] : memref<2x8xf32, #tpu.memory_space<vmem>>, vector<2x8xf32>
    %cst_52 = arith.constant dense<0.000000e+00> : vector<256x8xf32>
    %52 = tpu.matmul %7, %51, %cst_52 {dimension_numbers = #tpu.dot_dimension_numbers<[1], [0], [0], [1], [0, 0, 1, 1], [], []>} : vector<256x2xf32>, vector<2x8xf32>, vector<256x8xf32> -> vector<256x8xf32>
    %cst_53 = arith.constant dense<0.000000e+00> : vector<8xf32>
    %53 = vector.multi_reduction <add>, %50, %cst_53 [0] : vector<256x8xf32> to vector<8xf32>
    %54 = vector.shape_cast %53 : vector<8xf32> to vector<1x8xf32>
    %cst_54 = arith.constant 3.906250e-03 : f32
    %55 = vector.broadcast %cst_54 : f32 to vector<1x8xf32>
    %56 = arith.mulf %54, %55 : vector<1x8xf32>
    %cst_55 = arith.constant dense<0.000000e+00> : vector<8xf32>
    %57 = vector.multi_reduction <add>, %52, %cst_55 [0] : vector<256x8xf32> to vector<8xf32>
    %58 = vector.shape_cast %57 : vector<8xf32> to vector<1x8xf32>
    %cst_56 = arith.constant 3.906250e-03 : f32
    %59 = vector.broadcast %cst_56 : f32 to vector<1x8xf32>
    %60 = arith.mulf %58, %59 : vector<1x8xf32>
    %cst_57 = arith.constant dense<0xFF800000> : vector<1xf32>
    %61 = vector.multi_reduction <maximumf>, %56, %cst_57 [1] : vector<1x8xf32> to vector<1xf32>
    %62 = vector.shape_cast %61 : vector<1xf32> to vector<1x1xf32>
    %cst_58 = arith.constant dense<0xFF800000> : vector<1xf32>
    %63 = vector.multi_reduction <maximumf>, %60, %cst_58 [1] : vector<1x8xf32> to vector<1xf32>
    %64 = vector.shape_cast %63 : vector<1xf32> to vector<1x1xf32>
    %65 = arith.maximumf %62, %64 : vector<1x1xf32>
    %66 = vector.broadcast %65 : vector<1x1xf32> to vector<1x8xf32>
    %67 = arith.subf %56, %66 : vector<1x8xf32>
    %68 = math.exp %67 : vector<1x8xf32>
    %69 = vector.broadcast %65 : vector<1x1xf32> to vector<1x8xf32>
    %70 = arith.subf %60, %69 : vector<1x8xf32>
    %71 = math.exp %70 : vector<1x8xf32>
    %cst_59 = arith.constant dense<0.000000e+00> : vector<1xf32>
    %72 = vector.multi_reduction <add>, %68, %cst_59 [1] : vector<1x8xf32> to vector<1xf32>
    %73 = vector.shape_cast %72 : vector<1xf32> to vector<1x1xf32>
    %cst_60 = arith.constant dense<0.000000e+00> : vector<1xf32>
    %74 = vector.multi_reduction <add>, %71, %cst_60 [1] : vector<1x8xf32> to vector<1xf32>
    %75 = vector.shape_cast %74 : vector<1xf32> to vector<1x1xf32>
    %76 = arith.addf %73, %75 : vector<1x1xf32>
    %cst_61 = arith.constant 1.000000e+00 : f32
    %77 = vector.broadcast %cst_61 : f32 to vector<1x1xf32>
    %78 = arith.divf %77, %76 : vector<1x1xf32>
    %79 = vector.broadcast %78 : vector<1x1xf32> to vector<1x8xf32>
    %80 = arith.mulf %68, %79 : vector<1x8xf32>
    %81 = vector.broadcast %78 : vector<1x1xf32> to vector<1x8xf32>
    %82 = arith.mulf %71, %81 : vector<1x8xf32>
    %83 = vector.broadcast %80 : vector<1x8xf32> to vector<256x8xf32>
    %84 = arith.mulf %83, %50 : vector<256x8xf32>
    %85 = vector.broadcast %82 : vector<1x8xf32> to vector<256x8xf32>
    %86 = arith.mulf %85, %52 : vector<256x8xf32>
    %87 = arith.addf %84, %86 : vector<256x8xf32>
    %c0_62 = arith.constant 0 : index
    %c0_63 = arith.constant 0 : index
    %c0_64 = arith.constant 0 : index
    %88 = vector.load %arg8[%c0_62, %c0_63, %c0_64] : memref<1x256x8xf32, #tpu.memory_space<vmem>>, vector<1x256x8xf32>
    %89 = vector.shape_cast %88 : vector<1x256x8xf32> to vector<256x8xf32>
    %90 = vector.shape_cast %87 : vector<256x8xf32> to vector<1x256x8xf32>
    tpu.vector_store %arg8[%c0_62, %c0_63, %c0_64], %90 {strides = array<i32>} : memref<1x256x8xf32, #tpu.memory_space<vmem>>, vector<1x256x8xf32>,
    return
  }
  func.func @transform_0(%arg0: i32) -> (i32, i32, i32) {
    %c0_i32 = arith.constant 0 : i32
    %c0_i32_0 = arith.constant 0 : i32
    %c0_i32_1 = arith.constant 0 : i32
    return %arg0, %c0_i32, %c0_i32_0 : i32, i32, i32
  }
  func.func @transform_1(%arg0: i32) -> (i32, i32) {
    %c0_i32 = arith.constant 0 : i32
    %c0_i32_0 = arith.constant 0 : i32
    %c0_i32_1 = arith.constant 0 : i32
    return %c0_i32, %c0_i32_0 : i32, i32
  }
  func.func @transform_2(%arg0: i32) -> (i32, i32) {
    %c0_i32 = arith.constant 0 : i32
    %c0_i32_0 = arith.constant 0 : i32
    %c0_i32_1 = arith.constant 0 : i32
    return %c0_i32, %c0_i32_0 : i32, i32
  }
  func.func @transform_3(%arg0: i32) -> (i32, i32) {
    %c0_i32 = arith.constant 0 : i32
    %c0_i32_0 = arith.constant 0 : i32
    %c0_i32_1 = arith.constant 0 : i32
    return %c0_i32, %c0_i32_0 : i32, i32
  }
  func.func @transform_4(%arg0: i32) -> (i32, i32) {
    %c0_i32 = arith.constant 0 : i32
    %c0_i32_0 = arith.constant 0 : i32
    %c0_i32_1 = arith.constant 0 : i32
    return %c0_i32, %c0_i32_0 : i32, i32
  }
  func.func @transform_5(%arg0: i32) -> (i32, i32) {
    %c0_i32 = arith.constant 0 : i32
    %c0_i32_0 = arith.constant 0 : i32
    %c0_i32_1 = arith.constant 0 : i32
    return %c0_i32, %c0_i32_0 : i32, i32
  }
  func.func @transform_6(%arg0: i32) -> (i32, i32) {
    %c0_i32 = arith.constant 0 : i32
    %c0_i32_0 = arith.constant 0 : i32
    %c0_i32_1 = arith.constant 0 : i32
    return %c0_i32, %c0_i32_0 : i32, i32
  }
  func.func @transform_7(%arg0: i32) -> (i32, i32, i32) {
    %c0_i32 = arith.constant 0 : i32
    %c0_i32_0 = arith.constant 0 : i32
    %c0_i32_1 = arith.constant 0 : i32
    return %arg0, %c0_i32, %c0_i32_0 : i32, i32, i32
  }
}

</mosaic_0001>

<llo_original>
// kernel: cru_forward.1
$region0: #{cru_forward.1}
  #allocation0 [shape = 'u32[]', space=smem, size = 0x4, offset = 0x4, fixed_abs, tag = 'smem constant byte address 0x4 - core index']
  #allocation1 [shape = 'u32[72,128]{1,0:T(1,128)}', space=vmem, size = 0x9000, scoped, tag = 'internal scratch']
  #allocation2 [shape = 'f32[290,2]{1,0:T(8,128)}', space=vmem, size = 0x25000, scoped, tag = 'scratch operand']
  #allocation3 [shape = 'f32[256,18]{1,0:T(8,128)}', space=vmem, size = 0x20000, scoped, tag = 'scratch operand']
  %s0 = inlined_call_operand.vmem [shape: f32[2,256,8], index: 0, kind: input, shape index: {}]
  %s1 = inlined_call_operand.vmem [shape: f32[4,2], index: 1, kind: input, shape index: {}]
  %s2 = inlined_call_operand.vmem [shape: f32[4,2], index: 2, kind: input, shape index: {}]
  %s3 = inlined_call_operand.vmem [shape: f32[18,8], index: 3, kind: input, shape index: {}]
  %s4 = inlined_call_operand.vmem [shape: f32[1,8], index: 4, kind: input, shape index: {}]
  %s5 = inlined_call_operand.vmem [shape: f32[2,8], index: 5, kind: input, shape index: {}]
  %s6 = inlined_call_operand.vmem [shape: f32[256,2], index: 6, kind: input, shape index: {}]
  %s7 = inlined_call_operand.vmem [shape: f32[2,256,8], index: 7, kind: output, shape index: {}]
  %s8 = sld [smem:[#allocation0]]
  $region61: #{cru_forward.1} parent=0
    _
  %s10 = ssub.s32 1, %s8
  %s11 = scalar_select 0, %s10, %s8
  loop: start=0, step=1, limit=4
  $region2: #{cru_forward.1} parent=0 // loop_pre_header
    _
  $region3: #{cru_forward.1} parent=0 // loop_header
    %s13 = sphi 0, %s17
    %p14 = scmp.ge.s32.totalorder %s13, 4
    %s23 = sphi 0, %s25
    %s26 = sphi 0, %s23
    %s27 = sphi 0, %s26
    %s43 = sphi 0, %s27
    %s47 = sphi 0, %s47
    %s49 = sphi 0, %s47
    %s50 = sphi 0, %s49
    %s64 = sphi 0, %s50
    %s68 = sphi 0, %s68
    %s70 = sphi 0, %s68
    %s71 = sphi 0, %s70
    %s85 = sphi 0, %s71
    %s89 = sphi 0, %s89
    %s91 = sphi 0, %s89
    %s92 = sphi 0, %s91
    %s106 = sphi 0, %s92
    %s110 = sphi 0, %s110
    %s112 = sphi 0, %s110
    %s113 = sphi 0, %s112
    %s127 = sphi 0, %s113
    %s131 = sphi 0, %s131
    %s133 = sphi 0, %s131
    %s134 = sphi 0, %s133
    %s148 = sphi 0, %s134
    %s152 = sphi 0, %s152
    %s154 = sphi 0, %s152
    %s155 = sphi 0, %s154
    %s169 = sphi 0, %s155
    %s175 = sphi 0, %s177
    %s178 = sphi 0, %s175
    %s179 = sphi 0, %s178
    %s195 = sphi 0, %s179
  $region4: #{cru_forward.1} parent=0 // loop_header_branch
    %16 = sbr.rel (%p14) target = $region8
  $region5: #{cru_forward.1} parent=0 // loop_body
    %s18 = ssub.s32 %s13, 1
    %s19 = ssub.s32 %s13, 2
    %s20 = sadd.s32 %s13, 1
    %s21 = ssub.s32 %s13, %s20
    %p22 = scmp.eq.s32.totalorder %s21, 0
    %s24 = sadd.s32 %s23, 1
    %s25 = scalar_select %p22, %s23, %s24
    %p28 = pneg %p22
    %p29 = scmp.eq.s32.totalorder %s13, 1
    %p30 = por %p28, %p29
    %p31 = scmp.ne.s32.totalorder %s23, %s26
    %p32 = scmp.eq.s32.totalorder %s13, 0
    %p33 = por %p31, %p32
    %p34 = scmp.ne.s32.totalorder %s23, %s26
    %p35 = scmp.eq.s32.totalorder %s18, 1
    %p36 = por %p34, %p35
    %p37 = scmp.ne.s32.totalorder %s26, %s27
    %p38 = scmp.eq.s32.totalorder %s18, 0
    %p39 = por %p37, %p38
    %p40 = scmp.ne.s32.totalorder %s26, %s27
    %p41 = scmp.eq.s32.totalorder %s19, 1
    %p42 = por %p40, %p41
    %p44 = scmp.ne.s32.totalorder %s27, %s43
    %p45 = scmp.eq.s32.totalorder %s19, 0
    %p46 = por %p44, %p45
    %s48 = sadd.s32 %s47, 1
    %p51 = scmp.eq.s32.totalorder %s13, 1
    %p52 = scmp.ne.s32.totalorder %s47, %s49
    %p53 = scmp.eq.s32.totalorder %s13, 0
    %p54 = por %p52, %p53
    %p55 = scmp.ne.s32.totalorder %s47, %s49
    %p56 = scmp.eq.s32.totalorder %s18, 1
    %p57 = por %p55, %p56
    %p58 = scmp.ne.s32.totalorder %s49, %s50
    %p59 = scmp.eq.s32.totalorder %s18, 0
    %p60 = por %p58, %p59
    %p61 = scmp.ne.s32.totalorder %s49, %s50
    %p62 = scmp.eq.s32.totalorder %s19, 1
    %p63 = por %p61, %p62
    %p65 = scmp.ne.s32.totalorder %s50, %s64
    %p66 = scmp.eq.s32.totalorder %s19, 0
    %p67 = por %p65, %p66
    %s69 = sadd.s32 %s68, 1
    %p72 = scmp.eq.s32.totalorder %s13, 1
    %p73 = scmp.ne.s32.totalorder %s68, %s70
    %p74 = scmp.eq.s32.totalorder %s13, 0
    %p75 = por %p73, %p74
    %p76 = scmp.ne.s32.totalorder %s68, %s70
    %p77 = scmp.eq.s32.totalorder %s18, 1
    %p78 = por %p76, %p77
    %p79 = scmp.ne.s32.totalorder %s70, %s71
    %p80 = scmp.eq.s32.totalorder %s18, 0
    %p81 = por %p79, %p80
    %p82 = scmp.ne.s32.totalorder %s70, %s71
    %p83 = scmp.eq.s32.totalorder %s19, 1
    %p84 = por %p82, %p83
    %p86 = scmp.ne.s32.totalorder %s71, %s85
    %p87 = scmp.eq.s32.totalorder %s19, 0
    %p88 = por %p86, %p87
    %s90 = sadd.s32 %s89, 1
    %p93 = scmp.eq.s32.totalorder %s13, 1
    %p94 = scmp.ne.s32.totalorder %s89, %s91
    %p95 = scmp.eq.s32.totalorder %s13, 0
    %p96 = por %p94, %p95
    %p97 = scmp.ne.s32.totalorder %s89, %s91
    %p98 = scmp.eq.s32.totalorder %s18, 1
    %p99 = por %p97, %p98
    %p100 = scmp.ne.s32.totalorder %s91, %s92
    %p101 = scmp.eq.s32.totalorder %s18, 0
    %p102 = por %p100, %p101
    %p103 = scmp.ne.s32.totalorder %s91, %s92
    %p104 = scmp.eq.s32.totalorder %s19, 1
    %p105 = por %p103, %p104
    %p107 = scmp.ne.s32.totalorder %s92, %s106
    %p108 = scmp.eq.s32.totalorder %s19, 0
    %p109 = por %p107, %p108
    %s111 = sadd.s32 %s110, 1
    %p114 = scmp.eq.s32.totalorder %s13, 1
    %p115 = scmp.ne.s32.totalorder %s110, %s112
    %p116 = scmp.eq.s32.totalorder %s13, 0
    %p117 = por %p115, %p116
    %p118 = scmp.ne.s32.totalorder %s110, %s112
    %p119 = scmp.eq.s32.totalorder %s18, 1
    %p120 = por %p118, %p119
    %p121 = scmp.ne.s32.totalorder %s112, %s113
    %p122 = scmp.eq.s32.totalorder %s18, 0
    %p123 = por %p121, %p122
    %p124 = scmp.ne.s32.totalorder %s112, %s113
    %p125 = scmp.eq.s32.totalorder %s19, 1
    %p126 = por %p124, %p125
    %p128 = scmp.ne.s32.totalorder %s113, %s127
    %p129 = scmp.eq.s32.totalorder %s19, 0
    %p130 = por %p128, %p129
    %s132 = sadd.s32 %s131, 1
    %p135 = scmp.eq.s32.totalorder %s13, 1
    %p136 = scmp.ne.s32.totalorder %s131, %s133
    %p137 = scmp.eq.s32.totalorder %s13, 0
    %p138 = por %p136, %p137
    %p139 = scmp.ne.s32.totalorder %s131, %s133
    %p140 = scmp.eq.s32.totalorder %s18, 1
    %p141 = por %p139, %p140
    %p142 = scmp.ne.s32.totalorder %s133, %s134
    %p143 = scmp.eq.s32.totalorder %s18, 0
    %p144 = por %p142, %p143
    %p145 = scmp.ne.s32.totalorder %s133, %s134
    %p146 = scmp.eq.s32.totalorder %s19, 1
    %p147 = por %p145, %p146
    %p149 = scmp.ne.s32.totalorder %s134, %s148
    %p150 = scmp.eq.s32.totalorder %s19, 0
    %p151 = por %p149, %p150
    %s153 = sadd.s32 %s152, 1
    %p156 = scmp.eq.s32.totalorder %s13, 1
    %p157 = scmp.ne.s32.totalorder %s152, %s154
    %p158 = scmp.eq.s32.totalorder %s13, 0
    %p159 = por %p157, %p158
    %p160 = scmp.ne.s32.totalorder %s152, %s154
    %p161 = scmp.eq.s32.totalorder %s18, 1
    %p162 = por %p160, %p161
    %p163 = scmp.ne.s32.totalorder %s154, %s155
    %p164 = scmp.eq.s32.totalorder %s18, 0
    %p165 = por %p163, %p164
    %p166 = scmp.ne.s32.totalorder %s154, %s155
    %p167 = scmp.eq.s32.totalorder %s19, 1
    %p168 = por %p166, %p167
    %p170 = scmp.ne.s32.totalorder %s155, %s169
    %p171 = scmp.eq.s32.totalorder %s19, 0
    %p172 = por %p170, %p171
    %s173 = ssub.s32 %s13, %s20
    %p174 = scmp.eq.s32.totalorder %s173, 0
    %s176 = sadd.s32 %s175, 1
    %s177 = scalar_select %p174, %s175, %s176
    %p180 = pneg %p174
    %p181 = scmp.eq.s32.totalorder %s13, 1
    %p182 = por %p180, %p181
    %p183 = scmp.ne.s32.totalorder %s175, %s178
    %p184 = scmp.eq.s32.totalorder %s13, 0
    %p185 = por %p183, %p184
    %p186 = scmp.ne.s32.totalorder %s175, %s178
    %p187 = scmp.eq.s32.totalorder %s18, 1
    %p188 = por %p186, %p187
    %p189 = scmp.ne.s32.totalorder %s178, %s179
    %p190 = scmp.eq.s32.totalorder %s18, 0
    %p191 = por %p189, %p190
    %p192 = scmp.ne.s32.totalorder %s178, %s179
    %p193 = scmp.eq.s32.totalorder %s19, 1
    %p194 = por %p192, %p193
    %p196 = scmp.ne.s32.totalorder %s179, %s195
    %p197 = scmp.eq.s32.totalorder %s19, 0
    %p198 = por %p196, %p197
    %p199 = scmp.le.s32.totalorder 1, %s13
    %p200 = scmp.lt.s32.totalorder %s13, 3
    %p201 = pnand %p199, %p200
    %p202 = pneg %p201
    // Predicated region
    $region9: #{cru_forward.1} parent=5 // pred_check
      _
    $region10: #{cru_forward.1} parent=5 // pred_check_branch
      %204 = sbr.rel (%p201) target = $region12
    $region11: #{cru_forward.1} parent=5 // pred_region
      %s205 = ssub.s32 %s13, 1
      // Predicated region
      $region13: #{cru_forward.1} parent=11 // pred_check
        %p206 = pneg %p60
      $region14: #{cru_forward.1} parent=11 // pred_check_branch
        %208 = sbr.rel (%p206) target = $region16
      $region15: #{cru_forward.1} parent=11 // pred_region
        _
      $region16: #{cru_forward.1} parent=11 // pred_fallthru
        _
      // Predicated region
      $region17: #{cru_forward.1} parent=11 // pred_check
        %p209 = pneg %p81
      $region18: #{cru_forward.1} parent=11 // pred_check_branch
        %211 = sbr.rel (%p209) target = $region20
      $region19: #{cru_forward.1} parent=11 // pred_region
        _
      $region20: #{cru_forward.1} parent=11 // pred_fallthru
        _
      // Predicated region
      $region21: #{cru_forward.1} parent=11 // pred_check
        %p212 = pneg %p102
      $region22: #{cru_forward.1} parent=11 // pred_check_branch
        %214 = sbr.rel (%p212) target = $region24
      $region23: #{cru_forward.1} parent=11 // pred_region
        _
      $region24: #{cru_forward.1} parent=11 // pred_fallthru
        _
      // Predicated region
      $region25: #{cru_forward.1} parent=11 // pred_check
        %p215 = pneg %p123
      $region26: #{cru_forward.1} parent=11 // pred_check_branch
        %217 = sbr.rel (%p215) target = $region28
      $region27: #{cru_forward.1} parent=11 // pred_region
        _
      $region28: #{cru_forward.1} parent=11 // pred_fallthru
        _
      // Predicated region
      $region29: #{cru_forward.1} parent=11 // pred_check
        %p218 = pneg %p144
      $region30: #{cru_forward.1} parent=11 // pred_check_branch
        %220 = sbr.rel (%p218) target = $region32
      $region31: #{cru_forward.1} parent=11 // pred_region
        _
      $region32: #{cru_forward.1} parent=11 // pred_fallthru
        _
      // Predicated region
      $region33: #{cru_forward.1} parent=11 // pred_check
        %p221 = pneg %p165
      $region34: #{cru_forward.1} parent=11 // pred_check_branch
        %223 = sbr.rel (%p221) target = $region36
      $region35: #{cru_forward.1} parent=11 // pred_region
        _
      $region36: #{cru_forward.1} parent=11 // pred_fallthru
        _
    $region12: #{cru_forward.1} parent=5 // pred_fallthru
      _
    %p224 = scmp.lt.s32.totalorder %s13, 2
    // Predicated region
    $region37: #{cru_forward.1} parent=5 // pred_check
      %p225 = pneg %p224
    $region38: #{cru_forward.1} parent=5 // pred_check_branch
      %227 = sbr.rel (%p225) target = $region40
    $region39: #{cru_forward.1} parent=5 // pred_region
      // Predicated region
      $region41: #{cru_forward.1} parent=39 // pred_check
        %p228 = pneg %p33
      $region42: #{cru_forward.1} parent=39 // pred_check_branch
        %230 = sbr.rel (%p228) target = $region44
      $region43: #{cru_forward.1} parent=39 // pred_region
        %p231 = scmp.lt.s32.totalorder %s13, 1
        %s232 = scalar_select %p231, %s13, 1
        %s233 = smul.addr %s232, 32
        %s234 = smul.addr %s233, 8
        %s235 = scalar_lea.vmem %s0, %s234
      $region44: #{cru_forward.1} parent=39 // pred_fallthru
        _
    $region40: #{cru_forward.1} parent=5 // pred_fallthru
      _
    %p236 = scmp.le.s32.totalorder 1, %s13
    %p237 = scmp.lt.s32.totalorder %s13, 3
    %p238 = pnand %p236, %p237
    %p239 = pneg %p238
    // Predicated region
    $region45: #{cru_forward.1} parent=5 // pred_check
      _
    $region46: #{cru_forward.1} parent=5 // pred_check_branch
      %241 = sbr.rel (%p238) target = $region48
    $region47: #{cru_forward.1} parent=5 // pred_region
      %s242 = ssub.s32 %s13, 1
      %p243 = scmp.lt.s32.totalorder %s18, 1
      %s244 = scalar_select %p243, %s18, 1
      %s245 = smul.addr %s244, 32
      %s246 = smul.addr %s245, 8
      %s247 = scalar_lea.vmem %s0, %s246
      %p248 = pneg %p39
      %p249 = pneg %p36
      %p250 = pneg %p60
      %p251 = pneg %p57
      %p252 = pneg %p81
      %p253 = pneg %p78
      %p254 = pneg %p102
      %p255 = pneg %p99
      %p256 = pneg %p123
      %p257 = pneg %p120
      %p258 = pneg %p144
      %p259 = pneg %p141
      %p260 = pneg %p165
      %p261 = pneg %p162
      %p262 = pneg %p191
      %p263 = pneg %p188
      %p264 = scmp.lt.s32.totalorder %s18, 1
      %s265 = scalar_select %p264, %s18, 1
      %s266 = smul.addr %s265, 32
      %s267 = smul.addr %s266, 8
      %s268 = scalar_lea.vmem %s7, %s267
      %p269 = scmp.lt.s32.totalorder %s18, 1
      %s270 = scalar_select %p269, %s18, 1
      %s271 = smul.addr %s270, 32
      %s272 = smul.addr %s271, 8
      %s273 = scalar_lea.vmem %s0, %s272
      %p274 = scmp.lt.s32.totalorder %s18, 1
      %s275 = scalar_select %p274, %s18, 1
      %s276 = smul.addr %s275, 32
      %s277 = smul.addr %s276, 8
      %s278 = scalar_lea.vmem %s7, %s277
      %v279 = vld [vmem:[%s273] sm:$0xff]
      %v280 = vld [vmem:[%s273 + $0x8] sm:$0xff]
      %v281 = vld [vmem:[%s273 + $0x10] sm:$0xff]
      %v282 = vld [vmem:[%s273 + $0x18] sm:$0xff]
      %v283 = vld [vmem:[%s273 + $0x20] sm:$0xff]
      %v284 = vld [vmem:[%s273 + $0x28] sm:$0xff]
      %v285 = vld [vmem:[%s273 + $0x30] sm:$0xff]
      %v286 = vld [vmem:[%s273 + $0x38] sm:$0xff]
      %v287 = vld [vmem:[%s273 + $0x40] sm:$0xff]
      %v288 = vld [vmem:[%s273 + $0x48] sm:$0xff]
      %v289 = vld [vmem:[%s273 + $0x50] sm:$0xff]
      %v290 = vld [vmem:[%s273 + $0x58] sm:$0xff]
      %v291 = vld [vmem:[%s273 + $0x60] sm:$0xff]
      %v292 = vld [vmem:[%s273 + $0x68] sm:$0xff]
      %v293 = vld [vmem:[%s273 + $0x70] sm:$0xff]
      %v294 = vld [vmem:[%s273 + $0x78] sm:$0xff]
      %v295 = vld [vmem:[%s273 + $0x80] sm:$0xff]
      %v296 = vld [vmem:[%s273 + $0x88] sm:$0xff]
      %v297 = vld [vmem:[%s273 + $0x90] sm:$0xff]
      %v298 = vld [vmem:[%s273 + $0x98] sm:$0xff]
      %v299 = vld [vmem:[%s273 + $0xa0] sm:$0xff]
      %v300 = vld [vmem:[%s273 + $0xa8] sm:$0xff]
      %v301 = vld [vmem:[%s273 + $0xb0] sm:$0xff]
      %v302 = vld [vmem:[%s273 + $0xb8] sm:$0xff]
      %v303 = vld [vmem:[%s273 + $0xc0] sm:$0xff]
      %v304 = vld [vmem:[%s273 + $0xc8] sm:$0xff]
      %v305 = vld [vmem:[%s273 + $0xd0] sm:$0xff]
      %v306 = vld [vmem:[%s273 + $0xd8] sm:$0xff]
      %v307 = vld [vmem:[%s273 + $0xe0] sm:$0xff]
      %v308 = vld [vmem:[%s273 + $0xe8] sm:$0xff]
      %v309 = vld [vmem:[%s273 + $0xf0] sm:$0xff]
      %v310 = vld [vmem:[%s273 + $0xf8] sm:$0xff]
      %v311 = vld [vmem:[%s1] sm:$0xf]
      %vm312 = vcmask 31744
      %v314 = vsel %vm312, %v279, 0
      %v317 = vsel %vm312, %v280, 0
      %v320 = vsel %vm312, %v281, 0
      %v323 = vsel %vm312, %v282, 0
      %v326 = vsel %vm312, %v283, 0
      %v329 = vsel %vm312, %v284, 0
      %v332 = vsel %vm312, %v285, 0
      %v335 = vsel %vm312, %v286, 0
      %v338 = vsel %vm312, %v287, 0
      %v341 = vsel %vm312, %v288, 0
      %v344 = vsel %vm312, %v289, 0
      %v347 = vsel %vm312, %v290, 0
      %v350 = vsel %vm312, %v291, 0
      %v353 = vsel %vm312, %v292, 0
      %v356 = vsel %vm312, %v293, 0
      %v359 = vsel %vm312, %v294, 0
      %v362 = vsel %vm312, %v295, 0
      %v365 = vsel %vm312, %v296, 0
      %v368 = vsel %vm312, %v297, 0
      %v371 = vsel %vm312, %v298, 0
      %v374 = vsel %vm312, %v299, 0
      %v377 = vsel %vm312, %v300, 0
      %v380 = vsel %vm312, %v301, 0
      %v383 = vsel %vm312, %v302, 0
      %v386 = vsel %vm312, %v303, 0
      %v389 = vsel %vm312, %v304, 0
      %v392 = vsel %vm312, %v305, 0
      %v395 = vsel %vm312, %v306, 0
      %v398 = vsel %vm312, %v307, 0
      %v401 = vsel %vm312, %v308, 0
      %v404 = vsel %vm312, %v309, 0
      %v407 = vsel %vm312, %v310, 0
      %vm409 = vcmask 1043456
      %v411 = vsel %vm409, %v311, 0
      %413 = vmatpush.msra.mxu0 0.0
      %414 = vmatpush.msra.mxu0 0.0
      %415 = vmatpush.msra.mxu0 0.0
      %416 = vmatpush.msra.mxu0 0.0
      %417 = vmatpush.msra.mxu0 0.0
      %418 = vmatpush.msra.mxu0 0.0
      %419 = vmatpush.msra.mxu0 0.0
      %420 = vmatpush.msra.mxu0 0.0
      %421 = vmatpush.msra.mxu0 0.0
      %422 = vmatpush.msra.mxu0 0.0
      %423 = vmatpush.msra.mxu0 0.0
      %424 = vmatpush.msra.mxu0 0.0
      %425 = vmatpush.msra.mxu0 0.0
      %426 = vmatpush.msra.mxu0 0.0
      %427 = vmatpush.msra.mxu0 0.0
      %428 = vmatpush.msra.mxu0 %v411
      %429 = vmatmul.f32.gmra.mxu0 %v314
      %v430 = vpop.f32.mrf.mxu0
      %v431 = vadd.f32 0.0, %v430
      %432 = vmatmul.f32.gmra.mxu0 %v317
      %v433 = vpop.f32.mrf.mxu0
      %v434 = vadd.f32 0.0, %v433
      %435 = vmatmul.f32.gmra.mxu0 %v320
      %v436 = vpop.f32.mrf.mxu0
      %v437 = vadd.f32 0.0, %v436
      %438 = vmatmul.f32.gmra.mxu0 %v323
      %v439 = vpop.f32.mrf.mxu0
      %v440 = vadd.f32 0.0, %v439
      %441 = vmatmul.f32.gmra.mxu0 %v326
      %v442 = vpop.f32.mrf.mxu0
      %v443 = vadd.f32 0.0, %v442
      %444 = vmatmul.f32.gmra.mxu0 %v329
      %v445 = vpop.f32.mrf.mxu0
      %v446 = vadd.f32 0.0, %v445
      %447 = vmatmul.f32.gmra.mxu0 %v332
      %v448 = vpop.f32.mrf.mxu0
      %v449 = vadd.f32 0.0, %v448
      %450 = vmatmul.f32.gmra.mxu0 %v335
      %v451 = vpop.f32.mrf.mxu0
      %v452 = vadd.f32 0.0, %v451
      %453 = vmatmul.f32.gmra.mxu0 %v338
      %v454 = vpop.f32.mrf.mxu0
      %v455 = vadd.f32 0.0, %v454
      %456 = vmatmul.f32.gmra.mxu0 %v341
      %v457 = vpop.f32.mrf.mxu0
      %v458 = vadd.f32 0.0, %v457
      %459 = vmatmul.f32.gmra.mxu0 %v344
      %v460 = vpop.f32.mrf.mxu0
      %v461 = vadd.f32 0.0, %v460
      %462 = vmatmul.f32.gmra.mxu0 %v347
      %v463 = vpop.f32.mrf.mxu0
      %v464 = vadd.f32 0.0, %v463
      %465 = vmatmul.f32.gmra.mxu0 %v350
      %v466 = vpop.f32.mrf.mxu0
      %v467 = vadd.f32 0.0, %v466
      %468 = vmatmul.f32.gmra.mxu0 %v353
      %v469 = vpop.f32.mrf.mxu0
      %v470 = vadd.f32 0.0, %v469
      %471 = vmatmul.f32.gmra.mxu0 %v356
      %v472 = vpop.f32.mrf.mxu0
      %v473 = vadd.f32 0.0, %v472
      %474 = vmatmul.f32.gmra.mxu0 %v359
      %v475 = vpop.f32.mrf.mxu0
      %v476 = vadd.f32 0.0, %v475
      %477 = vmatmul.f32.gmra.mxu0 %v362
      %v478 = vpop.f32.mrf.mxu0
      %v479 = vadd.f32 0.0, %v478
      %480 = vmatmul.f32.gmra.mxu0 %v365
      %v481 = vpop.f32.mrf.mxu0
      %v482 = vadd.f32 0.0, %v481
      %483 = vmatmul.f32.gmra.mxu0 %v368
      %v484 = vpop.f32.mrf.mxu0
      %v485 = vadd.f32 0.0, %v484
      %486 = vmatmul.f32.gmra.mxu0 %v371
      %v487 = vpop.f32.mrf.mxu0
      %v488 = vadd.f32 0.0, %v487
      %489 = vmatmul.f32.gmra.mxu0 %v374
      %v490 = vpop.f32.mrf.mxu0
      %v491 = vadd.f32 0.0, %v490
      %492 = vmatmul.f32.gmra.mxu0 %v377
      %v493 = vpop.f32.mrf.mxu0
      %v494 = vadd.f32 0.0, %v493
      %495 = vmatmul.f32.gmra.mxu0 %v380
      %v496 = vpop.f32.mrf.mxu0
      %v497 = vadd.f32 0.0, %v496
      %498 = vmatmul.f32.gmra.mxu0 %v383
      %v499 = vpop.f32.mrf.mxu0
      %v500 = vadd.f32 0.0, %v499
      %501 = vmatmul.f32.gmra.mxu0 %v386
      %v502 = vpop.f32.mrf.mxu0
      %v503 = vadd.f32 0.0, %v502
      %504 = vmatmul.f32.gmra.mxu0 %v389
      %v505 = vpop.f32.mrf.mxu0
      %v506 = vadd.f32 0.0, %v505
      %507 = vmatmul.f32.gmra.mxu0 %v392
      %v508 = vpop.f32.mrf.mxu0
      %v509 = vadd.f32 0.0, %v508
      %510 = vmatmul.f32.gmra.mxu0 %v395
      %v511 = vpop.f32.mrf.mxu0
      %v512 = vadd.f32 0.0, %v511
      %513 = vmatmul.f32.gmra.mxu0 %v398
      %v514 = vpop.f32.mrf.mxu0
      %v515 = vadd.f32 0.0, %v514
      %516 = vmatmul.f32.gmra.mxu0 %v401
      %v517 = vpop.f32.mrf.mxu0
      %v518 = vadd.f32 0.0, %v517
      %519 = vmatmul.f32.gmra.mxu0 %v404
      %v520 = vpop.f32.mrf.mxu0
      %v521 = vadd.f32 0.0, %v520
      %522 = vmatmul.f32.gmra.mxu0 %v407
      %v523 = vpop.f32.mrf.mxu0
      %v524 = vadd.f32 0.0, %v523
      %525 = vdwg.mxu0
      %v526 = vld [vmem:[%s2] sm:$0xf]
      %527 = vrot.lane.b32.xlu0 %v279, 124
      %v528 = vpop.permute.xlu0 %527
      %529 = vrot.lane.b32.xlu0 %v280, 124
      %v530 = vpop.permute.xlu0 %529
      %531 = vrot.lane.b32.xlu0 %v281, 124
      %v532 = vpop.permute.xlu0 %531
      %533 = vrot.lane.b32.xlu0 %v282, 124
      %v534 = vpop.permute.xlu0 %533
      %535 = vrot.lane.b32.xlu0 %v283, 124
      %v536 = vpop.permute.xlu0 %535
      %537 = vrot.lane.b32.xlu0 %v284, 124
      %v538 = vpop.permute.xlu0 %537
      %539 = vrot.lane.b32.xlu0 %v285, 124
      %v540 = vpop.permute.xlu0 %539
      %541 = vrot.lane.b32.xlu0 %v286, 124
      %v542 = vpop.permute.xlu0 %541
      %543 = vrot.lane.b32.xlu0 %v287, 124
      %v544 = vpop.permute.xlu0 %543
      %545 = vrot.lane.b32.xlu0 %v288, 124
      %v546 = vpop.permute.xlu0 %545
      %547 = vrot.lane.b32.xlu0 %v289, 124
      %v548 = vpop.permute.xlu0 %547
      %549 = vrot.lane.b32.xlu0 %v290, 124
      %v550 = vpop.permute.xlu0 %549
      %551 = vrot.lane.b32.xlu0 %v291, 124
      %v552 = vpop.permute.xlu0 %551
      %553 = vrot.lane.b32.xlu0 %v292, 124
      %v554 = vpop.permute.xlu0 %553
      %555 = vrot.lane.b32.xlu0 %v293, 124
      %v556 = vpop.permute.xlu0 %555
      %557 = vrot.lane.b32.xlu0 %v294, 124
      %v558 = vpop.permute.xlu0 %557
      %559 = vrot.lane.b32.xlu0 %v295, 124
      %v560 = vpop.permute.xlu0 %559
      %561 = vrot.lane.b32.xlu0 %v296, 124
      %v562 = vpop.permute.xlu0 %561
      %563 = vrot.lane.b32.xlu0 %v297, 124
      %v564 = vpop.permute.xlu0 %563
      %565 = vrot.lane.b32.xlu0 %v298, 124
      %v566 = vpop.permute.xlu0 %565
      %567 = vrot.lane.b32.xlu0 %v299, 124
      %v568 = vpop.permute.xlu0 %567
      %569 = vrot.lane.b32.xlu0 %v300, 124
      %v570 = vpop.permute.xlu0 %569
      %571 = vrot.lane.b32.xlu0 %v301, 124
      %v572 = vpop.permute.xlu0 %571
      %573 = vrot.lane.b32.xlu0 %v302, 124
      %v574 = vpop.permute.xlu0 %573
      %575 = vrot.lane.b32.xlu0 %v303, 124
      %v576 = vpop.permute.xlu0 %575
      %577 = vrot.lane.b32.xlu0 %v304, 124
      %v578 = vpop.permute.xlu0 %577
      %579 = vrot.lane.b32.xlu0 %v305, 124
      %v580 = vpop.permute.xlu0 %579
      %581 = vrot.lane.b32.xlu0 %v306, 124
      %v582 = vpop.permute.xlu0 %581
      %583 = vrot.lane.b32.xlu0 %v307, 124
      %v584 = vpop.permute.xlu0 %583
      %585 = vrot.lane.b32.xlu0 %v308, 124
      %v586 = vpop.permute.xlu0 %585
      %587 = vrot.lane.b32.xlu0 %v309, 124
      %v588 = vpop.permute.xlu0 %587
      %589 = vrot.lane.b32.xlu0 %v310, 124
      %v590 = vpop.permute.xlu0 %589
      %v591 = vsel %vm312, %v528, 0
      %v593 = vsel %vm312, %v530, 0
      %v595 = vsel %vm312, %v532, 0
      %v597 = vsel %vm312, %v534, 0
      %v599 = vsel %vm312, %v536, 0
      %v601 = vsel %vm312, %v538, 0
      %v603 = vsel %vm312, %v540, 0
      %v605 = vsel %vm312, %v542, 0
      %v607 = vsel %vm312, %v544, 0
      %v609 = vsel %vm312, %v546, 0
      %v611 = vsel %vm312, %v548, 0
      %v613 = vsel %vm312, %v550, 0
      %v615 = vsel %vm312, %v552, 0
      %v617 = vsel %vm312, %v554, 0
      %v619 = vsel %vm312, %v556, 0
      %v621 = vsel %vm312, %v558, 0
      %v623 = vsel %vm312, %v560, 0
      %v625 = vsel %vm312, %v562, 0
      %v627 = vsel %vm312, %v564, 0
      %v629 = vsel %vm312, %v566, 0
      %v631 = vsel %vm312, %v568, 0
      %v633 = vsel %vm312, %v570, 0
      %v635 = vsel %vm312, %v572, 0
      %v637 = vsel %vm312, %v574, 0
      %v639 = vsel %vm312, %v576, 0
      %v641 = vsel %vm312, %v578, 0
      %v643 = vsel %vm312, %v580, 0
      %v645 = vsel %vm312, %v582, 0
      %v647 = vsel %vm312, %v584, 0
      %v649 = vsel %vm312, %v586, 0
      %v651 = vsel %vm312, %v588, 0
      %v653 = vsel %vm312, %v590, 0
      %v656 = vsel %vm409, %v526, 0
      %658 = vmatpush.msra.mxu0 0.0
      %659 = vmatpush.msra.mxu0 0.0
      %660 = vmatpush.msra.mxu0 0.0
      %661 = vmatpush.msra.mxu0 0.0
      %662 = vmatpush.msra.mxu0 0.0
      %663 = vmatpush.msra.mxu0 0.0
      %664 = vmatpush.msra.mxu0 0.0
      %665 = vmatpush.msra.mxu0 0.0
      %666 = vmatpush.msra.mxu0 0.0
      %667 = vmatpush.msra.mxu0 0.0
      %668 = vmatpush.msra.mxu0 0.0
      %669 = vmatpush.msra.mxu0 0.0
      %670 = vmatpush.msra.mxu0 0.0
      %671 = vmatpush.msra.mxu0 0.0
      %672 = vmatpush.msra.mxu0 0.0
      %673 = vmatpush.msra.mxu0 %v656
      %674 = vmatmul.f32.gmra.mxu0 %v591
      %v675 = vpop.f32.mrf.mxu0
      %v676 = vadd.f32 0.0, %v675
      %677 = vmatmul.f32.gmra.mxu0 %v593
      %v678 = vpop.f32.mrf.mxu0
      %v679 = vadd.f32 0.0, %v678
      %680 = vmatmul.f32.gmra.mxu0 %v595
      %v681 = vpop.f32.mrf.mxu0
      %v682 = vadd.f32 0.0, %v681
      %683 = vmatmul.f32.gmra.mxu0 %v597
      %v684 = vpop.f32.mrf.mxu0
      %v685 = vadd.f32 0.0, %v684
      %686 = vmatmul.f32.gmra.mxu0 %v599
      %v687 = vpop.f32.mrf.mxu0
      %v688 = vadd.f32 0.0, %v687
      %689 = vmatmul.f32.gmra.mxu0 %v601
      %v690 = vpop.f32.mrf.mxu0
      %v691 = vadd.f32 0.0, %v690
      %692 = vmatmul.f32.gmra.mxu0 %v603
      %v693 = vpop.f32.mrf.mxu0
      %v694 = vadd.f32 0.0, %v693
      %695 = vmatmul.f32.gmra.mxu0 %v605
      %v696 = vpop.f32.mrf.mxu0
      %v697 = vadd.f32 0.0, %v696
      %698 = vmatmul.f32.gmra.mxu0 %v607
      %v699 = vpop.f32.mrf.mxu0
      %v700 = vadd.f32 0.0, %v699
      %701 = vmatmul.f32.gmra.mxu0 %v609
      %v702 = vpop.f32.mrf.mxu0
      %v703 = vadd.f32 0.0, %v702
      %704 = vmatmul.f32.gmra.mxu0 %v611
      %v705 = vpop.f32.mrf.mxu0
      %v706 = vadd.f32 0.0, %v705
      %707 = vmatmul.f32.gmra.mxu0 %v613
      %v708 = vpop.f32.mrf.mxu0
      %v709 = vadd.f32 0.0, %v708
      %710 = vmatmul.f32.gmra.mxu0 %v615
      %v711 = vpop.f32.mrf.mxu0
      %v712 = vadd.f32 0.0, %v711
      %713 = vmatmul.f32.gmra.mxu0 %v617
      %v714 = vpop.f32.mrf.mxu0
      %v715 = vadd.f32 0.0, %v714
      %716 = vmatmul.f32.gmra.mxu0 %v619
      %v717 = vpop.f32.mrf.mxu0
      %v718 = vadd.f32 0.0, %v717
      %719 = vmatmul.f32.gmra.mxu0 %v621
      %v720 = vpop.f32.mrf.mxu0
      %v721 = vadd.f32 0.0, %v720
      %722 = vmatmul.f32.gmra.mxu0 %v623
      %v723 = vpop.f32.mrf.mxu0
      %v724 = vadd.f32 0.0, %v723
      %725 = vmatmul.f32.gmra.mxu0 %v625
      %v726 = vpop.f32.mrf.mxu0
      %v727 = vadd.f32 0.0, %v726
      %728 = vmatmul.f32.gmra.mxu0 %v627
      %v729 = vpop.f32.mrf.mxu0
      %v730 = vadd.f32 0.0, %v729
      %731 = vmatmul.f32.gmra.mxu0 %v629
      %v732 = vpop.f32.mrf.mxu0
      %v733 = vadd.f32 0.0, %v732
      %734 = vmatmul.f32.gmra.mxu0 %v631
      %v735 = vpop.f32.mrf.mxu0
      %v736 = vadd.f32 0.0, %v735
      %737 = vmatmul.f32.gmra.mxu0 %v633
      %v738 = vpop.f32.mrf.mxu0
      %v739 = vadd.f32 0.0, %v738
      %740 = vmatmul.f32.gmra.mxu0 %v635
      %v741 = vpop.f32.mrf.mxu0
      %v742 = vadd.f32 0.0, %v741
      %743 = vmatmul.f32.gmra.mxu0 %v637
      %v744 = vpop.f32.mrf.mxu0
      %v745 = vadd.f32 0.0, %v744
      %746 = vmatmul.f32.gmra.mxu0 %v639
      %v747 = vpop.f32.mrf.mxu0
      %v748 = vadd.f32 0.0, %v747
      %749 = vmatmul.f32.gmra.mxu0 %v641
      %v750 = vpop.f32.mrf.mxu0
      %v751 = vadd.f32 0.0, %v750
      %752 = vmatmul.f32.gmra.mxu0 %v643
      %v753 = vpop.f32.mrf.mxu0
      %v754 = vadd.f32 0.0, %v753
      %755 = vmatmul.f32.gmra.mxu0 %v645
      %v756 = vpop.f32.mrf.mxu0
      %v757 = vadd.f32 0.0, %v756
      %758 = vmatmul.f32.gmra.mxu0 %v647
      %v759 = vpop.f32.mrf.mxu0
      %v760 = vadd.f32 0.0, %v759
      %761 = vmatmul.f32.gmra.mxu0 %v649
      %v762 = vpop.f32.mrf.mxu0
      %v763 = vadd.f32 0.0, %v762
      %764 = vmatmul.f32.gmra.mxu0 %v651
      %v765 = vpop.f32.mrf.mxu0
      %v766 = vadd.f32 0.0, %v765
      %767 = vmatmul.f32.gmra.mxu0 %v653
      %v768 = vpop.f32.mrf.mxu0
      %v769 = vadd.f32 0.0, %v768
      %770 = vdwg.mxu0
      %vm771 = vcmask 15360
      %772 = vst.msk [vmem:[#allocation2] sm:$0xff] %vm771, 0.0
      %773 = vst.msk [vmem:[#allocation2 + $0x8] sm:$0xff] %vm771, 0.0
      %vm774 = vcmask 8192
      %775 = vst.msk [vmem:[#allocation2 + $0x10] sm:$0x1] %vm774, 0.0
      %776 = vst.msk [vmem:[#allocation2 + $0x111] sm:$0xff] %vm771, 0.0
      %777 = vst.msk [vmem:[#allocation2 + $0x119] sm:$0xff] %vm771, 0.0
      %778 = vst.msk [vmem:[#allocation2 + $0x121] sm:$0x1] %vm774, 0.0
      %779 = vst.msk [vmem:[#allocation2 + $0x11] sm:$0xff] %vm771, %v431
      %780 = vst.msk [vmem:[#allocation2 + $0x19] sm:$0xff] %vm771, %v434
      %781 = vst.msk [vmem:[#allocation2 + $0x21] sm:$0xff] %vm771, %v437
      %782 = vst.msk [vmem:[#allocation2 + $0x29] sm:$0xff] %vm771, %v440
      %783 = vst.msk [vmem:[#allocation2 + $0x31] sm:$0xff] %vm771, %v443
      %784 = vst.msk [vmem:[#allocation2 + $0x39] sm:$0xff] %vm771, %v446
      %785 = vst.msk [vmem:[#allocation2 + $0x41] sm:$0xff] %vm771, %v449
      %786 = vst.msk [vmem:[#allocation2 + $0x49] sm:$0xff] %vm771, %v452
      %787 = vst.msk [vmem:[#allocation2 + $0x51] sm:$0xff] %vm771, %v455
      %788 = vst.msk [vmem:[#allocation2 + $0x59] sm:$0xff] %vm771, %v458
      %789 = vst.msk [vmem:[#allocation2 + $0x61] sm:$0xff] %vm771, %v461
      %790 = vst.msk [vmem:[#allocation2 + $0x69] sm:$0xff] %vm771, %v464
      %791 = vst.msk [vmem:[#allocation2 + $0x71] sm:$0xff] %vm771, %v467
      %792 = vst.msk [vmem:[#allocation2 + $0x79] sm:$0xff] %vm771, %v470
      %793 = vst.msk [vmem:[#allocation2 + $0x81] sm:$0xff] %vm771, %v473
      %794 = vst.msk [vmem:[#allocation2 + $0x89] sm:$0xff] %vm771, %v476
      %795 = vst.msk [vmem:[#allocation2 + $0x91] sm:$0xff] %vm771, %v479
      %796 = vst.msk [vmem:[#allocation2 + $0x99] sm:$0xff] %vm771, %v482
      %797 = vst.msk [vmem:[#allocation2 + $0xa1] sm:$0xff] %vm771, %v485
      %798 = vst.msk [vmem:[#allocation2 + $0xa9] sm:$0xff] %vm771, %v488
      %799 = vst.msk [vmem:[#allocation2 + $0xb1] sm:$0xff] %vm771, %v491
      %800 = vst.msk [vmem:[#allocation2 + $0xb9] sm:$0xff] %vm771, %v494
      %801 = vst.msk [vmem:[#allocation2 + $0xc1] sm:$0xff] %vm771, %v497
      %802 = vst.msk [vmem:[#allocation2 + $0xc9] sm:$0xff] %vm771, %v500
      %803 = vst.msk [vmem:[#allocation2 + $0xd1] sm:$0xff] %vm771, %v503
      %804 = vst.msk [vmem:[#allocation2 + $0xd9] sm:$0xff] %vm771, %v506
      %805 = vst.msk [vmem:[#allocation2 + $0xe1] sm:$0xff] %vm771, %v509
      %806 = vst.msk [vmem:[#allocation2 + $0xe9] sm:$0xff] %vm771, %v512
      %807 = vst.msk [vmem:[#allocation2 + $0xf1] sm:$0xff] %vm771, %v515
      %808 = vst.msk [vmem:[#allocation2 + $0xf9] sm:$0xff] %vm771, %v518
      %809 = vst.msk [vmem:[#allocation2 + $0x101] sm:$0xff] %vm771, %v521
      %810 = vst.msk [vmem:[#allocation2 + $0x109] sm:$0xff] %vm771, %v524
      %v811 = vld [vmem:[%s6] sm:$0xff]
      %v812 = vld [vmem:[%s6 + $0x8] sm:$0xff]
      %v813 = vld [vmem:[%s6 + $0x10] sm:$0xff]
      %v814 = vld [vmem:[%s6 + $0x18] sm:$0xff]
      %v815 = vld [vmem:[%s6 + $0x20] sm:$0xff]
      %v816 = vld [vmem:[%s6 + $0x28] sm:$0xff]
      %v817 = vld [vmem:[%s6 + $0x30] sm:$0xff]
      %v818 = vld [vmem:[%s6 + $0x38] sm:$0xff]
      %v819 = vld [vmem:[%s6 + $0x40] sm:$0xff]
      %v820 = vld [vmem:[%s6 + $0x48] sm:$0xff]
      %v821 = vld [vmem:[%s6 + $0x50] sm:$0xff]
      %v822 = vld [vmem:[%s6 + $0x58] sm:$0xff]
      %v823 = vld [vmem:[%s6 + $0x60] sm:$0xff]
      %v824 = vld [vmem:[%s6 + $0x68] sm:$0xff]
      %v825 = vld [vmem:[%s6 + $0x70] sm:$0xff]
      %v826 = vld [vmem:[%s6 + $0x78] sm:$0xff]
      %v827 = vld [vmem:[%s6 + $0x80] sm:$0xff]
      %v828 = vld [vmem:[%s6 + $0x88] sm:$0xff]
      %v829 = vld [vmem:[%s6 + $0x90] sm:$0xff]
      %v830 = vld [vmem:[%s6 + $0x98] sm:$0xff]
      %v831 = vld [vmem:[%s6 + $0xa0] sm:$0xff]
      %v832 = vld [vmem:[%s6 + $0xa8] sm:$0xff]
      %v833 = vld [vmem:[%s6 + $0xb0] sm:$0xff]
      %v834 = vld [vmem:[%s6 + $0xb8] sm:$0xff]
      %v835 = vld [vmem:[%s6 + $0xc0] sm:$0xff]
      %v836 = vld [vmem:[%s6 + $0xc8] sm:$0xff]
      %v837 = vld [vmem:[%s6 + $0xd0] sm:$0xff]
      %v838 = vld [vmem:[%s6 + $0xd8] sm:$0xff]
      %v839 = vld [vmem:[%s6 + $0xe0] sm:$0xff]
      %v840 = vld [vmem:[%s6 + $0xe8] sm:$0xff]
      %v841 = vld [vmem:[%s6 + $0xf0] sm:$0xff]
      %v842 = vld [vmem:[%s6 + $0xf8] sm:$0xff]
      %v843 = vld [vmem:[#allocation2] sm:$0xff]
      %v844 = vld [vmem:[#allocation2 + $0x8] sm:$0xff]
      %v845 = vld [vmem:[#allocation2 + $0x10] sm:$0xff]
      %v846 = vld [vmem:[#allocation2 + $0x18] sm:$0xff]
      %v847 = vld [vmem:[#allocation2 + $0x20] sm:$0xff]
      %v848 = vld [vmem:[#allocation2 + $0x28] sm:$0xff]
      %v849 = vld [vmem:[#allocation2 + $0x30] sm:$0xff]
      %v850 = vld [vmem:[#allocation2 + $0x38] sm:$0xff]
      %v851 = vld [vmem:[#allocation2 + $0x40] sm:$0xff]
      %v852 = vld [vmem:[#allocation2 + $0x48] sm:$0xff]
      %v853 = vld [vmem:[#allocation2 + $0x50] sm:$0xff]
      %v854 = vld [vmem:[#allocation2 + $0x58] sm:$0xff]
      %v855 = vld [vmem:[#allocation2 + $0x60] sm:$0xff]
      %v856 = vld [vmem:[#allocation2 + $0x68] sm:$0xff]
      %v857 = vld [vmem:[#allocation2 + $0x70] sm:$0xff]
      %v858 = vld [vmem:[#allocation2 + $0x78] sm:$0xff]
      %v859 = vld [vmem:[#allocation2 + $0x80] sm:$0xff]
      %v860 = vld [vmem:[#allocation2 + $0x88] sm:$0xff]
      %v861 = vld [vmem:[#allocation2 + $0x90] sm:$0xff]
      %v862 = vld [vmem:[#allocation2 + $0x98] sm:$0xff]
      %v863 = vld [vmem:[#allocation2 + $0xa0] sm:$0xff]
      %v864 = vld [vmem:[#allocation2 + $0xa8] sm:$0xff]
      %v865 = vld [vmem:[#allocation2 + $0xb0] sm:$0xff]
      %v866 = vld [vmem:[#allocation2 + $0xb8] sm:$0xff]
      %v867 = vld [vmem:[#allocation2 + $0xc0] sm:$0xff]
      %v868 = vld [vmem:[#allocation2 + $0xc8] sm:$0xff]
      %v869 = vld [vmem:[#allocation2 + $0xd0] sm:$0xff]
      %v870 = vld [vmem:[#allocation2 + $0xd8] sm:$0xff]
      %v871 = vld [vmem:[#allocation2 + $0xe0] sm:$0xff]
      %v872 = vld [vmem:[#allocation2 + $0xe8] sm:$0xff]
      %v873 = vld [vmem:[#allocation2 + $0xf0] sm:$0xff]
      %v874 = vld [vmem:[#allocation2 + $0xf8] sm:$0xff]
      %876 = vset.pattern.permute.xlu0 0
      %877 = vperm.xlu0 %876, %v811
      %v878 = vpop.permute.xlu0 %877
      %881 = vset.pattern.permute.xlu0 0
      %882 = vperm.xlu0 %881, %v812
      %v883 = vpop.permute.xlu0 %882
      %886 = vset.pattern.permute.xlu0 0
      %887 = vperm.xlu0 %886, %v813
      %v888 = vpop.permute.xlu0 %887
      %891 = vset.pattern.permute.xlu0 0
      %892 = vperm.xlu0 %891, %v814
      %v893 = vpop.permute.xlu0 %892
      %896 = vset.pattern.permute.xlu0 0
      %897 = vperm.xlu0 %896, %v815
      %v898 = vpop.permute.xlu0 %897
      %901 = vset.pattern.permute.xlu0 0
      %902 = vperm.xlu0 %901, %v816
      %v903 = vpop.permute.xlu0 %902
      %906 = vset.pattern.permute.xlu0 0
      %907 = vperm.xlu0 %906, %v817
      %v908 = vpop.permute.xlu0 %907
      %911 = vset.pattern.permute.xlu0 0
      %912 = vperm.xlu0 %911, %v818
      %v913 = vpop.permute.xlu0 %912
      %916 = vset.pattern.permute.xlu0 0
      %917 = vperm.xlu0 %916, %v819
      %v918 = vpop.permute.xlu0 %917
      %921 = vset.pattern.permute.xlu0 0
      %922 = vperm.xlu0 %921, %v820
      %v923 = vpop.permute.xlu0 %922
      %926 = vset.pattern.permute.xlu0 0
      %927 = vperm.xlu0 %926, %v821
      %v928 = vpop.permute.xlu0 %927
      %931 = vset.pattern.permute.xlu0 0
      %932 = vperm.xlu0 %931, %v822
      %v933 = vpop.permute.xlu0 %932
      %936 = vset.pattern.permute.xlu0 0
      %937 = vperm.xlu0 %936, %v823
      %v938 = vpop.permute.xlu0 %937
      %941 = vset.pattern.permute.xlu0 0
      %942 = vperm.xlu0 %941, %v824
      %v943 = vpop.permute.xlu0 %942
      %946 = vset.pattern.permute.xlu0 0
      %947 = vperm.xlu0 %946, %v825
      %v948 = vpop.permute.xlu0 %947
      %951 = vset.pattern.permute.xlu0 0
      %952 = vperm.xlu0 %951, %v826
      %v953 = vpop.permute.xlu0 %952
      %956 = vset.pattern.permute.xlu0 0
      %957 = vperm.xlu0 %956, %v827
      %v958 = vpop.permute.xlu0 %957
      %961 = vset.pattern.permute.xlu0 0
      %962 = vperm.xlu0 %961, %v828
      %v963 = vpop.permute.xlu0 %962
      %966 = vset.pattern.permute.xlu0 0
      %967 = vperm.xlu0 %966, %v829
      %v968 = vpop.permute.xlu0 %967
      %971 = vset.pattern.permute.xlu0 0
      %972 = vperm.xlu0 %971, %v830
      %v973 = vpop.permute.xlu0 %972
      %976 = vset.pattern.permute.xlu0 0
      %977 = vperm.xlu0 %976, %v831
      %v978 = vpop.permute.xlu0 %977
      %981 = vset.pattern.permute.xlu0 0
      %982 = vperm.xlu0 %981, %v832
      %v983 = vpop.permute.xlu0 %982
      %986 = vset.pattern.permute.xlu0 0
      %987 = vperm.xlu0 %986, %v833
      %v988 = vpop.permute.xlu0 %987
      %991 = vset.pattern.permute.xlu0 0
      %992 = vperm.xlu0 %991, %v834
      %v993 = vpop.permute.xlu0 %992
      %996 = vset.pattern.permute.xlu0 0
      %997 = vperm.xlu0 %996, %v835
      %v998 = vpop.permute.xlu0 %997
      %1001 = vset.pattern.permute.xlu0 0
      %1002 = vperm.xlu0 %1001, %v836
      %v1003 = vpop.permute.xlu0 %1002
      %1006 = vset.pattern.permute.xlu0 0
      %1007 = vperm.xlu0 %1006, %v837
      %v1008 = vpop.permute.xlu0 %1007
      %1011 = vset.pattern.permute.xlu0 0
      %1012 = vperm.xlu0 %1011, %v838
      %v1013 = vpop.permute.xlu0 %1012
      %1016 = vset.pattern.permute.xlu0 0
      %1017 = vperm.xlu0 %1016, %v839
      %v1018 = vpop.permute.xlu0 %1017
      %1021 = vset.pattern.permute.xlu0 0
      %1022 = vperm.xlu0 %1021, %v840
      %v1023 = vpop.permute.xlu0 %1022
      %1026 = vset.pattern.permute.xlu0 0
      %1027 = vperm.xlu0 %1026, %v841
      %v1028 = vpop.permute.xlu0 %1027
      %1031 = vset.pattern.permute.xlu0 0
      %1032 = vperm.xlu0 %1031, %v842
      %v1033 = vpop.permute.xlu0 %1032
      %v1035 = vmul.f32 %v843, %v878
      %v1036 = vmul.f32 %v844, %v883
      %v1037 = vmul.f32 %v845, %v888
      %v1038 = vmul.f32 %v846, %v893
      %v1039 = vmul.f32 %v847, %v898
      %v1040 = vmul.f32 %v848, %v903
      %v1041 = vmul.f32 %v849, %v908
      %v1042 = vmul.f32 %v850, %v913
      %v1043 = vmul.f32 %v851, %v918
      %v1044 = vmul.f32 %v852, %v923
      %v1045 = vmul.f32 %v853, %v928
      %v1046 = vmul.f32 %v854, %v933
      %v1047 = vmul.f32 %v855, %v938
      %v1048 = vmul.f32 %v856, %v943
      %v1049 = vmul.f32 %v857, %v948
      %v1050 = vmul.f32 %v858, %v953
      %v1051 = vmul.f32 %v859, %v958
      %v1052 = vmul.f32 %v860, %v963
      %v1053 = vmul.f32 %v861, %v968
      %v1054 = vmul.f32 %v862, %v973
      %v1055 = vmul.f32 %v863, %v978
      %v1056 = vmul.f32 %v864, %v983
      %v1057 = vmul.f32 %v865, %v988
      %v1058 = vmul.f32 %v866, %v993
      %v1059 = vmul.f32 %v867, %v998
      %v1060 = vmul.f32 %v868, %v1003
      %v1061 = vmul.f32 %v869, %v1008
      %v1062 = vmul.f32 %v870, %v1013
      %v1063 = vmul.f32 %v871, %v1018
      %v1064 = vmul.f32 %v872, %v1023
      %v1065 = vmul.f32 %v873, %v1028
      %v1066 = vmul.f32 %v874, %v1033
      %1067 = vst.msk [vmem:[#allocation3] sm:$0xff] %vm771, %v1035
      %1068 = vst.msk [vmem:[#allocation3 + $0x8] sm:$0xff] %vm771, %v1036
      %1069 = vst.msk [vmem:[#allocation3 + $0x10] sm:$0xff] %vm771, %v1037
      %1070 = vst.msk [vmem:[#allocation3 + $0x18] sm:$0xff] %vm771, %v1038
      %1071 = vst.msk [vmem:[#allocation3 + $0x20] sm:$0xff] %vm771, %v1039
      %1072 = vst.msk [vmem:[#allocation3 + $0x28] sm:$0xff] %vm771, %v1040
      %1073 = vst.msk [vmem:[#allocation3 + $0x30] sm:$0xff] %vm771, %v1041
      %1074 = vst.msk [vmem:[#allocation3 + $0x38] sm:$0xff] %vm771, %v1042
      %1075 = vst.msk [vmem:[#allocation3 + $0x40] sm:$0xff] %vm771, %v1043
      %1076 = vst.msk [vmem:[#allocation3 + $0x48] sm:$0xff] %vm771, %v1044
      %1077 = vst.msk [vmem:[#allocation3 + $0x50] sm:$0xff] %vm771, %v1045
      %1078 = vst.msk [vmem:[#allocation3 + $0x58] sm:$0xff] %vm771, %v1046
      %1079 = vst.msk [vmem:[#allocation3 + $0x60] sm:$0xff] %vm771, %v1047
      %1080 = vst.msk [vmem:[#allocation3 + $0x68] sm:$0xff] %vm771, %v1048
      %1081 = vst.msk [vmem:[#allocation3 + $0x70] sm:$0xff] %vm771, %v1049
      %1082 = vst.msk [vmem:[#allocation3 + $0x78] sm:$0xff] %vm771, %v1050
      %1083 = vst.msk [vmem:[#allocation3 + $0x80] sm:$0xff] %vm771, %v1051
      %1084 = vst.msk [vmem:[#allocation3 + $0x88] sm:$0xff] %vm771, %v1052
      %1085 = vst.msk [vmem:[#allocation3 + $0x90] sm:$0xff] %vm771, %v1053
      %1086 = vst.msk [vmem:[#allocation3 + $0x98] sm:$0xff] %vm771, %v1054
      %1087 = vst.msk [vmem:[#allocation3 + $0xa0] sm:$0xff] %vm771, %v1055
      %1088 = vst.msk [vmem:[#allocation3 + $0xa8] sm:$0xff] %vm771, %v1056
      %1089 = vst.msk [vmem:[#allocation3 + $0xb0] sm:$0xff] %vm771, %v1057
      %1090 = vst.msk [vmem:[#allocation3 + $0xb8] sm:$0xff] %vm771, %v1058
      %1091 = vst.msk [vmem:[#allocation3 + $0xc0] sm:$0xff] %vm771, %v1059
      %1092 = vst.msk [vmem:[#allocation3 + $0xc8] sm:$0xff] %vm771, %v1060
      %1093 = vst.msk [vmem:[#allocation3 + $0xd0] sm:$0xff] %vm771, %v1061
      %1094 = vst.msk [vmem:[#allocation3 + $0xd8] sm:$0xff] %vm771, %v1062
      %1095 = vst.msk [vmem:[#allocation3 + $0xe0] sm:$0xff] %vm771, %v1063
      %1096 = vst.msk [vmem:[#allocation3 + $0xe8] sm:$0xff] %vm771, %v1064
      %1097 = vst.msk [vmem:[#allocation3 + $0xf0] sm:$0xff] %vm771, %v1065
      %1098 = vst.msk [vmem:[#allocation3 + $0xf8] sm:$0xff] %vm771, %v1066
      %v1099 = vld [vmem:[#allocation2 + $0x1] sm:$0xff]
      %v1100 = vld [vmem:[#allocation2 + $0x9] sm:$0xff]
      %v1101 = vld [vmem:[#allocation2 + $0x11] sm:$0xff]
      %v1102 = vld [vmem:[#allocation2 + $0x19] sm:$0xff]
      %v1103 = vld [vmem:[#allocation2 + $0x21] sm:$0xff]
      %v1104 = vld [vmem:[#allocation2 + $0x29] sm:$0xff]
      %v1105 = vld [vmem:[#allocation2 + $0x31] sm:$0xff]
      %v1106 = vld [vmem:[#allocation2 + $0x39] sm:$0xff]
      %v1107 = vld [vmem:[#allocation2 + $0x41] sm:$0xff]
      %v1108 = vld [vmem:[#allocation2 + $0x49] sm:$0xff]
      %v1109 = vld [vmem:[#allocation2 + $0x51] sm:$0xff]
      %v1110 = vld [vmem:[#allocation2 + $0x59] sm:$0xff]
      %v1111 = vld [vmem:[#allocation2 + $0x61] sm:$0xff]
      %v1112 = vld [vmem:[#allocation2 + $0x69] sm:$0xff]
      %v1113 = vld [vmem:[#allocation2 + $0x71] sm:$0xff]
      %v1114 = vld [vmem:[#allocation2 + $0x79] sm:$0xff]
      %v1115 = vld [vmem:[#allocation2 + $0x81] sm:$0xff]
      %v1116 = vld [vmem:[#allocation2 + $0x89] sm:$0xff]
      %v1117 = vld [vmem:[#allocation2 + $0x91] sm:$0xff]
      %v1118 = vld [vmem:[#allocation2 + $0x99] sm:$0xff]
      %v1119 = vld [vmem:[#allocation2 + $0xa1] sm:$0xff]
      %v1120 = vld [vmem:[#allocation2 + $0xa9] sm:$0xff]
      %v1121 = vld [vmem:[#allocation2 + $0xb1] sm:$0xff]
      %v1122 = vld [vmem:[#allocation2 + $0xb9] sm:$0xff]
      %v1123 = vld [vmem:[#allocation2 + $0xc1] sm:$0xff]
      %v1124 = vld [vmem:[#allocation2 + $0xc9] sm:$0xff]
      %v1125 = vld [vmem:[#allocation2 + $0xd1] sm:$0xff]
      %v1126 = vld [vmem:[#allocation2 + $0xd9] sm:$0xff]
      %v1127 = vld [vmem:[#allocation2 + $0xe1] sm:$0xff]
      %v1128 = vld [vmem:[#allocation2 + $0xe9] sm:$0xff]
      %v1129 = vld [vmem:[#allocation2 + $0xf1] sm:$0xff]
      %v1130 = vld [vmem:[#allocation2 + $0xf9] sm:$0xff]
      %1163 = vrot.lane.b32.xlu0 %v1099, 2
      %v1164 = vpop.permute.xlu0 %1163
      %1165 = vrot.lane.b32.xlu0 %v1100, 2
      %v1166 = vpop.permute.xlu0 %1165
      %1167 = vrot.lane.b32.xlu0 %v1101, 2
      %v1168 = vpop.permute.xlu0 %1167
      %1169 = vrot.lane.b32.xlu0 %v1102, 2
      %v1170 = vpop.permute.xlu0 %1169
      %1171 = vrot.lane.b32.xlu0 %v1103, 2
      %v1172 = vpop.permute.xlu0 %1171
      %1173 = vrot.lane.b32.xlu0 %v1104, 2
      %v1174 = vpop.permute.xlu0 %1173
      %1175 = vrot.lane.b32.xlu0 %v1105, 2
      %v1176 = vpop.permute.xlu0 %1175
      %1177 = vrot.lane.b32.xlu0 %v1106, 2
      %v1178 = vpop.permute.xlu0 %1177
      %1179 = vrot.lane.b32.xlu0 %v1107, 2
      %v1180 = vpop.permute.xlu0 %1179
      %1181 = vrot.lane.b32.xlu0 %v1108, 2
      %v1182 = vpop.permute.xlu0 %1181
      %1183 = vrot.lane.b32.xlu0 %v1109, 2
      %v1184 = vpop.permute.xlu0 %1183
      %1185 = vrot.lane.b32.xlu0 %v1110, 2
      %v1186 = vpop.permute.xlu0 %1185
      %1187 = vrot.lane.b32.xlu0 %v1111, 2
      %v1188 = vpop.permute.xlu0 %1187
      %1189 = vrot.lane.b32.xlu0 %v1112, 2
      %v1190 = vpop.permute.xlu0 %1189
      %1191 = vrot.lane.b32.xlu0 %v1113, 2
      %v1192 = vpop.permute.xlu0 %1191
      %1193 = vrot.lane.b32.xlu0 %v1114, 2
      %v1194 = vpop.permute.xlu0 %1193
      %1195 = vrot.lane.b32.xlu0 %v1115, 2
      %v1196 = vpop.permute.xlu0 %1195
      %1197 = vrot.lane.b32.xlu0 %v1116, 2
      %v1198 = vpop.permute.xlu0 %1197
      %1199 = vrot.lane.b32.xlu0 %v1117, 2
      %v1200 = vpop.permute.xlu0 %1199
      %1201 = vrot.lane.b32.xlu0 %v1118, 2
      %v1202 = vpop.permute.xlu0 %1201
      %1203 = vrot.lane.b32.xlu0 %v1119, 2
      %v1204 = vpop.permute.xlu0 %1203
      %1205 = vrot.lane.b32.xlu0 %v1120, 2
      %v1206 = vpop.permute.xlu0 %1205
      %1207 = vrot.lane.b32.xlu0 %v1121, 2
      %v1208 = vpop.permute.xlu0 %1207
      %1209 = vrot.lane.b32.xlu0 %v1122, 2
      %v1210 = vpop.permute.xlu0 %1209
      %1211 = vrot.lane.b32.xlu0 %v1123, 2
      %v1212 = vpop.permute.xlu0 %1211
      %1213 = vrot.lane.b32.xlu0 %v1124, 2
      %v1214 = vpop.permute.xlu0 %1213
      %1215 = vrot.lane.b32.xlu0 %v1125, 2
      %v1216 = vpop.permute.xlu0 %1215
      %1217 = vrot.lane.b32.xlu0 %v1126, 2
      %v1218 = vpop.permute.xlu0 %1217
      %1219 = vrot.lane.b32.xlu0 %v1127, 2
      %v1220 = vpop.permute.xlu0 %1219
      %1221 = vrot.lane.b32.xlu0 %v1128, 2
      %v1222 = vpop.permute.xlu0 %1221
      %1223 = vrot.lane.b32.xlu0 %v1129, 2
      %v1224 = vpop.permute.xlu0 %1223
      %1225 = vrot.lane.b32.xlu0 %v1130, 2
      %v1226 = vpop.permute.xlu0 %1225
      %vm1259 = vcmask 31760
      %1260 = vst.msk [vmem:[#allocation3] sm:$0xff] %vm1259, %v1164
      %1261 = vst.msk [vmem:[#allocation3 + $0x8] sm:$0xff] %vm1259, %v1166
      %1262 = vst.msk [vmem:[#allocation3 + $0x10] sm:$0xff] %vm1259, %v1168
      %1263 = vst.msk [vmem:[#allocation3 + $0x18] sm:$0xff] %vm1259, %v1170
      %1264 = vst.msk [vmem:[#allocation3 + $0x20] sm:$0xff] %vm1259, %v1172
      %1265 = vst.msk [vmem:[#allocation3 + $0x28] sm:$0xff] %vm1259, %v1174
      %1266 = vst.msk [vmem:[#allocation3 + $0x30] sm:$0xff] %vm1259, %v1176
      %1267 = vst.msk [vmem:[#allocation3 + $0x38] sm:$0xff] %vm1259, %v1178
      %1268 = vst.msk [vmem:[#allocation3 + $0x40] sm:$0xff] %vm1259, %v1180
      %1269 = vst.msk [vmem:[#allocation3 + $0x48] sm:$0xff] %vm1259, %v1182
      %1270 = vst.msk [vmem:[#allocation3 + $0x50] sm:$0xff] %vm1259, %v1184
      %1271 = vst.msk [vmem:[#allocation3 + $0x58] sm:$0xff] %vm1259, %v1186
      %1272 = vst.msk [vmem:[#allocation3 + $0x60] sm:$0xff] %vm1259, %v1188
      %1273 = vst.msk [vmem:[#allocation3 + $0x68] sm:$0xff] %vm1259, %v1190
      %1274 = vst.msk [vmem:[#allocation3 + $0x70] sm:$0xff] %vm1259, %v1192
      %1275 = vst.msk [vmem:[#allocation3 + $0x78] sm:$0xff] %vm1259, %v1194
      %1276 = vst.msk [vmem:[#allocation3 + $0x80] sm:$0xff] %vm1259, %v1196
      %1277 = vst.msk [vmem:[#allocation3 + $0x88] sm:$0xff] %vm1259, %v1198
      %1278 = vst.msk [vmem:[#allocation3 + $0x90] sm:$0xff] %vm1259, %v1200
      %1279 = vst.msk [vmem:[#allocation3 + $0x98] sm:$0xff] %vm1259, %v1202
      %1280 = vst.msk [vmem:[#allocation3 + $0xa0] sm:$0xff] %vm1259, %v1204
      %1281 = vst.msk [vmem:[#allocation3 + $0xa8] sm:$0xff] %vm1259, %v1206
      %1282 = vst.msk [vmem:[#allocation3 + $0xb0] sm:$0xff] %vm1259, %v1208
      %1283 = vst.msk [vmem:[#allocation3 + $0xb8] sm:$0xff] %vm1259, %v1210
      %1284 = vst.msk [vmem:[#allocation3 + $0xc0] sm:$0xff] %vm1259, %v1212
      %1285 = vst.msk [vmem:[#allocation3 + $0xc8] sm:$0xff] %vm1259, %v1214
      %1286 = vst.msk [vmem:[#allocation3 + $0xd0] sm:$0xff] %vm1259, %v1216
      %1287 = vst.msk [vmem:[#allocation3 + $0xd8] sm:$0xff] %vm1259, %v1218
      %1288 = vst.msk [vmem:[#allocation3 + $0xe0] sm:$0xff] %vm1259, %v1220
      %1289 = vst.msk [vmem:[#allocation3 + $0xe8] sm:$0xff] %vm1259, %v1222
      %1290 = vst.msk [vmem:[#allocation3 + $0xf0] sm:$0xff] %vm1259, %v1224
      %1291 = vst.msk [vmem:[#allocation3 + $0xf8] sm:$0xff] %vm1259, %v1226
      %v1292 = vld [vmem:[#allocation2 + $0x2] sm:$0xff]
      %v1293 = vld [vmem:[#allocation2 + $0xa] sm:$0xff]
      %v1294 = vld [vmem:[#allocation2 + $0x12] sm:$0xff]
      %v1295 = vld [vmem:[#allocation2 + $0x1a] sm:$0xff]
      %v1296 = vld [vmem:[#allocation2 + $0x22] sm:$0xff]
      %v1297 = vld [vmem:[#allocation2 + $0x2a] sm:$0xff]
      %v1298 = vld [vmem:[#allocation2 + $0x32] sm:$0xff]
      %v1299 = vld [vmem:[#allocation2 + $0x3a] sm:$0xff]
      %v1300 = vld [vmem:[#allocation2 + $0x42] sm:$0xff]
      %v1301 = vld [vmem:[#allocation2 + $0x4a] sm:$0xff]
      %v1302 = vld [vmem:[#allocation2 + $0x52] sm:$0xff]
      %v1303 = vld [vmem:[#allocation2 + $0x5a] sm:$0xff]
      %v1304 = vld [vmem:[#allocation2 + $0x62] sm:$0xff]
      %v1305 = vld [vmem:[#allocation2 + $0x6a] sm:$0xff]
      %v1306 = vld [vmem:[#allocation2 + $0x72] sm:$0xff]
      %v1307 = vld [vmem:[#allocation2 + $0x7a] sm:$0xff]
      %v1308 = vld [vmem:[#allocation2 + $0x82] sm:$0xff]
      %v1309 = vld [vmem:[#allocation2 + $0x8a] sm:$0xff]
      %v1310 = vld [vmem:[#allocation2 + $0x92] sm:$0xff]
      %v1311 = vld [vmem:[#allocation2 + $0x9a] sm:$0xff]
      %v1312 = vld [vmem:[#allocation2 + $0xa2] sm:$0xff]
      %v1313 = vld [vmem:[#allocation2 + $0xaa] sm:$0xff]
      %v1314 = vld [vmem:[#allocation2 + $0xb2] sm:$0xff]
      %v1315 = vld [vmem:[#allocation2 + $0xba] sm:$0xff]
      %v1316 = vld [vmem:[#allocation2 + $0xc2] sm:$0xff]
      %v1317 = vld [vmem:[#allocation2 + $0xca] sm:$0xff]
      %v1318 = vld [vmem:[#allocation2 + $0xd2] sm:$0xff]
      %v1319 = vld [vmem:[#allocation2 + $0xda] sm:$0xff]
      %v1320 = vld [vmem:[#allocation2 + $0xe2] sm:$0xff]
      %v1321 = vld [vmem:[#allocation2 + $0xea] sm:$0xff]
      %v1322 = vld [vmem:[#allocation2 + $0xf2] sm:$0xff]
      %v1323 = vld [vmem:[#allocation2 + $0xfa] sm:$0xff]
      %1324 = vset.pattern.permute.xlu0 1
      %1325 = vperm.xlu0 %1324, %v811
      %v1326 = vpop.permute.xlu0 %1325
      %1328 = vset.pattern.permute.xlu0 1
      %1329 = vperm.xlu0 %1328, %v812
      %v1330 = vpop.permute.xlu0 %1329
      %1332 = vset.pattern.permute.xlu0 1
      %1333 = vperm.xlu0 %1332, %v813
      %v1334 = vpop.permute.xlu0 %1333
      %1336 = vset.pattern.permute.xlu0 1
      %1337 = vperm.xlu0 %1336, %v814
      %v1338 = vpop.permute.xlu0 %1337
      %1340 = vset.pattern.permute.xlu0 1
      %1341 = vperm.xlu0 %1340, %v815
      %v1342 = vpop.permute.xlu0 %1341
      %1344 = vset.pattern.permute.xlu0 1
      %1345 = vperm.xlu0 %1344, %v816
      %v1346 = vpop.permute.xlu0 %1345
      %1348 = vset.pattern.permute.xlu0 1
      %1349 = vperm.xlu0 %1348, %v817
      %v1350 = vpop.permute.xlu0 %1349
      %1352 = vset.pattern.permute.xlu0 1
      %1353 = vperm.xlu0 %1352, %v818
      %v1354 = vpop.permute.xlu0 %1353
      %1356 = vset.pattern.permute.xlu0 1
      %1357 = vperm.xlu0 %1356, %v819
      %v1358 = vpop.permute.xlu0 %1357
      %1360 = vset.pattern.permute.xlu0 1
      %1361 = vperm.xlu0 %1360, %v820
      %v1362 = vpop.permute.xlu0 %1361
      %1364 = vset.pattern.permute.xlu0 1
      %1365 = vperm.xlu0 %1364, %v821
      %v1366 = vpop.permute.xlu0 %1365
      %1368 = vset.pattern.permute.xlu0 1
      %1369 = vperm.xlu0 %1368, %v822
      %v1370 = vpop.permute.xlu0 %1369
      %1372 = vset.pattern.permute.xlu0 1
      %1373 = vperm.xlu0 %1372, %v823
      %v1374 = vpop.permute.xlu0 %1373
      %1376 = vset.pattern.permute.xlu0 1
      %1377 = vperm.xlu0 %1376, %v824
      %v1378 = vpop.permute.xlu0 %1377
      %1380 = vset.pattern.permute.xlu0 1
      %1381 = vperm.xlu0 %1380, %v825
      %v1382 = vpop.permute.xlu0 %1381
      %1384 = vset.pattern.permute.xlu0 1
      %1385 = vperm.xlu0 %1384, %v826
      %v1386 = vpop.permute.xlu0 %1385
      %1388 = vset.pattern.permute.xlu0 1
      %1389 = vperm.xlu0 %1388, %v827
      %v1390 = vpop.permute.xlu0 %1389
      %1392 = vset.pattern.permute.xlu0 1
      %1393 = vperm.xlu0 %1392, %v828
      %v1394 = vpop.permute.xlu0 %1393
      %1396 = vset.pattern.permute.xlu0 1
      %1397 = vperm.xlu0 %1396, %v829
      %v1398 = vpop.permute.xlu0 %1397
      %1400 = vset.pattern.permute.xlu0 1
      %1401 = vperm.xlu0 %1400, %v830
      %v1402 = vpop.permute.xlu0 %1401
      %1404 = vset.pattern.permute.xlu0 1
      %1405 = vperm.xlu0 %1404, %v831
      %v1406 = vpop.permute.xlu0 %1405
      %1408 = vset.pattern.permute.xlu0 1
      %1409 = vperm.xlu0 %1408, %v832
      %v1410 = vpop.permute.xlu0 %1409
      %1412 = vset.pattern.permute.xlu0 1
      %1413 = vperm.xlu0 %1412, %v833
      %v1414 = vpop.permute.xlu0 %1413
      %1416 = vset.pattern.permute.xlu0 1
      %1417 = vperm.xlu0 %1416, %v834
      %v1418 = vpop.permute.xlu0 %1417
      %1420 = vset.pattern.permute.xlu0 1
      %1421 = vperm.xlu0 %1420, %v835
      %v1422 = vpop.permute.xlu0 %1421
      %1424 = vset.pattern.permute.xlu0 1
      %1425 = vperm.xlu0 %1424, %v836
      %v1426 = vpop.permute.xlu0 %1425
      %1428 = vset.pattern.permute.xlu0 1
      %1429 = vperm.xlu0 %1428, %v837
      %v1430 = vpop.permute.xlu0 %1429
      %1432 = vset.pattern.permute.xlu0 1
      %1433 = vperm.xlu0 %1432, %v838
      %v1434 = vpop.permute.xlu0 %1433
      %1436 = vset.pattern.permute.xlu0 1
      %1437 = vperm.xlu0 %1436, %v839
      %v1438 = vpop.permute.xlu0 %1437
      %1440 = vset.pattern.permute.xlu0 1
      %1441 = vperm.xlu0 %1440, %v840
      %v1442 = vpop.permute.xlu0 %1441
      %1444 = vset.pattern.permute.xlu0 1
      %1445 = vperm.xlu0 %1444, %v841
      %v1446 = vpop.permute.xlu0 %1445
      %1448 = vset.pattern.permute.xlu0 1
      %1449 = vperm.xlu0 %1448, %v842
      %v1450 = vpop.permute.xlu0 %1449
      %v1452 = vmul.f32 %v1292, %v1326
      %v1453 = vmul.f32 %v1293, %v1330
      %v1454 = vmul.f32 %v1294, %v1334
      %v1455 = vmul.f32 %v1295, %v1338
      %v1456 = vmul.f32 %v1296, %v1342
      %v1457 = vmul.f32 %v1297, %v1346
      %v1458 = vmul.f32 %v1298, %v1350
      %v1459 = vmul.f32 %v1299, %v1354
      %v1460 = vmul.f32 %v1300, %v1358
      %v1461 = vmul.f32 %v1301, %v1362
      %v1462 = vmul.f32 %v1302, %v1366
      %v1463 = vmul.f32 %v1303, %v1370
      %v1464 = vmul.f32 %v1304, %v1374
      %v1465 = vmul.f32 %v1305, %v1378
      %v1466 = vmul.f32 %v1306, %v1382
      %v1467 = vmul.f32 %v1307, %v1386
      %v1468 = vmul.f32 %v1308, %v1390
      %v1469 = vmul.f32 %v1309, %v1394
      %v1470 = vmul.f32 %v1310, %v1398
      %v1471 = vmul.f32 %v1311, %v1402
      %v1472 = vmul.f32 %v1312, %v1406
      %v1473 = vmul.f32 %v1313, %v1410
      %v1474 = vmul.f32 %v1314, %v1414
      %v1475 = vmul.f32 %v1315, %v1418
      %v1476 = vmul.f32 %v1316, %v1422
      %v1477 = vmul.f32 %v1317, %v1426
      %v1478 = vmul.f32 %v1318, %v1430
      %v1479 = vmul.f32 %v1319, %v1434
      %v1480 = vmul.f32 %v1320, %v1438
      %v1481 = vmul.f32 %v1321, %v1442
      %v1482 = vmul.f32 %v1322, %v1446
      %v1483 = vmul.f32 %v1323, %v1450
      %1516 = vrot.lane.b32.xlu0 %v1452, 4
      %v1517 = vpop.permute.xlu0 %1516
      %1518 = vrot.lane.b32.xlu0 %v1453, 4
      %v1519 = vpop.permute.xlu0 %1518
      %1520 = vrot.lane.b32.xlu0 %v1454, 4
      %v1521 = vpop.permute.xlu0 %1520
      %1522 = vrot.lane.b32.xlu0 %v1455, 4
      %v1523 = vpop.permute.xlu0 %1522
      %1524 = vrot.lane.b32.xlu0 %v1456, 4
      %v1525 = vpop.permute.xlu0 %1524
      %1526 = vrot.lane.b32.xlu0 %v1457, 4
      %v1527 = vpop.permute.xlu0 %1526
      %1528 = vrot.lane.b32.xlu0 %v1458, 4
      %v1529 = vpop.permute.xlu0 %1528
      %1530 = vrot.lane.b32.xlu0 %v1459, 4
      %v1531 = vpop.permute.xlu0 %1530
      %1532 = vrot.lane.b32.xlu0 %v1460, 4
      %v1533 = vpop.permute.xlu0 %1532
      %1534 = vrot.lane.b32.xlu0 %v1461, 4
      %v1535 = vpop.permute.xlu0 %1534
      %1536 = vrot.lane.b32.xlu0 %v1462, 4
      %v1537 = vpop.permute.xlu0 %1536
      %1538 = vrot.lane.b32.xlu0 %v1463, 4
      %v1539 = vpop.permute.xlu0 %1538
      %1540 = vrot.lane.b32.xlu0 %v1464, 4
      %v1541 = vpop.permute.xlu0 %1540
      %1542 = vrot.lane.b32.xlu0 %v1465, 4
      %v1543 = vpop.permute.xlu0 %1542
      %1544 = vrot.lane.b32.xlu0 %v1466, 4
      %v1545 = vpop.permute.xlu0 %1544
      %1546 = vrot.lane.b32.xlu0 %v1467, 4
      %v1547 = vpop.permute.xlu0 %1546
      %1548 = vrot.lane.b32.xlu0 %v1468, 4
      %v1549 = vpop.permute.xlu0 %1548
      %1550 = vrot.lane.b32.xlu0 %v1469, 4
      %v1551 = vpop.permute.xlu0 %1550
      %1552 = vrot.lane.b32.xlu0 %v1470, 4
      %v1553 = vpop.permute.xlu0 %1552
      %1554 = vrot.lane.b32.xlu0 %v1471, 4
      %v1555 = vpop.permute.xlu0 %1554
      %1556 = vrot.lane.b32.xlu0 %v1472, 4
      %v1557 = vpop.permute.xlu0 %1556
      %1558 = vrot.lane.b32.xlu0 %v1473, 4
      %v1559 = vpop.permute.xlu0 %1558
      %1560 = vrot.lane.b32.xlu0 %v1474, 4
      %v1561 = vpop.permute.xlu0 %1560
      %1562 = vrot.lane.b32.xlu0 %v1475, 4
      %v1563 = vpop.permute.xlu0 %1562
      %1564 = vrot.lane.b32.xlu0 %v1476, 4
      %v1565 = vpop.permute.xlu0 %1564
      %1566 = vrot.lane.b32.xlu0 %v1477, 4
      %v1567 = vpop.permute.xlu0 %1566
      %1568 = vrot.lane.b32.xlu0 %v1478, 4
      %v1569 = vpop.permute.xlu0 %1568
      %1570 = vrot.lane.b32.xlu0 %v1479, 4
      %v1571 = vpop.permute.xlu0 %1570
      %1572 = vrot.lane.b32.xlu0 %v1480, 4
      %v1573 = vpop.permute.xlu0 %1572
      %1574 = vrot.lane.b32.xlu0 %v1481, 4
      %v1575 = vpop.permute.xlu0 %1574
      %1576 = vrot.lane.b32.xlu0 %v1482, 4
      %v1577 = vpop.permute.xlu0 %1576
      %1578 = vrot.lane.b32.xlu0 %v1483, 4
      %v1579 = vpop.permute.xlu0 %1578
      %vm1612 = vcmask 48160
      %1613 = vst.msk [vmem:[#allocation3] sm:$0xff] %vm1612, %v1517
      %1614 = vst.msk [vmem:[#allocation3 + $0x8] sm:$0xff] %vm1612, %v1519
      %1615 = vst.msk [vmem:[#allocation3 + $0x10] sm:$0xff] %vm1612, %v1521
      %1616 = vst.msk [vmem:[#allocation3 + $0x18] sm:$0xff] %vm1612, %v1523
      %1617 = vst.msk [vmem:[#allocation3 + $0x20] sm:$0xff] %vm1612, %v1525
      %1618 = vst.msk [vmem:[#allocation3 + $0x28] sm:$0xff] %vm1612, %v1527
      %1619 = vst.msk [vmem:[#allocation3 + $0x30] sm:$0xff] %vm1612, %v1529
      %1620 = vst.msk [vmem:[#allocation3 + $0x38] sm:$0xff] %vm1612, %v1531
      %1621 = vst.msk [vmem:[#allocation3 + $0x40] sm:$0xff] %vm1612, %v1533
      %1622 = vst.msk [vmem:[#allocation3 + $0x48] sm:$0xff] %vm1612, %v1535
      %1623 = vst.msk [vmem:[#allocation3 + $0x50] sm:$0xff] %vm1612, %v1537
      %1624 = vst.msk [vmem:[#allocation3 + $0x58] sm:$0xff] %vm1612, %v1539
      %1625 = vst.msk [vmem:[#allocation3 + $0x60] sm:$0xff] %vm1612, %v1541
      %1626 = vst.msk [vmem:[#allocation3 + $0x68] sm:$0xff] %vm1612, %v1543
      %1627 = vst.msk [vmem:[#allocation3 + $0x70] sm:$0xff] %vm1612, %v1545
      %1628 = vst.msk [vmem:[#allocation3 + $0x78] sm:$0xff] %vm1612, %v1547
      %1629 = vst.msk [vmem:[#allocation3 + $0x80] sm:$0xff] %vm1612, %v1549
      %1630 = vst.msk [vmem:[#allocation3 + $0x88] sm:$0xff] %vm1612, %v1551
      %1631 = vst.msk [vmem:[#allocation3 + $0x90] sm:$0xff] %vm1612, %v1553
      %1632 = vst.msk [vmem:[#allocation3 + $0x98] sm:$0xff] %vm1612, %v1555
      %1633 = vst.msk [vmem:[#allocation3 + $0xa0] sm:$0xff] %vm1612, %v1557
      %1634 = vst.msk [vmem:[#allocation3 + $0xa8] sm:$0xff] %vm1612, %v1559
      %1635 = vst.msk [vmem:[#allocation3 + $0xb0] sm:$0xff] %vm1612, %v1561
      %1636 = vst.msk [vmem:[#allocation3 + $0xb8] sm:$0xff] %vm1612, %v1563
      %1637 = vst.msk [vmem:[#allocation3 + $0xc0] sm:$0xff] %vm1612, %v1565
      %1638 = vst.msk [vmem:[#allocation3 + $0xc8] sm:$0xff] %vm1612, %v1567
      %1639 = vst.msk [vmem:[#allocation3 + $0xd0] sm:$0xff] %vm1612, %v1569
      %1640 = vst.msk [vmem:[#allocation3 + $0xd8] sm:$0xff] %vm1612, %v1571
      %1641 = vst.msk [vmem:[#allocation3 + $0xe0] sm:$0xff] %vm1612, %v1573
      %1642 = vst.msk [vmem:[#allocation3 + $0xe8] sm:$0xff] %vm1612, %v1575
      %1643 = vst.msk [vmem:[#allocation3 + $0xf0] sm:$0xff] %vm1612, %v1577
      %1644 = vst.msk [vmem:[#allocation3 + $0xf8] sm:$0xff] %vm1612, %v1579
      %v1645 = vld [vmem:[#allocation2 + $0x10] sm:$0xff]
      %v1646 = vld [vmem:[#allocation2 + $0x18] sm:$0xff]
      %v1647 = vld [vmem:[#allocation2 + $0x20] sm:$0xff]
      %v1648 = vld [vmem:[#allocation2 + $0x28] sm:$0xff]
      %v1649 = vld [vmem:[#allocation2 + $0x30] sm:$0xff]
      %v1650 = vld [vmem:[#allocation2 + $0x38] sm:$0xff]
      %v1651 = vld [vmem:[#allocation2 + $0x40] sm:$0xff]
      %v1652 = vld [vmem:[#allocation2 + $0x48] sm:$0xff]
      %v1653 = vld [vmem:[#allocation2 + $0x50] sm:$0xff]
      %v1654 = vld [vmem:[#allocation2 + $0x58] sm:$0xff]
      %v1655 = vld [vmem:[#allocation2 + $0x60] sm:$0xff]
      %v1656 = vld [vmem:[#allocation2 + $0x68] sm:$0xff]
      %v1657 = vld [vmem:[#allocation2 + $0x70] sm:$0xff]
      %v1658 = vld [vmem:[#allocation2 + $0x78] sm:$0xff]
      %v1659 = vld [vmem:[#allocation2 + $0x80] sm:$0xff]
      %v1660 = vld [vmem:[#allocation2 + $0x88] sm:$0xff]
      %v1661 = vld [vmem:[#allocation2 + $0x90] sm:$0xff]
      %v1662 = vld [vmem:[#allocation2 + $0x98] sm:$0xff]
      %v1663 = vld [vmem:[#allocation2 + $0xa0] sm:$0xff]
      %v1664 = vld [vmem:[#allocation2 + $0xa8] sm:$0xff]
      %v1665 = vld [vmem:[#allocation2 + $0xb0] sm:$0xff]
      %v1666 = vld [vmem:[#allocation2 + $0xb8] sm:$0xff]
      %v1667 = vld [vmem:[#allocation2 + $0xc0] sm:$0xff]
      %v1668 = vld [vmem:[#allocation2 + $0xc8] sm:$0xff]
      %v1669 = vld [vmem:[#allocation2 + $0xd0] sm:$0xff]
      %v1670 = vld [vmem:[#allocation2 + $0xd8] sm:$0xff]
      %v1671 = vld [vmem:[#allocation2 + $0xe0] sm:$0xff]
      %v1672 = vld [vmem:[#allocation2 + $0xe8] sm:$0xff]
      %v1673 = vld [vmem:[#allocation2 + $0xf0] sm:$0xff]
      %v1674 = vld [vmem:[#allocation2 + $0xf8] sm:$0xff]
      %v1675 = vld [vmem:[#allocation2 + $0x100] sm:$0xff]
      %v1676 = vld [vmem:[#allocation2 + $0x108] sm:$0xff]
      %v1677 = vmul.f32 %v1645, %v878
      %v1678 = vmul.f32 %v1646, %v883
      %v1679 = vmul.f32 %v1647, %v888
      %v1680 = vmul.f32 %v1648, %v893
      %v1681 = vmul.f32 %v1649, %v898
      %v1682 = vmul.f32 %v1650, %v903
      %v1683 = vmul.f32 %v1651, %v908
      %v1684 = vmul.f32 %v1652, %v913
      %v1685 = vmul.f32 %v1653, %v918
      %v1686 = vmul.f32 %v1654, %v923
      %v1687 = vmul.f32 %v1655, %v928
      %v1688 = vmul.f32 %v1656, %v933
      %v1689 = vmul.f32 %v1657, %v938
      %v1690 = vmul.f32 %v1658, %v943
      %v1691 = vmul.f32 %v1659, %v948
      %v1692 = vmul.f32 %v1660, %v953
      %v1693 = vmul.f32 %v1661, %v958
      %v1694 = vmul.f32 %v1662, %v963
      %v1695 = vmul.f32 %v1663, %v968
      %v1696 = vmul.f32 %v1664, %v973
      %v1697 = vmul.f32 %v1665, %v978
      %v1698 = vmul.f32 %v1666, %v983
      %v1699 = vmul.f32 %v1667, %v988
      %v1700 = vmul.f32 %v1668, %v993
      %v1701 = vmul.f32 %v1669, %v998
      %v1702 = vmul.f32 %v1670, %v1003
      %v1703 = vmul.f32 %v1671, %v1008
      %v1704 = vmul.f32 %v1672, %v1013
      %v1705 = vmul.f32 %v1673, %v1018
      %v1706 = vmul.f32 %v1674, %v1023
      %v1707 = vmul.f32 %v1675, %v1028
      %v1708 = vmul.f32 %v1676, %v1033
      %1741 = vrot.lane.b32.xlu0 %v1677, 6
      %v1742 = vpop.permute.xlu0 %1741
      %1743 = vrot.lane.b32.xlu0 %v1678, 6
      %v1744 = vpop.permute.xlu0 %1743
      %1745 = vrot.lane.b32.xlu0 %v1679, 6
      %v1746 = vpop.permute.xlu0 %1745
      %1747 = vrot.lane.b32.xlu0 %v1680, 6
      %v1748 = vpop.permute.xlu0 %1747
      %1749 = vrot.lane.b32.xlu0 %v1681, 6
      %v1750 = vpop.permute.xlu0 %1749
      %1751 = vrot.lane.b32.xlu0 %v1682, 6
      %v1752 = vpop.permute.xlu0 %1751
      %1753 = vrot.lane.b32.xlu0 %v1683, 6
      %v1754 = vpop.permute.xlu0 %1753
      %1755 = vrot.lane.b32.xlu0 %v1684, 6
      %v1756 = vpop.permute.xlu0 %1755
      %1757 = vrot.lane.b32.xlu0 %v1685, 6
      %v1758 = vpop.permute.xlu0 %1757
      %1759 = vrot.lane.b32.xlu0 %v1686, 6
      %v1760 = vpop.permute.xlu0 %1759
      %1761 = vrot.lane.b32.xlu0 %v1687, 6
      %v1762 = vpop.permute.xlu0 %1761
      %1763 = vrot.lane.b32.xlu0 %v1688, 6
      %v1764 = vpop.permute.xlu0 %1763
      %1765 = vrot.lane.b32.xlu0 %v1689, 6
      %v1766 = vpop.permute.xlu0 %1765
      %1767 = vrot.lane.b32.xlu0 %v1690, 6
      %v1768 = vpop.permute.xlu0 %1767
      %1769 = vrot.lane.b32.xlu0 %v1691, 6
      %v1770 = vpop.permute.xlu0 %1769
      %1771 = vrot.lane.b32.xlu0 %v1692, 6
      %v1772 = vpop.permute.xlu0 %1771
      %1773 = vrot.lane.b32.xlu0 %v1693, 6
      %v1774 = vpop.permute.xlu0 %1773
      %1775 = vrot.lane.b32.xlu0 %v1694, 6
      %v1776 = vpop.permute.xlu0 %1775
      %1777 = vrot.lane.b32.xlu0 %v1695, 6
      %v1778 = vpop.permute.xlu0 %1777
      %1779 = vrot.lane.b32.xlu0 %v1696, 6
      %v1780 = vpop.permute.xlu0 %1779
      %1781 = vrot.lane.b32.xlu0 %v1697, 6
      %v1782 = vpop.permute.xlu0 %1781
      %1783 = vrot.lane.b32.xlu0 %v1698, 6
      %v1784 = vpop.permute.xlu0 %1783
      %1785 = vrot.lane.b32.xlu0 %v1699, 6
      %v1786 = vpop.permute.xlu0 %1785
      %1787 = vrot.lane.b32.xlu0 %v1700, 6
      %v1788 = vpop.permute.xlu0 %1787
      %1789 = vrot.lane.b32.xlu0 %v1701, 6
      %v1790 = vpop.permute.xlu0 %1789
      %1791 = vrot.lane.b32.xlu0 %v1702, 6
      %v1792 = vpop.permute.xlu0 %1791
      %1793 = vrot.lane.b32.xlu0 %v1703, 6
      %v1794 = vpop.permute.xlu0 %1793
      %1795 = vrot.lane.b32.xlu0 %v1704, 6
      %v1796 = vpop.permute.xlu0 %1795
      %1797 = vrot.lane.b32.xlu0 %v1705, 6
      %v1798 = vpop.permute.xlu0 %1797
      %1799 = vrot.lane.b32.xlu0 %v1706, 6
      %v1800 = vpop.permute.xlu0 %1799
      %1801 = vrot.lane.b32.xlu0 %v1707, 6
      %v1802 = vpop.permute.xlu0 %1801
      %1803 = vrot.lane.b32.xlu0 %v1708, 6
      %v1804 = vpop.permute.xlu0 %1803
      %vm1837 = vcmask 64560
      %1838 = vst.msk [vmem:[#allocation3] sm:$0xff] %vm1837, %v1742
      %1839 = vst.msk [vmem:[#allocation3 + $0x8] sm:$0xff] %vm1837, %v1744
      %1840 = vst.msk [vmem:[#allocation3 + $0x10] sm:$0xff] %vm1837, %v1746
      %1841 = vst.msk [vmem:[#allocation3 + $0x18] sm:$0xff] %vm1837, %v1748
      %1842 = vst.msk [vmem:[#allocation3 + $0x20] sm:$0xff] %vm1837, %v1750
      %1843 = vst.msk [vmem:[#allocation3 + $0x28] sm:$0xff] %vm1837, %v1752
      %1844 = vst.msk [vmem:[#allocation3 + $0x30] sm:$0xff] %vm1837, %v1754
      %1845 = vst.msk [vmem:[#allocation3 + $0x38] sm:$0xff] %vm1837, %v1756
      %1846 = vst.msk [vmem:[#allocation3 + $0x40] sm:$0xff] %vm1837, %v1758
      %1847 = vst.msk [vmem:[#allocation3 + $0x48] sm:$0xff] %vm1837, %v1760
      %1848 = vst.msk [vmem:[#allocation3 + $0x50] sm:$0xff] %vm1837, %v1762
      %1849 = vst.msk [vmem:[#allocation3 + $0x58] sm:$0xff] %vm1837, %v1764
      %1850 = vst.msk [vmem:[#allocation3 + $0x60] sm:$0xff] %vm1837, %v1766
      %1851 = vst.msk [vmem:[#allocation3 + $0x68] sm:$0xff] %vm1837, %v1768
      %1852 = vst.msk [vmem:[#allocation3 + $0x70] sm:$0xff] %vm1837, %v1770
      %1853 = vst.msk [vmem:[#allocation3 + $0x78] sm:$0xff] %vm1837, %v1772
      %1854 = vst.msk [vmem:[#allocation3 + $0x80] sm:$0xff] %vm1837, %v1774
      %1855 = vst.msk [vmem:[#allocation3 + $0x88] sm:$0xff] %vm1837, %v1776
      %1856 = vst.msk [vmem:[#allocation3 + $0x90] sm:$0xff] %vm1837, %v1778
      %1857 = vst.msk [vmem:[#allocation3 + $0x98] sm:$0xff] %vm1837, %v1780
      %1858 = vst.msk [vmem:[#allocation3 + $0xa0] sm:$0xff] %vm1837, %v1782
      %1859 = vst.msk [vmem:[#allocation3 + $0xa8] sm:$0xff] %vm1837, %v1784
      %1860 = vst.msk [vmem:[#allocation3 + $0xb0] sm:$0xff] %vm1837, %v1786
      %1861 = vst.msk [vmem:[#allocation3 + $0xb8] sm:$0xff] %vm1837, %v1788
      %1862 = vst.msk [vmem:[#allocation3 + $0xc0] sm:$0xff] %vm1837, %v1790
      %1863 = vst.msk [vmem:[#allocation3 + $0xc8] sm:$0xff] %vm1837, %v1792
      %1864 = vst.msk [vmem:[#allocation3 + $0xd0] sm:$0xff] %vm1837, %v1794
      %1865 = vst.msk [vmem:[#allocation3 + $0xd8] sm:$0xff] %vm1837, %v1796
      %1866 = vst.msk [vmem:[#allocation3 + $0xe0] sm:$0xff] %vm1837, %v1798
      %1867 = vst.msk [vmem:[#allocation3 + $0xe8] sm:$0xff] %vm1837, %v1800
      %1868 = vst.msk [vmem:[#allocation3 + $0xf0] sm:$0xff] %vm1837, %v1802
      %1869 = vst.msk [vmem:[#allocation3 + $0xf8] sm:$0xff] %vm1837, %v1804
      %v1870 = vld [vmem:[#allocation2 + $0x11] sm:$0xff]
      %v1871 = vld [vmem:[#allocation2 + $0x19] sm:$0xff]
      %v1872 = vld [vmem:[#allocation2 + $0x21] sm:$0xff]
      %v1873 = vld [vmem:[#allocation2 + $0x29] sm:$0xff]
      %v1874 = vld [vmem:[#allocation2 + $0x31] sm:$0xff]
      %v1875 = vld [vmem:[#allocation2 + $0x39] sm:$0xff]
      %v1876 = vld [vmem:[#allocation2 + $0x41] sm:$0xff]
      %v1877 = vld [vmem:[#allocation2 + $0x49] sm:$0xff]
      %v1878 = vld [vmem:[#allocation2 + $0x51] sm:$0xff]
      %v1879 = vld [vmem:[#allocation2 + $0x59] sm:$0xff]
      %v1880 = vld [vmem:[#allocation2 + $0x61] sm:$0xff]
      %v1881 = vld [vmem:[#allocation2 + $0x69] sm:$0xff]
      %v1882 = vld [vmem:[#allocation2 + $0x71] sm:$0xff]
      %v1883 = vld [vmem:[#allocation2 + $0x79] sm:$0xff]
      %v1884 = vld [vmem:[#allocation2 + $0x81] sm:$0xff]
      %v1885 = vld [vmem:[#allocation2 + $0x89] sm:$0xff]
      %v1886 = vld [vmem:[#allocation2 + $0x91] sm:$0xff]
      %v1887 = vld [vmem:[#allocation2 + $0x99] sm:$0xff]
      %v1888 = vld [vmem:[#allocation2 + $0xa1] sm:$0xff]
      %v1889 = vld [vmem:[#allocation2 + $0xa9] sm:$0xff]
      %v1890 = vld [vmem:[#allocation2 + $0xb1] sm:$0xff]
      %v1891 = vld [vmem:[#allocation2 + $0xb9] sm:$0xff]
      %v1892 = vld [vmem:[#allocation2 + $0xc1] sm:$0xff]
      %v1893 = vld [vmem:[#allocation2 + $0xc9] sm:$0xff]
      %v1894 = vld [vmem:[#allocation2 + $0xd1] sm:$0xff]
      %v1895 = vld [vmem:[#allocation2 + $0xd9] sm:$0xff]
      %v1896 = vld [vmem:[#allocation2 + $0xe1] sm:$0xff]
      %v1897 = vld [vmem:[#allocation2 + $0xe9] sm:$0xff]
      %v1898 = vld [vmem:[#allocation2 + $0xf1] sm:$0xff]
      %v1899 = vld [vmem:[#allocation2 + $0xf9] sm:$0xff]
      %v1900 = vld [vmem:[#allocation2 + $0x101] sm:$0xff]
      %v1901 = vld [vmem:[#allocation2 + $0x109] sm:$0xff]
      %1934 = vrot.lane.b32.xlu0 %v1870, 8
      %v1935 = vpop.permute.xlu0 %1934
      %1936 = vrot.lane.b32.xlu0 %v1871, 8
      %v1937 = vpop.permute.xlu0 %1936
      %1938 = vrot.lane.b32.xlu0 %v1872, 8
      %v1939 = vpop.permute.xlu0 %1938
      %1940 = vrot.lane.b32.xlu0 %v1873, 8
      %v1941 = vpop.permute.xlu0 %1940
      %1942 = vrot.lane.b32.xlu0 %v1874, 8
      %v1943 = vpop.permute.xlu0 %1942
      %1944 = vrot.lane.b32.xlu0 %v1875, 8
      %v1945 = vpop.permute.xlu0 %1944
      %1946 = vrot.lane.b32.xlu0 %v1876, 8
      %v1947 = vpop.permute.xlu0 %1946
      %1948 = vrot.lane.b32.xlu0 %v1877, 8
      %v1949 = vpop.permute.xlu0 %1948
      %1950 = vrot.lane.b32.xlu0 %v1878, 8
      %v1951 = vpop.permute.xlu0 %1950
      %1952 = vrot.lane.b32.xlu0 %v1879, 8
      %v1953 = vpop.permute.xlu0 %1952
      %1954 = vrot.lane.b32.xlu0 %v1880, 8
      %v1955 = vpop.permute.xlu0 %1954
      %1956 = vrot.lane.b32.xlu0 %v1881, 8
      %v1957 = vpop.permute.xlu0 %1956
      %1958 = vrot.lane.b32.xlu0 %v1882, 8
      %v1959 = vpop.permute.xlu0 %1958
      %1960 = vrot.lane.b32.xlu0 %v1883, 8
      %v1961 = vpop.permute.xlu0 %1960
      %1962 = vrot.lane.b32.xlu0 %v1884, 8
      %v1963 = vpop.permute.xlu0 %1962
      %1964 = vrot.lane.b32.xlu0 %v1885, 8
      %v1965 = vpop.permute.xlu0 %1964
      %1966 = vrot.lane.b32.xlu0 %v1886, 8
      %v1967 = vpop.permute.xlu0 %1966
      %1968 = vrot.lane.b32.xlu0 %v1887, 8
      %v1969 = vpop.permute.xlu0 %1968
      %1970 = vrot.lane.b32.xlu0 %v1888, 8
      %v1971 = vpop.permute.xlu0 %1970
      %1972 = vrot.lane.b32.xlu0 %v1889, 8
      %v1973 = vpop.permute.xlu0 %1972
      %1974 = vrot.lane.b32.xlu0 %v1890, 8
      %v1975 = vpop.permute.xlu0 %1974
      %1976 = vrot.lane.b32.xlu0 %v1891, 8
      %v1977 = vpop.permute.xlu0 %1976
      %1978 = vrot.lane.b32.xlu0 %v1892, 8
      %v1979 = vpop.permute.xlu0 %1978
      %1980 = vrot.lane.b32.xlu0 %v1893, 8
      %v1981 = vpop.permute.xlu0 %1980
      %1982 = vrot.lane.b32.xlu0 %v1894, 8
      %v1983 = vpop.permute.xlu0 %1982
      %1984 = vrot.lane.b32.xlu0 %v1895, 8
      %v1985 = vpop.permute.xlu0 %1984
      %1986 = vrot.lane.b32.xlu0 %v1896, 8
      %v1987 = vpop.permute.xlu0 %1986
      %1988 = vrot.lane.b32.xlu0 %v1897, 8
      %v1989 = vpop.permute.xlu0 %1988
      %1990 = vrot.lane.b32.xlu0 %v1898, 8
      %v1991 = vpop.permute.xlu0 %1990
      %1992 = vrot.lane.b32.xlu0 %v1899, 8
      %v1993 = vpop.permute.xlu0 %1992
      %1994 = vrot.lane.b32.xlu0 %v1900, 8
      %v1995 = vpop.permute.xlu0 %1994
      %1996 = vrot.lane.b32.xlu0 %v1901, 8
      %v1997 = vpop.permute.xlu0 %1996
      %vm2030 = vcmask 80960
      %2031 = vst.msk [vmem:[#allocation3] sm:$0xff] %vm2030, %v1935
      %2032 = vst.msk [vmem:[#allocation3 + $0x8] sm:$0xff] %vm2030, %v1937
      %2033 = vst.msk [vmem:[#allocation3 + $0x10] sm:$0xff] %vm2030, %v1939
      %2034 = vst.msk [vmem:[#allocation3 + $0x18] sm:$0xff] %vm2030, %v1941
      %2035 = vst.msk [vmem:[#allocation3 + $0x20] sm:$0xff] %vm2030, %v1943
      %2036 = vst.msk [vmem:[#allocation3 + $0x28] sm:$0xff] %vm2030, %v1945
      %2037 = vst.msk [vmem:[#allocation3 + $0x30] sm:$0xff] %vm2030, %v1947
      %2038 = vst.msk [vmem:[#allocation3 + $0x38] sm:$0xff] %vm2030, %v1949
      %2039 = vst.msk [vmem:[#allocation3 + $0x40] sm:$0xff] %vm2030, %v1951
      %2040 = vst.msk [vmem:[#allocation3 + $0x48] sm:$0xff] %vm2030, %v1953
      %2041 = vst.msk [vmem:[#allocation3 + $0x50] sm:$0xff] %vm2030, %v1955
      %2042 = vst.msk [vmem:[#allocation3 + $0x58] sm:$0xff] %vm2030, %v1957
      %2043 = vst.msk [vmem:[#allocation3 + $0x60] sm:$0xff] %vm2030, %v1959
      %2044 = vst.msk [vmem:[#allocation3 + $0x68] sm:$0xff] %vm2030, %v1961
      %2045 = vst.msk [vmem:[#allocation3 + $0x70] sm:$0xff] %vm2030, %v1963
      %2046 = vst.msk [vmem:[#allocation3 + $0x78] sm:$0xff] %vm2030, %v1965
      %2047 = vst.msk [vmem:[#allocation3 + $0x80] sm:$0xff] %vm2030, %v1967
      %2048 = vst.msk [vmem:[#allocation3 + $0x88] sm:$0xff] %vm2030, %v1969
      %2049 = vst.msk [vmem:[#allocation3 + $0x90] sm:$0xff] %vm2030, %v1971
      %2050 = vst.msk [vmem:[#allocation3 + $0x98] sm:$0xff] %vm2030, %v1973
      %2051 = vst.msk [vmem:[#allocation3 + $0xa0] sm:$0xff] %vm2030, %v1975
      %2052 = vst.msk [vmem:[#allocation3 + $0xa8] sm:$0xff] %vm2030, %v1977
      %2053 = vst.msk [vmem:[#allocation3 + $0xb0] sm:$0xff] %vm2030, %v1979
      %2054 = vst.msk [vmem:[#allocation3 + $0xb8] sm:$0xff] %vm2030, %v1981
      %2055 = vst.msk [vmem:[#allocation3 + $0xc0] sm:$0xff] %vm2030, %v1983
      %2056 = vst.msk [vmem:[#allocation3 + $0xc8] sm:$0xff] %vm2030, %v1985
      %2057 = vst.msk [vmem:[#allocation3 + $0xd0] sm:$0xff] %vm2030, %v1987
      %2058 = vst.msk [vmem:[#allocation3 + $0xd8] sm:$0xff] %vm2030, %v1989
      %2059 = vst.msk [vmem:[#allocation3 + $0xe0] sm:$0xff] %vm2030, %v1991
      %2060 = vst.msk [vmem:[#allocation3 + $0xe8] sm:$0xff] %vm2030, %v1993
      %2061 = vst.msk [vmem:[#allocation3 + $0xf0] sm:$0xff] %vm2030, %v1995
      %2062 = vst.msk [vmem:[#allocation3 + $0xf8] sm:$0xff] %vm2030, %v1997
      %v2063 = vld [vmem:[#allocation2 + $0x12] sm:$0xff]
      %v2064 = vld [vmem:[#allocation2 + $0x1a] sm:$0xff]
      %v2065 = vld [vmem:[#allocation2 + $0x22] sm:$0xff]
      %v2066 = vld [vmem:[#allocation2 + $0x2a] sm:$0xff]
      %v2067 = vld [vmem:[#allocation2 + $0x32] sm:$0xff]
      %v2068 = vld [vmem:[#allocation2 + $0x3a] sm:$0xff]
      %v2069 = vld [vmem:[#allocation2 + $0x42] sm:$0xff]
      %v2070 = vld [vmem:[#allocation2 + $0x4a] sm:$0xff]
      %v2071 = vld [vmem:[#allocation2 + $0x52] sm:$0xff]
      %v2072 = vld [vmem:[#allocation2 + $0x5a] sm:$0xff]
      %v2073 = vld [vmem:[#allocation2 + $0x62] sm:$0xff]
      %v2074 = vld [vmem:[#allocation2 + $0x6a] sm:$0xff]
      %v2075 = vld [vmem:[#allocation2 + $0x72] sm:$0xff]
      %v2076 = vld [vmem:[#allocation2 + $0x7a] sm:$0xff]
      %v2077 = vld [vmem:[#allocation2 + $0x82] sm:$0xff]
      %v2078 = vld [vmem:[#allocation2 + $0x8a] sm:$0xff]
      %v2079 = vld [vmem:[#allocation2 + $0x92] sm:$0xff]
      %v2080 = vld [vmem:[#allocation2 + $0x9a] sm:$0xff]
      %v2081 = vld [vmem:[#allocation2 + $0xa2] sm:$0xff]
      %v2082 = vld [vmem:[#allocation2 + $0xaa] sm:$0xff]
      %v2083 = vld [vmem:[#allocation2 + $0xb2] sm:$0xff]
      %v2084 = vld [vmem:[#allocation2 + $0xba] sm:$0xff]
      %v2085 = vld [vmem:[#allocation2 + $0xc2] sm:$0xff]
      %v2086 = vld [vmem:[#allocation2 + $0xca] sm:$0xff]
      %v2087 = vld [vmem:[#allocation2 + $0xd2] sm:$0xff]
      %v2088 = vld [vmem:[#allocation2 + $0xda] sm:$0xff]
      %v2089 = vld [vmem:[#allocation2 + $0xe2] sm:$0xff]
      %v2090 = vld [vmem:[#allocation2 + $0xea] sm:$0xff]
      %v2091 = vld [vmem:[#allocation2 + $0xf2] sm:$0xff]
      %v2092 = vld [vmem:[#allocation2 + $0xfa] sm:$0xff]
      %v2093 = vld [vmem:[#allocation2 + $0x102] sm:$0xff]
      %v2094 = vld [vmem:[#allocation2 + $0x10a] sm:$0xff]
      %v2095 = vmul.f32 %v2063, %v1326
      %v2096 = vmul.f32 %v2064, %v1330
      %v2097 = vmul.f32 %v2065, %v1334
      %v2098 = vmul.f32 %v2066, %v1338
      %v2099 = vmul.f32 %v2067, %v1342
      %v2100 = vmul.f32 %v2068, %v1346
      %v2101 = vmul.f32 %v2069, %v1350
      %v2102 = vmul.f32 %v2070, %v1354
      %v2103 = vmul.f32 %v2071, %v1358
      %v2104 = vmul.f32 %v2072, %v1362
      %v2105 = vmul.f32 %v2073, %v1366
      %v2106 = vmul.f32 %v2074, %v1370
      %v2107 = vmul.f32 %v2075, %v1374
      %v2108 = vmul.f32 %v2076, %v1378
      %v2109 = vmul.f32 %v2077, %v1382
      %v2110 = vmul.f32 %v2078, %v1386
      %v2111 = vmul.f32 %v2079, %v1390
      %v2112 = vmul.f32 %v2080, %v1394
      %v2113 = vmul.f32 %v2081, %v1398
      %v2114 = vmul.f32 %v2082, %v1402
      %v2115 = vmul.f32 %v2083, %v1406
      %v2116 = vmul.f32 %v2084, %v1410
      %v2117 = vmul.f32 %v2085, %v1414
      %v2118 = vmul.f32 %v2086, %v1418
      %v2119 = vmul.f32 %v2087, %v1422
      %v2120 = vmul.f32 %v2088, %v1426
      %v2121 = vmul.f32 %v2089, %v1430
      %v2122 = vmul.f32 %v2090, %v1434
      %v2123 = vmul.f32 %v2091, %v1438
      %v2124 = vmul.f32 %v2092, %v1442
      %v2125 = vmul.f32 %v2093, %v1446
      %v2126 = vmul.f32 %v2094, %v1450
      %2159 = vrot.lane.b32.xlu0 %v2095, 10
      %v2160 = vpop.permute.xlu0 %2159
      %2161 = vrot.lane.b32.xlu0 %v2096, 10
      %v2162 = vpop.permute.xlu0 %2161
      %2163 = vrot.lane.b32.xlu0 %v2097, 10
      %v2164 = vpop.permute.xlu0 %2163
      %2165 = vrot.lane.b32.xlu0 %v2098, 10
      %v2166 = vpop.permute.xlu0 %2165
      %2167 = vrot.lane.b32.xlu0 %v2099, 10
      %v2168 = vpop.permute.xlu0 %2167
      %2169 = vrot.lane.b32.xlu0 %v2100, 10
      %v2170 = vpop.permute.xlu0 %2169
      %2171 = vrot.lane.b32.xlu0 %v2101, 10
      %v2172 = vpop.permute.xlu0 %2171
      %2173 = vrot.lane.b32.xlu0 %v2102, 10
      %v2174 = vpop.permute.xlu0 %2173
      %2175 = vrot.lane.b32.xlu0 %v2103, 10
      %v2176 = vpop.permute.xlu0 %2175
      %2177 = vrot.lane.b32.xlu0 %v2104, 10
      %v2178 = vpop.permute.xlu0 %2177
      %2179 = vrot.lane.b32.xlu0 %v2105, 10
      %v2180 = vpop.permute.xlu0 %2179
      %2181 = vrot.lane.b32.xlu0 %v2106, 10
      %v2182 = vpop.permute.xlu0 %2181
      %2183 = vrot.lane.b32.xlu0 %v2107, 10
      %v2184 = vpop.permute.xlu0 %2183
      %2185 = vrot.lane.b32.xlu0 %v2108, 10
      %v2186 = vpop.permute.xlu0 %2185
      %2187 = vrot.lane.b32.xlu0 %v2109, 10
      %v2188 = vpop.permute.xlu0 %2187
      %2189 = vrot.lane.b32.xlu0 %v2110, 10
      %v2190 = vpop.permute.xlu0 %2189
      %2191 = vrot.lane.b32.xlu0 %v2111, 10
      %v2192 = vpop.permute.xlu0 %2191
      %2193 = vrot.lane.b32.xlu0 %v2112, 10
      %v2194 = vpop.permute.xlu0 %2193
      %2195 = vrot.lane.b32.xlu0 %v2113, 10
      %v2196 = vpop.permute.xlu0 %2195
      %2197 = vrot.lane.b32.xlu0 %v2114, 10
      %v2198 = vpop.permute.xlu0 %2197
      %2199 = vrot.lane.b32.xlu0 %v2115, 10
      %v2200 = vpop.permute.xlu0 %2199
      %2201 = vrot.lane.b32.xlu0 %v2116, 10
      %v2202 = vpop.permute.xlu0 %2201
      %2203 = vrot.lane.b32.xlu0 %v2117, 10
      %v2204 = vpop.permute.xlu0 %2203
      %2205 = vrot.lane.b32.xlu0 %v2118, 10
      %v2206 = vpop.permute.xlu0 %2205
      %2207 = vrot.lane.b32.xlu0 %v2119, 10
      %v2208 = vpop.permute.xlu0 %2207
      %2209 = vrot.lane.b32.xlu0 %v2120, 10
      %v2210 = vpop.permute.xlu0 %2209
      %2211 = vrot.lane.b32.xlu0 %v2121, 10
      %v2212 = vpop.permute.xlu0 %2211
      %2213 = vrot.lane.b32.xlu0 %v2122, 10
      %v2214 = vpop.permute.xlu0 %2213
      %2215 = vrot.lane.b32.xlu0 %v2123, 10
      %v2216 = vpop.permute.xlu0 %2215
      %2217 = vrot.lane.b32.xlu0 %v2124, 10
      %v2218 = vpop.permute.xlu0 %2217
      %2219 = vrot.lane.b32.xlu0 %v2125, 10
      %v2220 = vpop.permute.xlu0 %2219
      %2221 = vrot.lane.b32.xlu0 %v2126, 10
      %v2222 = vpop.permute.xlu0 %2221
      %vm2255 = vcmask 97360
      %2256 = vst.msk [vmem:[#allocation3] sm:$0xff] %vm2255, %v2160
      %2257 = vst.msk [vmem:[#allocation3 + $0x8] sm:$0xff] %vm2255, %v2162
      %2258 = vst.msk [vmem:[#allocation3 + $0x10] sm:$0xff] %vm2255, %v2164
      %2259 = vst.msk [vmem:[#allocation3 + $0x18] sm:$0xff] %vm2255, %v2166
      %2260 = vst.msk [vmem:[#allocation3 + $0x20] sm:$0xff] %vm2255, %v2168
      %2261 = vst.msk [vmem:[#allocation3 + $0x28] sm:$0xff] %vm2255, %v2170
      %2262 = vst.msk [vmem:[#allocation3 + $0x30] sm:$0xff] %vm2255, %v2172
      %2263 = vst.msk [vmem:[#allocation3 + $0x38] sm:$0xff] %vm2255, %v2174
      %2264 = vst.msk [vmem:[#allocation3 + $0x40] sm:$0xff] %vm2255, %v2176
      %2265 = vst.msk [vmem:[#allocation3 + $0x48] sm:$0xff] %vm2255, %v2178
      %2266 = vst.msk [vmem:[#allocation3 + $0x50] sm:$0xff] %vm2255, %v2180
      %2267 = vst.msk [vmem:[#allocation3 + $0x58] sm:$0xff] %vm2255, %v2182
      %2268 = vst.msk [vmem:[#allocation3 + $0x60] sm:$0xff] %vm2255, %v2184
      %2269 = vst.msk [vmem:[#allocation3 + $0x68] sm:$0xff] %vm2255, %v2186
      %2270 = vst.msk [vmem:[#allocation3 + $0x70] sm:$0xff] %vm2255, %v2188
      %2271 = vst.msk [vmem:[#allocation3 + $0x78] sm:$0xff] %vm2255, %v2190
      %2272 = vst.msk [vmem:[#allocation3 + $0x80] sm:$0xff] %vm2255, %v2192
      %2273 = vst.msk [vmem:[#allocation3 + $0x88] sm:$0xff] %vm2255, %v2194
      %2274 = vst.msk [vmem:[#allocation3 + $0x90] sm:$0xff] %vm2255, %v2196
      %2275 = vst.msk [vmem:[#allocation3 + $0x98] sm:$0xff] %vm2255, %v2198
      %2276 = vst.msk [vmem:[#allocation3 + $0xa0] sm:$0xff] %vm2255, %v2200
      %2277 = vst.msk [vmem:[#allocation3 + $0xa8] sm:$0xff] %vm2255, %v2202
      %2278 = vst.msk [vmem:[#allocation3 + $0xb0] sm:$0xff] %vm2255, %v2204
      %2279 = vst.msk [vmem:[#allocation3 + $0xb8] sm:$0xff] %vm2255, %v2206
      %2280 = vst.msk [vmem:[#allocation3 + $0xc0] sm:$0xff] %vm2255, %v2208
      %2281 = vst.msk [vmem:[#allocation3 + $0xc8] sm:$0xff] %vm2255, %v2210
      %2282 = vst.msk [vmem:[#allocation3 + $0xd0] sm:$0xff] %vm2255, %v2212
      %2283 = vst.msk [vmem:[#allocation3 + $0xd8] sm:$0xff] %vm2255, %v2214
      %2284 = vst.msk [vmem:[#allocation3 + $0xe0] sm:$0xff] %vm2255, %v2216
      %2285 = vst.msk [vmem:[#allocation3 + $0xe8] sm:$0xff] %vm2255, %v2218
      %2286 = vst.msk [vmem:[#allocation3 + $0xf0] sm:$0xff] %vm2255, %v2220
      %2287 = vst.msk [vmem:[#allocation3 + $0xf8] sm:$0xff] %vm2255, %v2222
      %v2288 = vld [vmem:[#allocation2 + $0x20] sm:$0xff]
      %v2289 = vld [vmem:[#allocation2 + $0x28] sm:$0xff]
      %v2290 = vld [vmem:[#allocation2 + $0x30] sm:$0xff]
      %v2291 = vld [vmem:[#allocation2 + $0x38] sm:$0xff]
      %v2292 = vld [vmem:[#allocation2 + $0x40] sm:$0xff]
      %v2293 = vld [vmem:[#allocation2 + $0x48] sm:$0xff]
      %v2294 = vld [vmem:[#allocation2 + $0x50] sm:$0xff]
      %v2295 = vld [vmem:[#allocation2 + $0x58] sm:$0xff]
      %v2296 = vld [vmem:[#allocation2 + $0x60] sm:$0xff]
      %v2297 = vld [vmem:[#allocation2 + $0x68] sm:$0xff]
      %v2298 = vld [vmem:[#allocation2 + $0x70] sm:$0xff]
      %v2299 = vld [vmem:[#allocation2 + $0x78] sm:$0xff]
      %v2300 = vld [vmem:[#allocation2 + $0x80] sm:$0xff]
      %v2301 = vld [vmem:[#allocation2 + $0x88] sm:$0xff]
      %v2302 = vld [vmem:[#allocation2 + $0x90] sm:$0xff]
      %v2303 = vld [vmem:[#allocation2 + $0x98] sm:$0xff]
      %v2304 = vld [vmem:[#allocation2 + $0xa0] sm:$0xff]
      %v2305 = vld [vmem:[#allocation2 + $0xa8] sm:$0xff]
      %v2306 = vld [vmem:[#allocation2 + $0xb0] sm:$0xff]
      %v2307 = vld [vmem:[#allocation2 + $0xb8] sm:$0xff]
      %v2308 = vld [vmem:[#allocation2 + $0xc0] sm:$0xff]
      %v2309 = vld [vmem:[#allocation2 + $0xc8] sm:$0xff]
      %v2310 = vld [vmem:[#allocation2 + $0xd0] sm:$0xff]
      %v2311 = vld [vmem:[#allocation2 + $0xd8] sm:$0xff]
      %v2312 = vld [vmem:[#allocation2 + $0xe0] sm:$0xff]
      %v2313 = vld [vmem:[#allocation2 + $0xe8] sm:$0xff]
      %v2314 = vld [vmem:[#allocation2 + $0xf0] sm:$0xff]
      %v2315 = vld [vmem:[#allocation2 + $0xf8] sm:$0xff]
      %v2316 = vld [vmem:[#allocation2 + $0x100] sm:$0xff]
      %v2317 = vld [vmem:[#allocation2 + $0x108] sm:$0xff]
      %v2318 = vld [vmem:[#allocation2 + $0x110] sm:$0xff]
      %v2319 = vld [vmem:[#allocation2 + $0x118] sm:$0xff]
      %v2320 = vmul.f32 %v2288, %v878
      %v2321 = vmul.f32 %v2289, %v883
      %v2322 = vmul.f32 %v2290, %v888
      %v2323 = vmul.f32 %v2291, %v893
      %v2324 = vmul.f32 %v2292, %v898
      %v2325 = vmul.f32 %v2293, %v903
      %v2326 = vmul.f32 %v2294, %v908
      %v2327 = vmul.f32 %v2295, %v913
      %v2328 = vmul.f32 %v2296, %v918
      %v2329 = vmul.f32 %v2297, %v923
      %v2330 = vmul.f32 %v2298, %v928
      %v2331 = vmul.f32 %v2299, %v933
      %v2332 = vmul.f32 %v2300, %v938
      %v2333 = vmul.f32 %v2301, %v943
      %v2334 = vmul.f32 %v2302, %v948
      %v2335 = vmul.f32 %v2303, %v953
      %v2336 = vmul.f32 %v2304, %v958
      %v2337 = vmul.f32 %v2305, %v963
      %v2338 = vmul.f32 %v2306, %v968
      %v2339 = vmul.f32 %v2307, %v973
      %v2340 = vmul.f32 %v2308, %v978
      %v2341 = vmul.f32 %v2309, %v983
      %v2342 = vmul.f32 %v2310, %v988
      %v2343 = vmul.f32 %v2311, %v993
      %v2344 = vmul.f32 %v2312, %v998
      %v2345 = vmul.f32 %v2313, %v1003
      %v2346 = vmul.f32 %v2314, %v1008
      %v2347 = vmul.f32 %v2315, %v1013
      %v2348 = vmul.f32 %v2316, %v1018
      %v2349 = vmul.f32 %v2317, %v1023
      %v2350 = vmul.f32 %v2318, %v1028
      %v2351 = vmul.f32 %v2319, %v1033
      %2384 = vrot.lane.b32.xlu0 %v2320, 12
      %v2385 = vpop.permute.xlu0 %2384
      %2386 = vrot.lane.b32.xlu0 %v2321, 12
      %v2387 = vpop.permute.xlu0 %2386
      %2388 = vrot.lane.b32.xlu0 %v2322, 12
      %v2389 = vpop.permute.xlu0 %2388
      %2390 = vrot.lane.b32.xlu0 %v2323, 12
      %v2391 = vpop.permute.xlu0 %2390
      %2392 = vrot.lane.b32.xlu0 %v2324, 12
      %v2393 = vpop.permute.xlu0 %2392
      %2394 = vrot.lane.b32.xlu0 %v2325, 12
      %v2395 = vpop.permute.xlu0 %2394
      %2396 = vrot.lane.b32.xlu0 %v2326, 12
      %v2397 = vpop.permute.xlu0 %2396
      %2398 = vrot.lane.b32.xlu0 %v2327, 12
      %v2399 = vpop.permute.xlu0 %2398
      %2400 = vrot.lane.b32.xlu0 %v2328, 12
      %v2401 = vpop.permute.xlu0 %2400
      %2402 = vrot.lane.b32.xlu0 %v2329, 12
      %v2403 = vpop.permute.xlu0 %2402
      %2404 = vrot.lane.b32.xlu0 %v2330, 12
      %v2405 = vpop.permute.xlu0 %2404
      %2406 = vrot.lane.b32.xlu0 %v2331, 12
      %v2407 = vpop.permute.xlu0 %2406
      %2408 = vrot.lane.b32.xlu0 %v2332, 12
      %v2409 = vpop.permute.xlu0 %2408
      %2410 = vrot.lane.b32.xlu0 %v2333, 12
      %v2411 = vpop.permute.xlu0 %2410
      %2412 = vrot.lane.b32.xlu0 %v2334, 12
      %v2413 = vpop.permute.xlu0 %2412
      %2414 = vrot.lane.b32.xlu0 %v2335, 12
      %v2415 = vpop.permute.xlu0 %2414
      %2416 = vrot.lane.b32.xlu0 %v2336, 12
      %v2417 = vpop.permute.xlu0 %2416
      %2418 = vrot.lane.b32.xlu0 %v2337, 12
      %v2419 = vpop.permute.xlu0 %2418
      %2420 = vrot.lane.b32.xlu0 %v2338, 12
      %v2421 = vpop.permute.xlu0 %2420
      %2422 = vrot.lane.b32.xlu0 %v2339, 12
      %v2423 = vpop.permute.xlu0 %2422
      %2424 = vrot.lane.b32.xlu0 %v2340, 12
      %v2425 = vpop.permute.xlu0 %2424
      %2426 = vrot.lane.b32.xlu0 %v2341, 12
      %v2427 = vpop.permute.xlu0 %2426
      %2428 = vrot.lane.b32.xlu0 %v2342, 12
      %v2429 = vpop.permute.xlu0 %2428
      %2430 = vrot.lane.b32.xlu0 %v2343, 12
      %v2431 = vpop.permute.xlu0 %2430
      %2432 = vrot.lane.b32.xlu0 %v2344, 12
      %v2433 = vpop.permute.xlu0 %2432
      %2434 = vrot.lane.b32.xlu0 %v2345, 12
      %v2435 = vpop.permute.xlu0 %2434
      %2436 = vrot.lane.b32.xlu0 %v2346, 12
      %v2437 = vpop.permute.xlu0 %2436
      %2438 = vrot.lane.b32.xlu0 %v2347, 12
      %v2439 = vpop.permute.xlu0 %2438
      %2440 = vrot.lane.b32.xlu0 %v2348, 12
      %v2441 = vpop.permute.xlu0 %2440
      %2442 = vrot.lane.b32.xlu0 %v2349, 12
      %v2443 = vpop.permute.xlu0 %2442
      %2444 = vrot.lane.b32.xlu0 %v2350, 12
      %v2445 = vpop.permute.xlu0 %2444
      %2446 = vrot.lane.b32.xlu0 %v2351, 12
      %v2447 = vpop.permute.xlu0 %2446
      %vm2480 = vcmask 113760
      %2481 = vst.msk [vmem:[#allocation3] sm:$0xff] %vm2480, %v2385
      %2482 = vst.msk [vmem:[#allocation3 + $0x8] sm:$0xff] %vm2480, %v2387
      %2483 = vst.msk [vmem:[#allocation3 + $0x10] sm:$0xff] %vm2480, %v2389
      %2484 = vst.msk [vmem:[#allocation3 + $0x18] sm:$0xff] %vm2480, %v2391
      %2485 = vst.msk [vmem:[#allocation3 + $0x20] sm:$0xff] %vm2480, %v2393
      %2486 = vst.msk [vmem:[#allocation3 + $0x28] sm:$0xff] %vm2480, %v2395
      %2487 = vst.msk [vmem:[#allocation3 + $0x30] sm:$0xff] %vm2480, %v2397
      %2488 = vst.msk [vmem:[#allocation3 + $0x38] sm:$0xff] %vm2480, %v2399
      %2489 = vst.msk [vmem:[#allocation3 + $0x40] sm:$0xff] %vm2480, %v2401
      %2490 = vst.msk [vmem:[#allocation3 + $0x48] sm:$0xff] %vm2480, %v2403
      %2491 = vst.msk [vmem:[#allocation3 + $0x50] sm:$0xff] %vm2480, %v2405
      %2492 = vst.msk [vmem:[#allocation3 + $0x58] sm:$0xff] %vm2480, %v2407
      %2493 = vst.msk [vmem:[#allocation3 + $0x60] sm:$0xff] %vm2480, %v2409
      %2494 = vst.msk [vmem:[#allocation3 + $0x68] sm:$0xff] %vm2480, %v2411
      %2495 = vst.msk [vmem:[#allocation3 + $0x70] sm:$0xff] %vm2480, %v2413
      %2496 = vst.msk [vmem:[#allocation3 + $0x78] sm:$0xff] %vm2480, %v2415
      %2497 = vst.msk [vmem:[#allocation3 + $0x80] sm:$0xff] %vm2480, %v2417
      %2498 = vst.msk [vmem:[#allocation3 + $0x88] sm:$0xff] %vm2480, %v2419
      %2499 = vst.msk [vmem:[#allocation3 + $0x90] sm:$0xff] %vm2480, %v2421
      %2500 = vst.msk [vmem:[#allocation3 + $0x98] sm:$0xff] %vm2480, %v2423
      %2501 = vst.msk [vmem:[#allocation3 + $0xa0] sm:$0xff] %vm2480, %v2425
      %2502 = vst.msk [vmem:[#allocation3 + $0xa8] sm:$0xff] %vm2480, %v2427
      %2503 = vst.msk [vmem:[#allocation3 + $0xb0] sm:$0xff] %vm2480, %v2429
      %2504 = vst.msk [vmem:[#allocation3 + $0xb8] sm:$0xff] %vm2480, %v2431
      %2505 = vst.msk [vmem:[#allocation3 + $0xc0] sm:$0xff] %vm2480, %v2433
      %2506 = vst.msk [vmem:[#allocation3 + $0xc8] sm:$0xff] %vm2480, %v2435
      %2507 = vst.msk [vmem:[#allocation3 + $0xd0] sm:$0xff] %vm2480, %v2437
      %2508 = vst.msk [vmem:[#allocation3 + $0xd8] sm:$0xff] %vm2480, %v2439
      %2509 = vst.msk [vmem:[#allocation3 + $0xe0] sm:$0xff] %vm2480, %v2441
      %2510 = vst.msk [vmem:[#allocation3 + $0xe8] sm:$0xff] %vm2480, %v2443
      %2511 = vst.msk [vmem:[#allocation3 + $0xf0] sm:$0xff] %vm2480, %v2445
      %2512 = vst.msk [vmem:[#allocation3 + $0xf8] sm:$0xff] %vm2480, %v2447
      %v2513 = vld [vmem:[#allocation2 + $0x21] sm:$0xff]
      %v2514 = vld [vmem:[#allocation2 + $0x29] sm:$0xff]
      %v2515 = vld [vmem:[#allocation2 + $0x31] sm:$0xff]
      %v2516 = vld [vmem:[#allocation2 + $0x39] sm:$0xff]
      %v2517 = vld [vmem:[#allocation2 + $0x41] sm:$0xff]
      %v2518 = vld [vmem:[#allocation2 + $0x49] sm:$0xff]
      %v2519 = vld [vmem:[#allocation2 + $0x51] sm:$0xff]
      %v2520 = vld [vmem:[#allocation2 + $0x59] sm:$0xff]
      %v2521 = vld [vmem:[#allocation2 + $0x61] sm:$0xff]
      %v2522 = vld [vmem:[#allocation2 + $0x69] sm:$0xff]
      %v2523 = vld [vmem:[#allocation2 + $0x71] sm:$0xff]
      %v2524 = vld [vmem:[#allocation2 + $0x79] sm:$0xff]
      %v2525 = vld [vmem:[#allocation2 + $0x81] sm:$0xff]
      %v2526 = vld [vmem:[#allocation2 + $0x89] sm:$0xff]
      %v2527 = vld [vmem:[#allocation2 + $0x91] sm:$0xff]
      %v2528 = vld [vmem:[#allocation2 + $0x99] sm:$0xff]
      %v2529 = vld [vmem:[#allocation2 + $0xa1] sm:$0xff]
      %v2530 = vld [vmem:[#allocation2 + $0xa9] sm:$0xff]
      %v2531 = vld [vmem:[#allocation2 + $0xb1] sm:$0xff]
      %v2532 = vld [vmem:[#allocation2 + $0xb9] sm:$0xff]
      %v2533 = vld [vmem:[#allocation2 + $0xc1] sm:$0xff]
      %v2534 = vld [vmem:[#allocation2 + $0xc9] sm:$0xff]
      %v2535 = vld [vmem:[#allocation2 + $0xd1] sm:$0xff]
      %v2536 = vld [vmem:[#allocation2 + $0xd9] sm:$0xff]
      %v2537 = vld [vmem:[#allocation2 + $0xe1] sm:$0xff]
      %v2538 = vld [vmem:[#allocation2 + $0xe9] sm:$0xff]
      %v2539 = vld [vmem:[#allocation2 + $0xf1] sm:$0xff]
      %v2540 = vld [vmem:[#allocation2 + $0xf9] sm:$0xff]
      %v2541 = vld [vmem:[#allocation2 + $0x101] sm:$0xff]
      %v2542 = vld [vmem:[#allocation2 + $0x109] sm:$0xff]
      %v2543 = vld [vmem:[#allocation2 + $0x111] sm:$0xff]
      %v2544 = vld [vmem:[#allocation2 + $0x119] sm:$0xff]
      %2577 = vrot.lane.b32.xlu0 %v2513, 14
      %v2578 = vpop.permute.xlu0 %2577
      %2579 = vrot.lane.b32.xlu0 %v2514, 14
      %v2580 = vpop.permute.xlu0 %2579
      %2581 = vrot.lane.b32.xlu0 %v2515, 14
      %v2582 = vpop.permute.xlu0 %2581
      %2583 = vrot.lane.b32.xlu0 %v2516, 14
      %v2584 = vpop.permute.xlu0 %2583
      %2585 = vrot.lane.b32.xlu0 %v2517, 14
      %v2586 = vpop.permute.xlu0 %2585
      %2587 = vrot.lane.b32.xlu0 %v2518, 14
      %v2588 = vpop.permute.xlu0 %2587
      %2589 = vrot.lane.b32.xlu0 %v2519, 14
      %v2590 = vpop.permute.xlu0 %2589
      %2591 = vrot.lane.b32.xlu0 %v2520, 14
      %v2592 = vpop.permute.xlu0 %2591
      %2593 = vrot.lane.b32.xlu0 %v2521, 14
      %v2594 = vpop.permute.xlu0 %2593
      %2595 = vrot.lane.b32.xlu0 %v2522, 14
      %v2596 = vpop.permute.xlu0 %2595
      %2597 = vrot.lane.b32.xlu0 %v2523, 14
      %v2598 = vpop.permute.xlu0 %2597
      %2599 = vrot.lane.b32.xlu0 %v2524, 14
      %v2600 = vpop.permute.xlu0 %2599
      %2601 = vrot.lane.b32.xlu0 %v2525, 14
      %v2602 = vpop.permute.xlu0 %2601
      %2603 = vrot.lane.b32.xlu0 %v2526, 14
      %v2604 = vpop.permute.xlu0 %2603
      %2605 = vrot.lane.b32.xlu0 %v2527, 14
      %v2606 = vpop.permute.xlu0 %2605
      %2607 = vrot.lane.b32.xlu0 %v2528, 14
      %v2608 = vpop.permute.xlu0 %2607
      %2609 = vrot.lane.b32.xlu0 %v2529, 14
      %v2610 = vpop.permute.xlu0 %2609
      %2611 = vrot.lane.b32.xlu0 %v2530, 14
      %v2612 = vpop.permute.xlu0 %2611
      %2613 = vrot.lane.b32.xlu0 %v2531, 14
      %v2614 = vpop.permute.xlu0 %2613
      %2615 = vrot.lane.b32.xlu0 %v2532, 14
      %v2616 = vpop.permute.xlu0 %2615
      %2617 = vrot.lane.b32.xlu0 %v2533, 14
      %v2618 = vpop.permute.xlu0 %2617
      %2619 = vrot.lane.b32.xlu0 %v2534, 14
      %v2620 = vpop.permute.xlu0 %2619
      %2621 = vrot.lane.b32.xlu0 %v2535, 14
      %v2622 = vpop.permute.xlu0 %2621
      %2623 = vrot.lane.b32.xlu0 %v2536, 14
      %v2624 = vpop.permute.xlu0 %2623
      %2625 = vrot.lane.b32.xlu0 %v2537, 14
      %v2626 = vpop.permute.xlu0 %2625
      %2627 = vrot.lane.b32.xlu0 %v2538, 14
      %v2628 = vpop.permute.xlu0 %2627
      %2629 = vrot.lane.b32.xlu0 %v2539, 14
      %v2630 = vpop.permute.xlu0 %2629
      %2631 = vrot.lane.b32.xlu0 %v2540, 14
      %v2632 = vpop.permute.xlu0 %2631
      %2633 = vrot.lane.b32.xlu0 %v2541, 14
      %v2634 = vpop.permute.xlu0 %2633
      %2635 = vrot.lane.b32.xlu0 %v2542, 14
      %v2636 = vpop.permute.xlu0 %2635
      %2637 = vrot.lane.b32.xlu0 %v2543, 14
      %v2638 = vpop.permute.xlu0 %2637
      %2639 = vrot.lane.b32.xlu0 %v2544, 14
      %v2640 = vpop.permute.xlu0 %2639
      %vm2673 = vcmask 130160
      %2674 = vst.msk [vmem:[#allocation3] sm:$0xff] %vm2673, %v2578
      %2675 = vst.msk [vmem:[#allocation3 + $0x8] sm:$0xff] %vm2673, %v2580
      %2676 = vst.msk [vmem:[#allocation3 + $0x10] sm:$0xff] %vm2673, %v2582
      %2677 = vst.msk [vmem:[#allocation3 + $0x18] sm:$0xff] %vm2673, %v2584
      %2678 = vst.msk [vmem:[#allocation3 + $0x20] sm:$0xff] %vm2673, %v2586
      %2679 = vst.msk [vmem:[#allocation3 + $0x28] sm:$0xff] %vm2673, %v2588
      %2680 = vst.msk [vmem:[#allocation3 + $0x30] sm:$0xff] %vm2673, %v2590
      %2681 = vst.msk [vmem:[#allocation3 + $0x38] sm:$0xff] %vm2673, %v2592
      %2682 = vst.msk [vmem:[#allocation3 + $0x40] sm:$0xff] %vm2673, %v2594
      %2683 = vst.msk [vmem:[#allocation3 + $0x48] sm:$0xff] %vm2673, %v2596
      %2684 = vst.msk [vmem:[#allocation3 + $0x50] sm:$0xff] %vm2673, %v2598
      %2685 = vst.msk [vmem:[#allocation3 + $0x58] sm:$0xff] %vm2673, %v2600
      %2686 = vst.msk [vmem:[#allocation3 + $0x60] sm:$0xff] %vm2673, %v2602
      %2687 = vst.msk [vmem:[#allocation3 + $0x68] sm:$0xff] %vm2673, %v2604
      %2688 = vst.msk [vmem:[#allocation3 + $0x70] sm:$0xff] %vm2673, %v2606
      %2689 = vst.msk [vmem:[#allocation3 + $0x78] sm:$0xff] %vm2673, %v2608
      %2690 = vst.msk [vmem:[#allocation3 + $0x80] sm:$0xff] %vm2673, %v2610
      %2691 = vst.msk [vmem:[#allocation3 + $0x88] sm:$0xff] %vm2673, %v2612
      %2692 = vst.msk [vmem:[#allocation3 + $0x90] sm:$0xff] %vm2673, %v2614
      %2693 = vst.msk [vmem:[#allocation3 + $0x98] sm:$0xff] %vm2673, %v2616
      %2694 = vst.msk [vmem:[#allocation3 + $0xa0] sm:$0xff] %vm2673, %v2618
      %2695 = vst.msk [vmem:[#allocation3 + $0xa8] sm:$0xff] %vm2673, %v2620
      %2696 = vst.msk [vmem:[#allocation3 + $0xb0] sm:$0xff] %vm2673, %v2622
      %2697 = vst.msk [vmem:[#allocation3 + $0xb8] sm:$0xff] %vm2673, %v2624
      %2698 = vst.msk [vmem:[#allocation3 + $0xc0] sm:$0xff] %vm2673, %v2626
      %2699 = vst.msk [vmem:[#allocation3 + $0xc8] sm:$0xff] %vm2673, %v2628
      %2700 = vst.msk [vmem:[#allocation3 + $0xd0] sm:$0xff] %vm2673, %v2630
      %2701 = vst.msk [vmem:[#allocation3 + $0xd8] sm:$0xff] %vm2673, %v2632
      %2702 = vst.msk [vmem:[#allocation3 + $0xe0] sm:$0xff] %vm2673, %v2634
      %2703 = vst.msk [vmem:[#allocation3 + $0xe8] sm:$0xff] %vm2673, %v2636
      %2704 = vst.msk [vmem:[#allocation3 + $0xf0] sm:$0xff] %vm2673, %v2638
      %2705 = vst.msk [vmem:[#allocation3 + $0xf8] sm:$0xff] %vm2673, %v2640
      %v2706 = vld [vmem:[#allocation2 + $0x22] sm:$0xff]
      %v2707 = vld [vmem:[#allocation2 + $0x2a] sm:$0xff]
      %v2708 = vld [vmem:[#allocation2 + $0x32] sm:$0xff]
      %v2709 = vld [vmem:[#allocation2 + $0x3a] sm:$0xff]
      %v2710 = vld [vmem:[#allocation2 + $0x42] sm:$0xff]
      %v2711 = vld [vmem:[#allocation2 + $0x4a] sm:$0xff]
      %v2712 = vld [vmem:[#allocation2 + $0x52] sm:$0xff]
      %v2713 = vld [vmem:[#allocation2 + $0x5a] sm:$0xff]
      %v2714 = vld [vmem:[#allocation2 + $0x62] sm:$0xff]
      %v2715 = vld [vmem:[#allocation2 + $0x6a] sm:$0xff]
      %v2716 = vld [vmem:[#allocation2 + $0x72] sm:$0xff]
      %v2717 = vld [vmem:[#allocation2 + $0x7a] sm:$0xff]
      %v2718 = vld [vmem:[#allocation2 + $0x82] sm:$0xff]
      %v2719 = vld [vmem:[#allocation2 + $0x8a] sm:$0xff]
      %v2720 = vld [vmem:[#allocation2 + $0x92] sm:$0xff]
      %v2721 = vld [vmem:[#allocation2 + $0x9a] sm:$0xff]
      %v2722 = vld [vmem:[#allocation2 + $0xa2] sm:$0xff]
      %v2723 = vld [vmem:[#allocation2 + $0xaa] sm:$0xff]
      %v2724 = vld [vmem:[#allocation2 + $0xb2] sm:$0xff]
      %v2725 = vld [vmem:[#allocation2 + $0xba] sm:$0xff]
      %v2726 = vld [vmem:[#allocation2 + $0xc2] sm:$0xff]
      %v2727 = vld [vmem:[#allocation2 + $0xca] sm:$0xff]
      %v2728 = vld [vmem:[#allocation2 + $0xd2] sm:$0xff]
      %v2729 = vld [vmem:[#allocation2 + $0xda] sm:$0xff]
      %v2730 = vld [vmem:[#allocation2 + $0xe2] sm:$0xff]
      %v2731 = vld [vmem:[#allocation2 + $0xea] sm:$0xff]
      %v2732 = vld [vmem:[#allocation2 + $0xf2] sm:$0xff]
      %v2733 = vld [vmem:[#allocation2 + $0xfa] sm:$0xff]
      %v2734 = vld [vmem:[#allocation2 + $0x102] sm:$0xff]
      %v2735 = vld [vmem:[#allocation2 + $0x10a] sm:$0xff]
      %v2736 = vld [vmem:[#allocation2 + $0x112] sm:$0xff]
      %v2737 = vld [vmem:[#allocation2 + $0x11a] sm:$0xff]
      %v2738 = vmul.f32 %v2706, %v1326
      %v2739 = vmul.f32 %v2707, %v1330
      %v2740 = vmul.f32 %v2708, %v1334
      %v2741 = vmul.f32 %v2709, %v1338
      %v2742 = vmul.f32 %v2710, %v1342
      %v2743 = vmul.f32 %v2711, %v1346
      %v2744 = vmul.f32 %v2712, %v1350
      %v2745 = vmul.f32 %v2713, %v1354
      %v2746 = vmul.f32 %v2714, %v1358
      %v2747 = vmul.f32 %v2715, %v1362
      %v2748 = vmul.f32 %v2716, %v1366
      %v2749 = vmul.f32 %v2717, %v1370
      %v2750 = vmul.f32 %v2718, %v1374
      %v2751 = vmul.f32 %v2719, %v1378
      %v2752 = vmul.f32 %v2720, %v1382
      %v2753 = vmul.f32 %v2721, %v1386
      %v2754 = vmul.f32 %v2722, %v1390
      %v2755 = vmul.f32 %v2723, %v1394
      %v2756 = vmul.f32 %v2724, %v1398
      %v2757 = vmul.f32 %v2725, %v1402
      %v2758 = vmul.f32 %v2726, %v1406
      %v2759 = vmul.f32 %v2727, %v1410
      %v2760 = vmul.f32 %v2728, %v1414
      %v2761 = vmul.f32 %v2729, %v1418
      %v2762 = vmul.f32 %v2730, %v1422
      %v2763 = vmul.f32 %v2731, %v1426
      %v2764 = vmul.f32 %v2732, %v1430
      %v2765 = vmul.f32 %v2733, %v1434
      %v2766 = vmul.f32 %v2734, %v1438
      %v2767 = vmul.f32 %v2735, %v1442
      %v2768 = vmul.f32 %v2736, %v1446
      %v2769 = vmul.f32 %v2737, %v1450
      %2802 = vrot.lane.b32.xlu0 %v2738, 16
      %v2803 = vpop.permute.xlu0 %2802
      %2804 = vrot.lane.b32.xlu0 %v2739, 16
      %v2805 = vpop.permute.xlu0 %2804
      %2806 = vrot.lane.b32.xlu0 %v2740, 16
      %v2807 = vpop.permute.xlu0 %2806
      %2808 = vrot.lane.b32.xlu0 %v2741, 16
      %v2809 = vpop.permute.xlu0 %2808
      %2810 = vrot.lane.b32.xlu0 %v2742, 16
      %v2811 = vpop.permute.xlu0 %2810
      %2812 = vrot.lane.b32.xlu0 %v2743, 16
      %v2813 = vpop.permute.xlu0 %2812
      %2814 = vrot.lane.b32.xlu0 %v2744, 16
      %v2815 = vpop.permute.xlu0 %2814
      %2816 = vrot.lane.b32.xlu0 %v2745, 16
      %v2817 = vpop.permute.xlu0 %2816
      %2818 = vrot.lane.b32.xlu0 %v2746, 16
      %v2819 = vpop.permute.xlu0 %2818
      %2820 = vrot.lane.b32.xlu0 %v2747, 16
      %v2821 = vpop.permute.xlu0 %2820
      %2822 = vrot.lane.b32.xlu0 %v2748, 16
      %v2823 = vpop.permute.xlu0 %2822
      %2824 = vrot.lane.b32.xlu0 %v2749, 16
      %v2825 = vpop.permute.xlu0 %2824
      %2826 = vrot.lane.b32.xlu0 %v2750, 16
      %v2827 = vpop.permute.xlu0 %2826
      %2828 = vrot.lane.b32.xlu0 %v2751, 16
      %v2829 = vpop.permute.xlu0 %2828
      %2830 = vrot.lane.b32.xlu0 %v2752, 16
      %v2831 = vpop.permute.xlu0 %2830
      %2832 = vrot.lane.b32.xlu0 %v2753, 16
      %v2833 = vpop.permute.xlu0 %2832
      %2834 = vrot.lane.b32.xlu0 %v2754, 16
      %v2835 = vpop.permute.xlu0 %2834
      %2836 = vrot.lane.b32.xlu0 %v2755, 16
      %v2837 = vpop.permute.xlu0 %2836
      %2838 = vrot.lane.b32.xlu0 %v2756, 16
      %v2839 = vpop.permute.xlu0 %2838
      %2840 = vrot.lane.b32.xlu0 %v2757, 16
      %v2841 = vpop.permute.xlu0 %2840
      %2842 = vrot.lane.b32.xlu0 %v2758, 16
      %v2843 = vpop.permute.xlu0 %2842
      %2844 = vrot.lane.b32.xlu0 %v2759, 16
      %v2845 = vpop.permute.xlu0 %2844
      %2846 = vrot.lane.b32.xlu0 %v2760, 16
      %v2847 = vpop.permute.xlu0 %2846
      %2848 = vrot.lane.b32.xlu0 %v2761, 16
      %v2849 = vpop.permute.xlu0 %2848
      %2850 = vrot.lane.b32.xlu0 %v2762, 16
      %v2851 = vpop.permute.xlu0 %2850
      %2852 = vrot.lane.b32.xlu0 %v2763, 16
      %v2853 = vpop.permute.xlu0 %2852
      %2854 = vrot.lane.b32.xlu0 %v2764, 16
      %v2855 = vpop.permute.xlu0 %2854
      %2856 = vrot.lane.b32.xlu0 %v2765, 16
      %v2857 = vpop.permute.xlu0 %2856
      %2858 = vrot.lane.b32.xlu0 %v2766, 16
      %v2859 = vpop.permute.xlu0 %2858
      %2860 = vrot.lane.b32.xlu0 %v2767, 16
      %v2861 = vpop.permute.xlu0 %2860
      %2862 = vrot.lane.b32.xlu0 %v2768, 16
      %v2863 = vpop.permute.xlu0 %2862
      %2864 = vrot.lane.b32.xlu0 %v2769, 16
      %v2865 = vpop.permute.xlu0 %2864
      %vm2898 = vcmask 146560
      %2899 = vst.msk [vmem:[#allocation3] sm:$0xff] %vm2898, %v2803
      %2900 = vst.msk [vmem:[#allocation3 + $0x8] sm:$0xff] %vm2898, %v2805
      %2901 = vst.msk [vmem:[#allocation3 + $0x10] sm:$0xff] %vm2898, %v2807
      %2902 = vst.msk [vmem:[#allocation3 + $0x18] sm:$0xff] %vm2898, %v2809
      %2903 = vst.msk [vmem:[#allocation3 + $0x20] sm:$0xff] %vm2898, %v2811
      %2904 = vst.msk [vmem:[#allocation3 + $0x28] sm:$0xff] %vm2898, %v2813
      %2905 = vst.msk [vmem:[#allocation3 + $0x30] sm:$0xff] %vm2898, %v2815
      %2906 = vst.msk [vmem:[#allocation3 + $0x38] sm:$0xff] %vm2898, %v2817
      %2907 = vst.msk [vmem:[#allocation3 + $0x40] sm:$0xff] %vm2898, %v2819
      %2908 = vst.msk [vmem:[#allocation3 + $0x48] sm:$0xff] %vm2898, %v2821
      %2909 = vst.msk [vmem:[#allocation3 + $0x50] sm:$0xff] %vm2898, %v2823
      %2910 = vst.msk [vmem:[#allocation3 + $0x58] sm:$0xff] %vm2898, %v2825
      %2911 = vst.msk [vmem:[#allocation3 + $0x60] sm:$0xff] %vm2898, %v2827
      %2912 = vst.msk [vmem:[#allocation3 + $0x68] sm:$0xff] %vm2898, %v2829
      %2913 = vst.msk [vmem:[#allocation3 + $0x70] sm:$0xff] %vm2898, %v2831
      %2914 = vst.msk [vmem:[#allocation3 + $0x78] sm:$0xff] %vm2898, %v2833
      %2915 = vst.msk [vmem:[#allocation3 + $0x80] sm:$0xff] %vm2898, %v2835
      %2916 = vst.msk [vmem:[#allocation3 + $0x88] sm:$0xff] %vm2898, %v2837
      %2917 = vst.msk [vmem:[#allocation3 + $0x90] sm:$0xff] %vm2898, %v2839
      %2918 = vst.msk [vmem:[#allocation3 + $0x98] sm:$0xff] %vm2898, %v2841
      %2919 = vst.msk [vmem:[#allocation3 + $0xa0] sm:$0xff] %vm2898, %v2843
      %2920 = vst.msk [vmem:[#allocation3 + $0xa8] sm:$0xff] %vm2898, %v2845
      %2921 = vst.msk [vmem:[#allocation3 + $0xb0] sm:$0xff] %vm2898, %v2847
      %2922 = vst.msk [vmem:[#allocation3 + $0xb8] sm:$0xff] %vm2898, %v2849
      %2923 = vst.msk [vmem:[#allocation3 + $0xc0] sm:$0xff] %vm2898, %v2851
      %2924 = vst.msk [vmem:[#allocation3 + $0xc8] sm:$0xff] %vm2898, %v2853
      %2925 = vst.msk [vmem:[#allocation3 + $0xd0] sm:$0xff] %vm2898, %v2855
      %2926 = vst.msk [vmem:[#allocation3 + $0xd8] sm:$0xff] %vm2898, %v2857
      %2927 = vst.msk [vmem:[#allocation3 + $0xe0] sm:$0xff] %vm2898, %v2859
      %2928 = vst.msk [vmem:[#allocation3 + $0xe8] sm:$0xff] %vm2898, %v2861
      %2929 = vst.msk [vmem:[#allocation3 + $0xf0] sm:$0xff] %vm2898, %v2863
      %2930 = vst.msk [vmem:[#allocation3 + $0xf8] sm:$0xff] %vm2898, %v2865
      %v2931 = vld [vmem:[#allocation3] sm:$0xff]
      %v2932 = vld [vmem:[#allocation3 + $0x8] sm:$0xff]
      %v2933 = vld [vmem:[#allocation3 + $0x10] sm:$0xff]
      %v2934 = vld [vmem:[#allocation3 + $0x18] sm:$0xff]
      %v2935 = vld [vmem:[#allocation3 + $0x20] sm:$0xff]
      %v2936 = vld [vmem:[#allocation3 + $0x28] sm:$0xff]
      %v2937 = vld [vmem:[#allocation3 + $0x30] sm:$0xff]
      %v2938 = vld [vmem:[#allocation3 + $0x38] sm:$0xff]
      %v2939 = vld [vmem:[#allocation3 + $0x40] sm:$0xff]
      %v2940 = vld [vmem:[#allocation3 + $0x48] sm:$0xff]
      %v2941 = vld [vmem:[#allocation3 + $0x50] sm:$0xff]
      %v2942 = vld [vmem:[#allocation3 + $0x58] sm:$0xff]
      %v2943 = vld [vmem:[#allocation3 + $0x60] sm:$0xff]
      %v2944 = vld [vmem:[#allocation3 + $0x68] sm:$0xff]
      %v2945 = vld [vmem:[#allocation3 + $0x70] sm:$0xff]
      %v2946 = vld [vmem:[#allocation3 + $0x78] sm:$0xff]
      %v2947 = vld [vmem:[#allocation3 + $0x80] sm:$0xff]
      %v2948 = vld [vmem:[#allocation3 + $0x88] sm:$0xff]
      %v2949 = vld [vmem:[#allocation3 + $0x90] sm:$0xff]
      %v2950 = vld [vmem:[#allocation3 + $0x98] sm:$0xff]
      %v2951 = vld [vmem:[#allocation3 + $0xa0] sm:$0xff]
      %v2952 = vld [vmem:[#allocation3 + $0xa8] sm:$0xff]
      %v2953 = vld [vmem:[#allocation3 + $0xb0] sm:$0xff]
      %v2954 = vld [vmem:[#allocation3 + $0xb8] sm:$0xff]
      %v2955 = vld [vmem:[#allocation3 + $0xc0] sm:$0xff]
      %v2956 = vld [vmem:[#allocation3 + $0xc8] sm:$0xff]
      %v2957 = vld [vmem:[#allocation3 + $0xd0] sm:$0xff]
      %v2958 = vld [vmem:[#allocation3 + $0xd8] sm:$0xff]
      %v2959 = vld [vmem:[#allocation3 + $0xe0] sm:$0xff]
      %v2960 = vld [vmem:[#allocation3 + $0xe8] sm:$0xff]
      %v2961 = vld [vmem:[#allocation3 + $0xf0] sm:$0xff]
      %v2962 = vld [vmem:[#allocation3 + $0xf8] sm:$0xff]
      %v2963 = vld [vmem:[%s3] sm:$0xff]
      %v2964 = vld [vmem:[%s3 + $0x8] sm:$0xff]
      %v2965 = vld [vmem:[%s3 + $0x10] sm:$0x3]
      %v2966 = vld [vmem:[%s4] sm:$0x1]
      %v2968 = vperm.slane %v2966, 0
      %vm2970 = vcmask 146432
      %v2972 = vsel %vm2970, %v2931, 0
      %v2975 = vsel %vm2970, %v2932, 0
      %v2978 = vsel %vm2970, %v2933, 0
      %v2981 = vsel %vm2970, %v2934, 0
      %v2984 = vsel %vm2970, %v2935, 0
      %v2987 = vsel %vm2970, %v2936, 0
      %v2990 = vsel %vm2970, %v2937, 0
      %v2993 = vsel %vm2970, %v2938, 0
      %v2996 = vsel %vm2970, %v2939, 0
      %v2999 = vsel %vm2970, %v2940, 0
      %v3002 = vsel %vm2970, %v2941, 0
      %v3005 = vsel %vm2970, %v2942, 0
      %v3008 = vsel %vm2970, %v2943, 0
      %v3011 = vsel %vm2970, %v2944, 0
      %v3014 = vsel %vm2970, %v2945, 0
      %v3017 = vsel %vm2970, %v2946, 0
      %v3020 = vsel %vm2970, %v2947, 0
      %v3023 = vsel %vm2970, %v2948, 0
      %v3026 = vsel %vm2970, %v2949, 0
      %v3029 = vsel %vm2970, %v2950, 0
      %v3032 = vsel %vm2970, %v2951, 0
      %v3035 = vsel %vm2970, %v2952, 0
      %v3038 = vsel %vm2970, %v2953, 0
      %v3041 = vsel %vm2970, %v2954, 0
      %v3044 = vsel %vm2970, %v2955, 0
      %v3047 = vsel %vm2970, %v2956, 0
      %v3050 = vsel %vm2970, %v2957, 0
      %v3053 = vsel %vm2970, %v2958, 0
      %v3056 = vsel %vm2970, %v2959, 0
      %v3059 = vsel %vm2970, %v2960, 0
      %v3062 = vsel %vm2970, %v2961, 0
      %v3065 = vsel %vm2970, %v2962, 0
      %vm3067 = vcmask 1041408
      %v3069 = vsel %vm3067, %v2965, 0
      %3071 = vmatpush.msra.mxu0 0.0
      %3072 = vmatpush.msra.mxu0 0.0
      %3073 = vmatpush.msra.mxu0 0.0
      %3074 = vmatpush.msra.mxu0 0.0
      %3075 = vmatpush.msra.mxu0 0.0
      %3076 = vmatpush.msra.mxu0 0.0
      %3077 = vmatpush.msra.mxu0 0.0
      %3078 = vmatpush.msra.mxu0 0.0
      %3079 = vmatpush.msra.mxu0 0.0
      %3080 = vmatpush.msra.mxu0 0.0
      %3081 = vmatpush.msra.mxu0 0.0
      %3082 = vmatpush.msra.mxu0 0.0
      %3083 = vmatpush.msra.mxu0 0.0
      %3084 = vmatpush.msra.mxu0 %v3069
      %3085 = vmatpush.msra.mxu0 %v2964
      %3086 = vmatpush.msra.mxu0 %v2963
      %3087 = vmatmul.f32.gmra.mxu0 %v2972
      %v3088 = vpop.f32.mrf.mxu0
      %v3089 = vadd.f32 %v2968, %v3088
      %3090 = vmatmul.f32.gmra.mxu0 %v2975
      %v3091 = vpop.f32.mrf.mxu0
      %v3092 = vadd.f32 %v2968, %v3091
      %3093 = vmatmul.f32.gmra.mxu0 %v2978
      %v3094 = vpop.f32.mrf.mxu0
      %v3095 = vadd.f32 %v2968, %v3094
      %3096 = vmatmul.f32.gmra.mxu0 %v2981
      %v3097 = vpop.f32.mrf.mxu0
      %v3098 = vadd.f32 %v2968, %v3097
      %3099 = vmatmul.f32.gmra.mxu0 %v2984
      %v3100 = vpop.f32.mrf.mxu0
      %v3101 = vadd.f32 %v2968, %v3100
      %3102 = vmatmul.f32.gmra.mxu0 %v2987
      %v3103 = vpop.f32.mrf.mxu0
      %v3104 = vadd.f32 %v2968, %v3103
      %3105 = vmatmul.f32.gmra.mxu0 %v2990
      %v3106 = vpop.f32.mrf.mxu0
      %v3107 = vadd.f32 %v2968, %v3106
      %3108 = vmatmul.f32.gmra.mxu0 %v2993
      %v3109 = vpop.f32.mrf.mxu0
      %v3110 = vadd.f32 %v2968, %v3109
      %3111 = vmatmul.f32.gmra.mxu0 %v2996
      %v3112 = vpop.f32.mrf.mxu0
      %v3113 = vadd.f32 %v2968, %v3112
      %3114 = vmatmul.f32.gmra.mxu0 %v2999
      %v3115 = vpop.f32.mrf.mxu0
      %v3116 = vadd.f32 %v2968, %v3115
      %3117 = vmatmul.f32.gmra.mxu0 %v3002
      %v3118 = vpop.f32.mrf.mxu0
      %v3119 = vadd.f32 %v2968, %v3118
      %3120 = vmatmul.f32.gmra.mxu0 %v3005
      %v3121 = vpop.f32.mrf.mxu0
      %v3122 = vadd.f32 %v2968, %v3121
      %3123 = vmatmul.f32.gmra.mxu0 %v3008
      %v3124 = vpop.f32.mrf.mxu0
      %v3125 = vadd.f32 %v2968, %v3124
      %3126 = vmatmul.f32.gmra.mxu0 %v3011
      %v3127 = vpop.f32.mrf.mxu0
      %v3128 = vadd.f32 %v2968, %v3127
      %3129 = vmatmul.f32.gmra.mxu0 %v3014
      %v3130 = vpop.f32.mrf.mxu0
      %v3131 = vadd.f32 %v2968, %v3130
      %3132 = vmatmul.f32.gmra.mxu0 %v3017
      %v3133 = vpop.f32.mrf.mxu0
      %v3134 = vadd.f32 %v2968, %v3133
      %3135 = vmatmul.f32.gmra.mxu0 %v3020
      %v3136 = vpop.f32.mrf.mxu0
      %v3137 = vadd.f32 %v2968, %v3136
      %3138 = vmatmul.f32.gmra.mxu0 %v3023
      %v3139 = vpop.f32.mrf.mxu0
      %v3140 = vadd.f32 %v2968, %v3139
      %3141 = vmatmul.f32.gmra.mxu0 %v3026
      %v3142 = vpop.f32.mrf.mxu0
      %v3143 = vadd.f32 %v2968, %v3142
      %3144 = vmatmul.f32.gmra.mxu0 %v3029
      %v3145 = vpop.f32.mrf.mxu0
      %v3146 = vadd.f32 %v2968, %v3145
      %3147 = vmatmul.f32.gmra.mxu0 %v3032
      %v3148 = vpop.f32.mrf.mxu0
      %v3149 = vadd.f32 %v2968, %v3148
      %3150 = vmatmul.f32.gmra.mxu0 %v3035
      %v3151 = vpop.f32.mrf.mxu0
      %v3152 = vadd.f32 %v2968, %v3151
      %3153 = vmatmul.f32.gmra.mxu0 %v3038
      %v3154 = vpop.f32.mrf.mxu0
      %v3155 = vadd.f32 %v2968, %v3154
      %3156 = vmatmul.f32.gmra.mxu0 %v3041
      %v3157 = vpop.f32.mrf.mxu0
      %v3158 = vadd.f32 %v2968, %v3157
      %3159 = vmatmul.f32.gmra.mxu0 %v3044
      %v3160 = vpop.f32.mrf.mxu0
      %v3161 = vadd.f32 %v2968, %v3160
      %3162 = vmatmul.f32.gmra.mxu0 %v3047
      %v3163 = vpop.f32.mrf.mxu0
      %v3164 = vadd.f32 %v2968, %v3163
      %3165 = vmatmul.f32.gmra.mxu0 %v3050
      %v3166 = vpop.f32.mrf.mxu0
      %v3167 = vadd.f32 %v2968, %v3166
      %3168 = vmatmul.f32.gmra.mxu0 %v3053
      %v3169 = vpop.f32.mrf.mxu0
      %v3170 = vadd.f32 %v2968, %v3169
      %3171 = vmatmul.f32.gmra.mxu0 %v3056
      %v3172 = vpop.f32.mrf.mxu0
      %v3173 = vadd.f32 %v2968, %v3172
      %3174 = vmatmul.f32.gmra.mxu0 %v3059
      %v3175 = vpop.f32.mrf.mxu0
      %v3176 = vadd.f32 %v2968, %v3175
      %3177 = vmatmul.f32.gmra.mxu0 %v3062
      %v3178 = vpop.f32.mrf.mxu0
      %v3179 = vadd.f32 %v2968, %v3178
      %3180 = vmatmul.f32.gmra.mxu0 %v3065
      %v3181 = vpop.f32.mrf.mxu0
      %v3182 = vadd.f32 %v2968, %v3181
      %3183 = vdwg.mxu0
      %v3184 = vld [vmem:[%s5] sm:$0x3]
      %v3186 = vsel %vm771, %v676, 0
      %v3189 = vsel %vm771, %v679, 0
      %v3192 = vsel %vm771, %v682, 0
      %v3195 = vsel %vm771, %v685, 0
      %v3198 = vsel %vm771, %v688, 0
      %v3201 = vsel %vm771, %v691, 0
      %v3204 = vsel %vm771, %v694, 0
      %v3207 = vsel %vm771, %v697, 0
      %v3210 = vsel %vm771, %v700, 0
      %v3213 = vsel %vm771, %v703, 0
      %v3216 = vsel %vm771, %v706, 0
      %v3219 = vsel %vm771, %v709, 0
      %v3222 = vsel %vm771, %v712, 0
      %v3225 = vsel %vm771, %v715, 0
      %v3228 = vsel %vm771, %v718, 0
      %v3231 = vsel %vm771, %v721, 0
      %v3234 = vsel %vm771, %v724, 0
      %v3237 = vsel %vm771, %v727, 0
      %v3240 = vsel %vm771, %v730, 0
      %v3243 = vsel %vm771, %v733, 0
      %v3246 = vsel %vm771, %v736, 0
      %v3249 = vsel %vm771, %v739, 0
      %v3252 = vsel %vm771, %v742, 0
      %v3255 = vsel %vm771, %v745, 0
      %v3258 = vsel %vm771, %v748, 0
      %v3261 = vsel %vm771, %v751, 0
      %v3264 = vsel %vm771, %v754, 0
      %v3267 = vsel %vm771, %v757, 0
      %v3270 = vsel %vm771, %v760, 0
      %v3273 = vsel %vm771, %v763, 0
      %v3276 = vsel %vm771, %v766, 0
      %v3279 = vsel %vm771, %v769, 0
      %v3282 = vsel %vm3067, %v3184, 0
      %3284 = vmatpush.msra.mxu0 0.0
      %3285 = vmatpush.msra.mxu0 0.0
      %3286 = vmatpush.msra.mxu0 0.0
      %3287 = vmatpush.msra.mxu0 0.0
      %3288 = vmatpush.msra.mxu0 0.0
      %3289 = vmatpush.msra.mxu0 0.0
      %3290 = vmatpush.msra.mxu0 0.0
      %3291 = vmatpush.msra.mxu0 0.0
      %3292 = vmatpush.msra.mxu0 0.0
      %3293 = vmatpush.msra.mxu0 0.0
      %3294 = vmatpush.msra.mxu0 0.0
      %3295 = vmatpush.msra.mxu0 0.0
      %3296 = vmatpush.msra.mxu0 0.0
      %3297 = vmatpush.msra.mxu0 0.0
      %3298 = vmatpush.msra.mxu0 0.0
      %3299 = vmatpush.msra.mxu0 %v3282
      %3300 = vmatmul.f32.gmra.mxu0 %v3186
      %v3301 = vpop.f32.mrf.mxu0
      %v3302 = vadd.f32 0.0, %v3301
      %3303 = vmatmul.f32.gmra.mxu0 %v3189
      %v3304 = vpop.f32.mrf.mxu0
      %v3305 = vadd.f32 0.0, %v3304
      %3306 = vmatmul.f32.gmra.mxu0 %v3192
      %v3307 = vpop.f32.mrf.mxu0
      %v3308 = vadd.f32 0.0, %v3307
      %3309 = vmatmul.f32.gmra.mxu0 %v3195
      %v3310 = vpop.f32.mrf.mxu0
      %v3311 = vadd.f32 0.0, %v3310
      %3312 = vmatmul.f32.gmra.mxu0 %v3198
      %v3313 = vpop.f32.mrf.mxu0
      %v3314 = vadd.f32 0.0, %v3313
      %3315 = vmatmul.f32.gmra.mxu0 %v3201
      %v3316 = vpop.f32.mrf.mxu0
      %v3317 = vadd.f32 0.0, %v3316
      %3318 = vmatmul.f32.gmra.mxu0 %v3204
      %v3319 = vpop.f32.mrf.mxu0
      %v3320 = vadd.f32 0.0, %v3319
      %3321 = vmatmul.f32.gmra.mxu0 %v3207
      %v3322 = vpop.f32.mrf.mxu0
      %v3323 = vadd.f32 0.0, %v3322
      %3324 = vmatmul.f32.gmra.mxu0 %v3210
      %v3325 = vpop.f32.mrf.mxu0
      %v3326 = vadd.f32 0.0, %v3325
      %3327 = vmatmul.f32.gmra.mxu0 %v3213
      %v3328 = vpop.f32.mrf.mxu0
      %v3329 = vadd.f32 0.0, %v3328
      %3330 = vmatmul.f32.gmra.mxu0 %v3216
      %v3331 = vpop.f32.mrf.mxu0
      %v3332 = vadd.f32 0.0, %v3331
      %3333 = vmatmul.f32.gmra.mxu0 %v3219
      %v3334 = vpop.f32.mrf.mxu0
      %v3335 = vadd.f32 0.0, %v3334
      %3336 = vmatmul.f32.gmra.mxu0 %v3222
      %v3337 = vpop.f32.mrf.mxu0
      %v3338 = vadd.f32 0.0, %v3337
      %3339 = vmatmul.f32.gmra.mxu0 %v3225
      %v3340 = vpop.f32.mrf.mxu0
      %v3341 = vadd.f32 0.0, %v3340
      %3342 = vmatmul.f32.gmra.mxu0 %v3228
      %v3343 = vpop.f32.mrf.mxu0
      %v3344 = vadd.f32 0.0, %v3343
      %3345 = vmatmul.f32.gmra.mxu0 %v3231
      %v3346 = vpop.f32.mrf.mxu0
      %v3347 = vadd.f32 0.0, %v3346
      %3348 = vmatmul.f32.gmra.mxu0 %v3234
      %v3349 = vpop.f32.mrf.mxu0
      %v3350 = vadd.f32 0.0, %v3349
      %3351 = vmatmul.f32.gmra.mxu0 %v3237
      %v3352 = vpop.f32.mrf.mxu0
      %v3353 = vadd.f32 0.0, %v3352
      %3354 = vmatmul.f32.gmra.mxu0 %v3240
      %v3355 = vpop.f32.mrf.mxu0
      %v3356 = vadd.f32 0.0, %v3355
      %3357 = vmatmul.f32.gmra.mxu0 %v3243
      %v3358 = vpop.f32.mrf.mxu0
      %v3359 = vadd.f32 0.0, %v3358
      %3360 = vmatmul.f32.gmra.mxu0 %v3246
      %v3361 = vpop.f32.mrf.mxu0
      %v3362 = vadd.f32 0.0, %v3361
      %3363 = vmatmul.f32.gmra.mxu0 %v3249
      %v3364 = vpop.f32.mrf.mxu0
      %v3365 = vadd.f32 0.0, %v3364
      %3366 = vmatmul.f32.gmra.mxu0 %v3252
      %v3367 = vpop.f32.mrf.mxu0
      %v3368 = vadd.f32 0.0, %v3367
      %3369 = vmatmul.f32.gmra.mxu0 %v3255
      %v3370 = vpop.f32.mrf.mxu0
      %v3371 = vadd.f32 0.0, %v3370
      %3372 = vmatmul.f32.gmra.mxu0 %v3258
      %v3373 = vpop.f32.mrf.mxu0
      %v3374 = vadd.f32 0.0, %v3373
      %3375 = vmatmul.f32.gmra.mxu0 %v3261
      %v3376 = vpop.f32.mrf.mxu0
      %v3377 = vadd.f32 0.0, %v3376
      %3378 = vmatmul.f32.gmra.mxu0 %v3264
      %v3379 = vpop.f32.mrf.mxu0
      %v3380 = vadd.f32 0.0, %v3379
      %3381 = vmatmul.f32.gmra.mxu0 %v3267
      %v3382 = vpop.f32.mrf.mxu0
      %v3383 = vadd.f32 0.0, %v3382
      %3384 = vmatmul.f32.gmra.mxu0 %v3270
      %v3385 = vpop.f32.mrf.mxu0
      %v3386 = vadd.f32 0.0, %v3385
      %3387 = vmatmul.f32.gmra.mxu0 %v3273
      %v3388 = vpop.f32.mrf.mxu0
      %v3389 = vadd.f32 0.0, %v3388
      %3390 = vmatmul.f32.gmra.mxu0 %v3276
      %v3391 = vpop.f32.mrf.mxu0
      %v3392 = vadd.f32 0.0, %v3391
      %3393 = vmatmul.f32.gmra.mxu0 %v3279
      %v3394 = vpop.f32.mrf.mxu0
      %v3395 = vadd.f32 0.0, %v3394
      %3396 = vdwg.mxu0
      %vm3397 = vcmask 64512
      %v3398 = vsel %vm3397, %v3089, 0.0
      %v3399 = vsel %vm3397, %v3092, 0.0
      %v3400 = vadd.f32 %v3398, %v3399
      %v3401 = vsel %vm3397, %v3095, 0.0
      %v3402 = vadd.f32 %v3400, %v3401
      %v3403 = vsel %vm3397, %v3098, 0.0
      %v3404 = vadd.f32 %v3402, %v3403
      %v3405 = vsel %vm3397, %v3101, 0.0
      %v3406 = vadd.f32 %v3404, %v3405
      %v3407 = vsel %vm3397, %v3104, 0.0
      %v3408 = vadd.f32 %v3406, %v3407
      %v3409 = vsel %vm3397, %v3107, 0.0
      %v3410 = vadd.f32 %v3408, %v3409
      %v3411 = vsel %vm3397, %v3110, 0.0
      %v3412 = vadd.f32 %v3410, %v3411
      %v3413 = vsel %vm3397, %v3113, 0.0
      %v3414 = vadd.f32 %v3412, %v3413
      %v3415 = vsel %vm3397, %v3116, 0.0
      %v3416 = vadd.f32 %v3414, %v3415
      %v3417 = vsel %vm3397, %v3119, 0.0
      %v3418 = vadd.f32 %v3416, %v3417
      %v3419 = vsel %vm3397, %v3122, 0.0
      %v3420 = vadd.f32 %v3418, %v3419
      %v3421 = vsel %vm3397, %v3125, 0.0
      %v3422 = vadd.f32 %v3420, %v3421
      %v3423 = vsel %vm3397, %v3128, 0.0
      %v3424 = vadd.f32 %v3422, %v3423
      %v3425 = vsel %vm3397, %v3131, 0.0
      %v3426 = vadd.f32 %v3424, %v3425
      %v3427 = vsel %vm3397, %v3134, 0.0
      %v3428 = vadd.f32 %v3426, %v3427
      %v3429 = vsel %vm3397, %v3137, 0.0
      %v3430 = vadd.f32 %v3428, %v3429
      %v3431 = vsel %vm3397, %v3140, 0.0
      %v3432 = vadd.f32 %v3430, %v3431
      %v3433 = vsel %vm3397, %v3143, 0.0
      %v3434 = vadd.f32 %v3432, %v3433
      %v3435 = vsel %vm3397, %v3146, 0.0
      %v3436 = vadd.f32 %v3434, %v3435
      %v3437 = vsel %vm3397, %v3149, 0.0
      %v3438 = vadd.f32 %v3436, %v3437
      %v3439 = vsel %vm3397, %v3152, 0.0
      %v3440 = vadd.f32 %v3438, %v3439
      %v3441 = vsel %vm3397, %v3155, 0.0
      %v3442 = vadd.f32 %v3440, %v3441
      %v3443 = vsel %vm3397, %v3158, 0.0
      %v3444 = vadd.f32 %v3442, %v3443
      %v3445 = vsel %vm3397, %v3161, 0.0
      %v3446 = vadd.f32 %v3444, %v3445
      %v3447 = vsel %vm3397, %v3164, 0.0
      %v3448 = vadd.f32 %v3446, %v3447
      %v3449 = vsel %vm3397, %v3167, 0.0
      %v3450 = vadd.f32 %v3448, %v3449
      %v3451 = vsel %vm3397, %v3170, 0.0
      %v3452 = vadd.f32 %v3450, %v3451
      %v3453 = vsel %vm3397, %v3173, 0.0
      %v3454 = vadd.f32 %v3452, %v3453
      %v3455 = vsel %vm3397, %v3176, 0.0
      %v3456 = vadd.f32 %v3454, %v3455
      %v3457 = vsel %vm3397, %v3179, 0.0
      %v3458 = vadd.f32 %v3456, %v3457
      %v3459 = vsel %vm3397, %v3182, 0.0
      %v3460 = vadd.f32 %v3458, %v3459
      %v3461 = vrot.slane %v3460, 4
      %v3462 = vadd.f32 %v3460, %v3461
      %v3463 = vrot.slane %v3462, 2
      %v3464 = vadd.f32 %v3462, %v3463
      %v3465 = vrot.slane %v3464, 1
      %v3466 = vadd.f32 %v3464, %v3465
      %v3467 = vmul.f32 %v3466, 0.00390625
      %v3468 = vsel %vm3397, %v3302, 0.0
      %v3469 = vsel %vm3397, %v3305, 0.0
      %v3470 = vadd.f32 %v3468, %v3469
      %v3471 = vsel %vm3397, %v3308, 0.0
      %v3472 = vadd.f32 %v3470, %v3471
      %v3473 = vsel %vm3397, %v3311, 0.0
      %v3474 = vadd.f32 %v3472, %v3473
      %v3475 = vsel %vm3397, %v3314, 0.0
      %v3476 = vadd.f32 %v3474, %v3475
      %v3477 = vsel %vm3397, %v3317, 0.0
      %v3478 = vadd.f32 %v3476, %v3477
      %v3479 = vsel %vm3397, %v3320, 0.0
      %v3480 = vadd.f32 %v3478, %v3479
      %v3481 = vsel %vm3397, %v3323, 0.0
      %v3482 = vadd.f32 %v3480, %v3481
      %v3483 = vsel %vm3397, %v3326, 0.0
      %v3484 = vadd.f32 %v3482, %v3483
      %v3485 = vsel %vm3397, %v3329, 0.0
      %v3486 = vadd.f32 %v3484, %v3485
      %v3487 = vsel %vm3397, %v3332, 0.0
      %v3488 = vadd.f32 %v3486, %v3487
      %v3489 = vsel %vm3397, %v3335, 0.0
      %v3490 = vadd.f32 %v3488, %v3489
      %v3491 = vsel %vm3397, %v3338, 0.0
      %v3492 = vadd.f32 %v3490, %v3491
      %v3493 = vsel %vm3397, %v3341, 0.0
      %v3494 = vadd.f32 %v3492, %v3493
      %v3495 = vsel %vm3397, %v3344, 0.0
      %v3496 = vadd.f32 %v3494, %v3495
      %v3497 = vsel %vm3397, %v3347, 0.0
      %v3498 = vadd.f32 %v3496, %v3497
      %v3499 = vsel %vm3397, %v3350, 0.0
      %v3500 = vadd.f32 %v3498, %v3499
      %v3501 = vsel %vm3397, %v3353, 0.0
      %v3502 = vadd.f32 %v3500, %v3501
      %v3503 = vsel %vm3397, %v3356, 0.0
      %v3504 = vadd.f32 %v3502, %v3503
      %v3505 = vsel %vm3397, %v3359, 0.0
      %v3506 = vadd.f32 %v3504, %v3505
      %v3507 = vsel %vm3397, %v3362, 0.0
      %v3508 = vadd.f32 %v3506, %v3507
      %v3509 = vsel %vm3397, %v3365, 0.0
      %v3510 = vadd.f32 %v3508, %v3509
      %v3511 = vsel %vm3397, %v3368, 0.0
      %v3512 = vadd.f32 %v3510, %v3511
      %v3513 = vsel %vm3397, %v3371, 0.0
      %v3514 = vadd.f32 %v3512, %v3513
      %v3515 = vsel %vm3397, %v3374, 0.0
      %v3516 = vadd.f32 %v3514, %v3515
      %v3517 = vsel %vm3397, %v3377, 0.0
      %v3518 = vadd.f32 %v3516, %v3517
      %v3519 = vsel %vm3397, %v3380, 0.0
      %v3520 = vadd.f32 %v3518, %v3519
      %v3521 = vsel %vm3397, %v3383, 0.0
      %v3522 = vadd.f32 %v3520, %v3521
      %v3523 = vsel %vm3397, %v3386, 0.0
      %v3524 = vadd.f32 %v3522, %v3523
      %v3525 = vsel %vm3397, %v3389, 0.0
      %v3526 = vadd.f32 %v3524, %v3525
      %v3527 = vsel %vm3397, %v3392, 0.0
      %v3528 = vadd.f32 %v3526, %v3527
      %v3529 = vsel %vm3397, %v3395, 0.0
      %v3530 = vadd.f32 %v3528, %v3529
      %v3531 = vrot.slane %v3530, 4
      %v3532 = vadd.f32 %v3530, %v3531
      %v3533 = vrot.slane %v3532, 2
      %v3534 = vadd.f32 %v3532, %v3533
      %v3535 = vrot.slane %v3534, 1
      %v3536 = vadd.f32 %v3534, %v3535
      %v3537 = vmul.f32 %v3536, 0.00390625
      %v3538 = vsel %vm3397, %v3467, -inf
      %3539 = vmax.xlane.f32.xlu0 %v3538
      %v3540 = vpop.xlane.xlu0 %3539
      %v3541 = vsel %vm3397, %v3537, -inf
      %3542 = vmax.xlane.f32.xlu0 %v3541
      %v3543 = vpop.xlane.xlu0 %3542
      %v3544 = vmax.f32 %v3540, %v3543
      %v3545 = vsub.f32 %v3467, %v3544
      %v3546 = vmul.f32 %v3545, 1.442695
      %v3547 = vpow.pop %v3546
      %v3548 = vsub.f32 %v3537, %v3544
      %v3549 = vmul.f32 %v3548, 1.442695
      %v3550 = vpow.pop %v3549
      %v3551 = vsel %vm3397, %v3547, 0.0
      %3552 = vadd.xlane.f32.xlu0 %v3551
      %v3553 = vpop.xlane.xlu0 %3552
      %v3554 = vsel %vm3397, %v3550, 0.0
      %3555 = vadd.xlane.f32.xlu0 %v3554
      %v3556 = vpop.xlane.xlu0 %3555
      %v3557 = vadd.f32 %v3553, %v3556
      %v3558 = vrcp.pop %v3557
      %v3559 = vmul.f32 %v3557, %v3558
      %v3560 = vsub.f32 1.0, %v3559
      %v3561 = vmul.f32 %v3558, %v3560
      %v3562 = vadd.f32 %v3558, %v3561
      %vm3563 = vweird.f32 %v3557
      %vm3564 = vweird.f32 %v3558
      %vm3565 = vmor %vm3563, %vm3564
      %v3566 = vsel %vm3565, %v3558, %v3562
      %v3567 = vand.u32 2147483647, %v3557
      %vm3568 = vcmp.eq.f32.partialorder %v3567, 8.507059e+37
      %v3569 = vand.u32 %v3557, 2147483648
      %v3570 = vor.u32 1.1754944e-38, %v3569
      %v3571 = vsel %vm3568, %v3570, %v3566
      %v3572 = vmul.f32 1.0, %v3571
      %v3573 = vmul.f32 %v3547, %v3572
      %v3574 = vmul.f32 %v3550, %v3572
      %v3575 = vmul.f32 %v3573, %v3089
      %v3576 = vmul.f32 %v3573, %v3092
      %v3577 = vmul.f32 %v3573, %v3095
      %v3578 = vmul.f32 %v3573, %v3098
      %v3579 = vmul.f32 %v3573, %v3101
      %v3580 = vmul.f32 %v3573, %v3104
      %v3581 = vmul.f32 %v3573, %v3107
      %v3582 = vmul.f32 %v3573, %v3110
      %v3583 = vmul.f32 %v3573, %v3113
      %v3584 = vmul.f32 %v3573, %v3116
      %v3585 = vmul.f32 %v3573, %v3119
      %v3586 = vmul.f32 %v3573, %v3122
      %v3587 = vmul.f32 %v3573, %v3125
      %v3588 = vmul.f32 %v3573, %v3128
      %v3589 = vmul.f32 %v3573, %v3131
      %v3590 = vmul.f32 %v3573, %v3134
      %v3591 = vmul.f32 %v3573, %v3137
      %v3592 = vmul.f32 %v3573, %v3140
      %v3593 = vmul.f32 %v3573, %v3143
      %v3594 = vmul.f32 %v3573, %v3146
      %v3595 = vmul.f32 %v3573, %v3149
      %v3596 = vmul.f32 %v3573, %v3152
      %v3597 = vmul.f32 %v3573, %v3155
      %v3598 = vmul.f32 %v3573, %v3158
      %v3599 = vmul.f32 %v3573, %v3161
      %v3600 = vmul.f32 %v3573, %v3164
      %v3601 = vmul.f32 %v3573, %v3167
      %v3602 = vmul.f32 %v3573, %v3170
      %v3603 = vmul.f32 %v3573, %v3173
      %v3604 = vmul.f32 %v3573, %v3176
      %v3605 = vmul.f32 %v3573, %v3179
      %v3606 = vmul.f32 %v3573, %v3182
      %v3607 = vmul.f32 %v3574, %v3302
      %v3608 = vmul.f32 %v3574, %v3305
      %v3609 = vmul.f32 %v3574, %v3308
      %v3610 = vmul.f32 %v3574, %v3311
      %v3611 = vmul.f32 %v3574, %v3314
      %v3612 = vmul.f32 %v3574, %v3317
      %v3613 = vmul.f32 %v3574, %v3320
      %v3614 = vmul.f32 %v3574, %v3323
      %v3615 = vmul.f32 %v3574, %v3326
      %v3616 = vmul.f32 %v3574, %v3329
      %v3617 = vmul.f32 %v3574, %v3332
      %v3618 = vmul.f32 %v3574, %v3335
      %v3619 = vmul.f32 %v3574, %v3338
      %v3620 = vmul.f32 %v3574, %v3341
      %v3621 = vmul.f32 %v3574, %v3344
      %v3622 = vmul.f32 %v3574, %v3347
      %v3623 = vmul.f32 %v3574, %v3350
      %v3624 = vmul.f32 %v3574, %v3353
      %v3625 = vmul.f32 %v3574, %v3356
      %v3626 = vmul.f32 %v3574, %v3359
      %v3627 = vmul.f32 %v3574, %v3362
      %v3628 = vmul.f32 %v3574, %v3365
      %v3629 = vmul.f32 %v3574, %v3368
      %v3630 = vmul.f32 %v3574, %v3371
      %v3631 = vmul.f32 %v3574, %v3374
      %v3632 = vmul.f32 %v3574, %v3377
      %v3633 = vmul.f32 %v3574, %v3380
      %v3634 = vmul.f32 %v3574, %v3383
      %v3635 = vmul.f32 %v3574, %v3386
      %v3636 = vmul.f32 %v3574, %v3389
      %v3637 = vmul.f32 %v3574, %v3392
      %v3638 = vmul.f32 %v3574, %v3395
      %v3639 = vadd.f32 %v3575, %v3607
      %v3640 = vadd.f32 %v3576, %v3608
      %v3641 = vadd.f32 %v3577, %v3609
      %v3642 = vadd.f32 %v3578, %v3610
      %v3643 = vadd.f32 %v3579, %v3611
      %v3644 = vadd.f32 %v3580, %v3612
      %v3645 = vadd.f32 %v3581, %v3613
      %v3646 = vadd.f32 %v3582, %v3614
      %v3647 = vadd.f32 %v3583, %v3615
      %v3648 = vadd.f32 %v3584, %v3616
      %v3649 = vadd.f32 %v3585, %v3617
      %v3650 = vadd.f32 %v3586, %v3618
      %v3651 = vadd.f32 %v3587, %v3619
      %v3652 = vadd.f32 %v3588, %v3620
      %v3653 = vadd.f32 %v3589, %v3621
      %v3654 = vadd.f32 %v3590, %v3622
      %v3655 = vadd.f32 %v3591, %v3623
      %v3656 = vadd.f32 %v3592, %v3624
      %v3657 = vadd.f32 %v3593, %v3625
      %v3658 = vadd.f32 %v3594, %v3626
      %v3659 = vadd.f32 %v3595, %v3627
      %v3660 = vadd.f32 %v3596, %v3628
      %v3661 = vadd.f32 %v3597, %v3629
      %v3662 = vadd.f32 %v3598, %v3630
      %v3663 = vadd.f32 %v3599, %v3631
      %v3664 = vadd.f32 %v3600, %v3632
      %v3665 = vadd.f32 %v3601, %v3633
      %v3666 = vadd.f32 %v3602, %v3634
      %v3667 = vadd.f32 %v3603, %v3635
      %v3668 = vadd.f32 %v3604, %v3636
      %v3669 = vadd.f32 %v3605, %v3637
      %v3670 = vadd.f32 %v3606, %v3638
      %3671 = vst.msk [vmem:[%s278] sm:$0xff] %vm3397, %v3639
      %3672 = vst.msk [vmem:[%s278 + $0x8] sm:$0xff] %vm3397, %v3640
      %3673 = vst.msk [vmem:[%s278 + $0x10] sm:$0xff] %vm3397, %v3641
      %3674 = vst.msk [vmem:[%s278 + $0x18] sm:$0xff] %vm3397, %v3642
      %3675 = vst.msk [vmem:[%s278 + $0x20] sm:$0xff] %vm3397, %v3643
      %3676 = vst.msk [vmem:[%s278 + $0x28] sm:$0xff] %vm3397, %v3644
      %3677 = vst.msk [vmem:[%s278 + $0x30] sm:$0xff] %vm3397, %v3645
      %3678 = vst.msk [vmem:[%s278 + $0x38] sm:$0xff] %vm3397, %v3646
      %3679 = vst.msk [vmem:[%s278 + $0x40] sm:$0xff] %vm3397, %v3647
      %3680 = vst.msk [vmem:[%s278 + $0x48] sm:$0xff] %vm3397, %v3648
      %3681 = vst.msk [vmem:[%s278 + $0x50] sm:$0xff] %vm3397, %v3649
      %3682 = vst.msk [vmem:[%s278 + $0x58] sm:$0xff] %vm3397, %v3650
      %3683 = vst.msk [vmem:[%s278 + $0x60] sm:$0xff] %vm3397, %v3651
      %3684 = vst.msk [vmem:[%s278 + $0x68] sm:$0xff] %vm3397, %v3652
      %3685 = vst.msk [vmem:[%s278 + $0x70] sm:$0xff] %vm3397, %v3653
      %3686 = vst.msk [vmem:[%s278 + $0x78] sm:$0xff] %vm3397, %v3654
      %3687 = vst.msk [vmem:[%s278 + $0x80] sm:$0xff] %vm3397, %v3655
      %3688 = vst.msk [vmem:[%s278 + $0x88] sm:$0xff] %vm3397, %v3656
      %3689 = vst.msk [vmem:[%s278 + $0x90] sm:$0xff] %vm3397, %v3657
      %3690 = vst.msk [vmem:[%s278 + $0x98] sm:$0xff] %vm3397, %v3658
      %3691 = vst.msk [vmem:[%s278 + $0xa0] sm:$0xff] %vm3397, %v3659
      %3692 = vst.msk [vmem:[%s278 + $0xa8] sm:$0xff] %vm3397, %v3660
      %3693 = vst.msk [vmem:[%s278 + $0xb0] sm:$0xff] %vm3397, %v3661
      %3694 = vst.msk [vmem:[%s278 + $0xb8] sm:$0xff] %vm3397, %v3662
      %3695 = vst.msk [vmem:[%s278 + $0xc0] sm:$0xff] %vm3397, %v3663
      %3696 = vst.msk [vmem:[%s278 + $0xc8] sm:$0xff] %vm3397, %v3664
      %3697 = vst.msk [vmem:[%s278 + $0xd0] sm:$0xff] %vm3397, %v3665
      %3698 = vst.msk [vmem:[%s278 + $0xd8] sm:$0xff] %vm3397, %v3666
      %3699 = vst.msk [vmem:[%s278 + $0xe0] sm:$0xff] %vm3397, %v3667
      %3700 = vst.msk [vmem:[%s278 + $0xe8] sm:$0xff] %vm3397, %v3668
      %3701 = vst.msk [vmem:[%s278 + $0xf0] sm:$0xff] %vm3397, %v3669
      %3702 = vst.msk [vmem:[%s278 + $0xf8] sm:$0xff] %vm3397, %v3670
      %p3703 = scmp.lt.s32.totalorder %s18, 1
      %s3704 = scalar_select %p3703, %s18, 1
      %s3705 = smul.addr %s3704, 32
      %s3706 = smul.addr %s3705, 8
      %s3707 = scalar_lea.vmem %s7, %s3706
      // Predicated region
      $region49: #{cru_forward.1} parent=47 // pred_check
        %p3708 = pneg %p188
      $region50: #{cru_forward.1} parent=47 // pred_check_branch
        %3710 = sbr.rel (%p3708) target = $region52
      $region51: #{cru_forward.1} parent=47 // pred_region
        _
      $region52: #{cru_forward.1} parent=47 // pred_fallthru
        _
    $region48: #{cru_forward.1} parent=5 // pred_fallthru
      _
    %p3711 = scmp.le.s32.totalorder 2, %s13
    // Predicated region
    $region53: #{cru_forward.1} parent=5 // pred_check
      %p3712 = pneg %p3711
    $region54: #{cru_forward.1} parent=5 // pred_check_branch
      %3714 = sbr.rel (%p3712) target = $region56
    $region55: #{cru_forward.1} parent=5 // pred_region
      %s3715 = ssub.s32 %s13, 2
      // Predicated region
      $region57: #{cru_forward.1} parent=55 // pred_check
        %p3716 = pneg %p194
      $region58: #{cru_forward.1} parent=55 // pred_check_branch
        %3718 = sbr.rel (%p3716) target = $region60
      $region59: #{cru_forward.1} parent=55 // pred_region
        %p3719 = scmp.lt.s32.totalorder %s19, 1
        %s3720 = scalar_select %p3719, %s19, 1
        %s3721 = smul.addr %s3720, 32
        %s3722 = smul.addr %s3721, 8
        %s3723 = scalar_lea.vmem %s7, %s3722
      $region60: #{cru_forward.1} parent=55 // pred_fallthru
        _
    $region56: #{cru_forward.1} parent=5 // pred_fallthru
      _
  $region6: #{cru_forward.1} parent=0 // loop_footer
    %s17 = sadd.s32 1, %s13
  $region7: #{cru_forward.1} parent=0 // loop_footer_branch
    %12 = sbr.rel target = $region3
  $region8: #{cru_forward.1} parent=0 // loop_exit
    _

</llo_original>
